<compile_context>
chip_gen: v6e
topology: v6e:2x2x1
jax: 0.10.0
libtpu: 0.0.40
codegen_flags: <defaults>
</compile_context>

<pallas_src>
import functools
import math

import jax
import jax.numpy as jnp
from jax.experimental import pallas as pl
from jax.experimental.pallas import tpu as pltpu

# ----------------------------- model dims (toy) -----------------------------
B = 2            # batch (mask logic below assumes B == 2)
C = 3            # image channels (NCHW input)
IMG = 16         # image height/width
P = 4            # patch size
NP = (IMG // P) ** 2           # 16 patches
NPP1 = NP + 1                  # 17 = CLS + patches
LV = 24          # vision sequence padded to a multiple of 8 sublanes
CP2 = C * P * P                # 48 features per patch row
DV = 32          # vision hidden
NH = 4           # attention heads
DH = DV // NH    # head dim
NQ = 8           # number of Q-Former query tokens
DL = 32          # language-model hidden
T = 8            # text sequence length
VOCAB = 64       # vocab size
VOCAB_PAD = 128  # lane-dense padded vocab for the output store
MLP = 128        # MLP hidden (4x)
LSEQ = NQ + T    # LM sequence length (16)
LANES = 128

F32 = jnp.float32
BF16 = jnp.bfloat16

assert B == 2  # batch-id in masks is a single >= comparison (avoids vector int div)


# --------------------------- in-kernel math helpers ---------------------------
def _layer_norm(x, g, b, eps=1e-5):
    m = jnp.mean(x, axis=-1, keepdims=True)
    v = jnp.mean((x - m) ** 2, axis=-1, keepdims=True)
    return (x - m) * jax.lax.rsqrt(v + eps) * g + b


def _pair_bias(n_rows, n_cols, rows_per_b, cols_per_b, n_valid_cols=None, causal=False):
    """Additive attention mask (0 / -1e30): block-diagonal over the two batch
    items folded along rows/cols, optional key-padding and causal terms."""
    r = jax.lax.broadcasted_iota(jnp.int32, (n_rows, n_cols), 0)
    c = jax.lax.broadcasted_iota(jnp.int32, (n_rows, n_cols), 1)
    rb = r >= rows_per_b                       # batch id of the query row (B == 2)
    cb = c >= cols_per_b                       # batch id of the key column
    c_loc = c - jnp.where(cb, cols_per_b, 0)
    valid = rb == cb
    if n_valid_cols is not None:
        valid = jnp.logical_and(valid, c_loc < n_valid_cols)
    if causal:
        r_loc = r - jnp.where(rb, rows_per_b, 0)
        valid = jnp.logical_and(valid, c_loc <= r_loc)
    return jnp.where(valid, 0.0, -1e30).astype(F32)


def _attention(q, k, v, bias, nh, dh):
    """q: (Lq, nh*dh) bf16, k/v: (Lk, nh*dh) bf16, bias: (Lq, Lk) f32.
    Heads are static lane slices of the fused projections; softmax in f32."""
    scale = 1.0 / math.sqrt(dh)
    outs = []
    for h in range(nh):
        sl = slice(h * dh, (h + 1) * dh)
        s = jax.lax.dot_general(q[:, sl], k[:, sl], (((1,), (1,)), ((), ())),
                                preferred_element_type=F32) * scale + bias
        s = s - jnp.max(s, axis=-1, keepdims=True)
        p = jnp.exp(s)
        l = jnp.sum(p, axis=-1, keepdims=True)
        o = jnp.dot(p.astype(BF16), v[:, sl], preferred_element_type=F32)
        outs.append(o * pl.reciprocal(l, approx=True))
    return jnp.concatenate(outs, axis=1)       # (Lq, nh*dh), feeds one fused out-proj


# ------------------------------ the fused kernel ------------------------------
def _blip2_kernel(woff, voff, patches_ref, tok_ref, wmat_ref, vvec_ref, out_ref):
    # Static-offset views into the two packed weight buffers.
    def W(name):                                  # bf16 matmul weight (rows, cols)
        off, r, c = woff[name]
        return wmat_ref[off:off + r, 0:c]

    def V(name):                                  # f32 bias / LN / embedding rows
        off, r, c = voff[name]
        return vvec_ref[off:off + r, 0:c]

    def mm(a, wname):                             # MXU: bf16 x bf16 -> f32 acc
        return jnp.dot(a.astype(BF16), W(wname), preferred_element_type=F32)

    def ln(x, prefix):
        return _layer_norm(x, V(prefix + "_g"), V(prefix + "_b"))

    def transformer_block(x, p, bias):
        # fused QKV projection: one (L, D) @ (D, 3D) matmul
        qkv = (mm(ln(x, p + "ln1"), p + "w_qkv") + V(p + "b_qkv")).astype(BF16)
        d = qkv.shape[1] // 3
        o = _attention(qkv[:, 0:d], qkv[:, d:2 * d], qkv[:, 2 * d:3 * d],
                       bias, NH, d // NH)
        x = x + mm(o, p + "w_o") + V(p + "b_o")   # single fused out-projection
        h = jax.nn.gelu(mm(ln(x, p + "ln2"), p + "w1") + V(p + "b1"), approximate=True)
        return x + mm(h, p + "w2") + V(p + "b2")

    # ---- vision tower (ViT): patch embed + 1 block, batch folded into rows ----
    x = mm(patches_ref[...], "patch_w") + V("vis_addend")            # (B*LV, DV)
    vis_bias = _pair_bias(B * LV, B * LV, LV, LV, n_valid_cols=NPP1)
    x = transformer_block(x, "vit_", vis_bias)
    vis = ln(x, "vit_lnf")                                           # (B*LV, DV)

    # ---- Q-Former: queries cross-attend to vision features ----
    # Runs directly on the expanded (B*LSEQ)-row layout; the token-row slots are
    # "don't care" here and get overwritten by the token embeddings below.
    q = V("query_tokens")                                            # (B*LSEQ, DV)
    qh = (mm(ln(q, "qf_ln1"), "qf_w_q") + V("qf_b_q")).astype(BF16)
    kv = (mm(ln(vis, "qf_lnkv"), "qf_w_kv") + V("qf_b_kv")).astype(BF16)  # fused K|V
    x_bias = _pair_bias(B * LSEQ, B * LV, LSEQ, LV, n_valid_cols=NPP1)
    o = _attention(qh, kv[:, 0:DV], kv[:, DV:2 * DV], x_bias, NH, DH)
    q = q + mm(o, "qf_w_o") + V("qf_b_o")
    h = jax.nn.gelu(mm(ln(q, "qf_ln2"), "qf_w1") + V("qf_b1"), approximate=True)
    q = q + mm(h, "qf_w2") + V("qf_b2")

    # ---- language projection + token merge (in registers) + OPT-like decoder ----
    q_lm = mm(q, "proj_w") + V("proj_b")                             # (B*LSEQ, DL)
    r = jax.lax.broadcasted_iota(jnp.int32, (B * LSEQ, DL), 0)
    r_loc = r - jnp.where(r >= LSEQ, LSEQ, 0)
    h0 = jnp.where(r_loc >= NQ, tok_ref[...], q_lm) + V("lm_pos")
    lm_bias = _pair_bias(B * LSEQ, B * LSEQ, LSEQ, LSEQ, causal=True)
    hlm = transformer_block(h0, "lm_", lm_bias)
    hlm = ln(hlm, "lm_lnf")
    out_ref[...] = (mm(hlm, "lm_head_w") + V("lm_head_b")).astype(out_ref.dtype)


# --------------------------- weight packing (wrapper) -------------------------
class _Packer:
    """Stacks 2-D params into one lane-dense (rows, 128) buffer; records static
    (row_offset, rows, cols) per entry for in-kernel static-slice reads."""

    def __init__(self, dtype):
        self.dtype = dtype
        self.parts = []
        self.offsets = {}
        self.n = 0

    def add(self, name, arr):
        arr = jnp.asarray(arr, F32)
        assert arr.ndim == 2 and arr.shape[1] <= LANES
        r, c = arr.shape
        if c < LANES:
            arr = jnp.pad(arr, ((0, 0), (0, LANES - c)))
        self.offsets[name] = (self.n, r, c)
        self.parts.append(arr)
        self.n += r

    def finalize(self):
        buf = jnp.concatenate(self.parts, axis=0)
        pad = (-buf.shape[0]) % 8
        if pad:
            buf = jnp.pad(buf, ((0, pad), (0, 0)))
        return buf.astype(self.dtype), self.offsets


def prepare_params(params):
    wp = _Packer(BF16)   # all matmul weights, pre-cast to bf16
    vp = _Packer(F32)    # biases / LN params / position & query embeddings
    row = lambda v: v.reshape(1, -1)
    qf, xa = params["qformer"], params["qformer"]["xattn"]

    # multi-row f32 tensors first so their row offsets stay 8-aligned
    vis_addend = (jnp.concatenate(
        [params["cls"].reshape(1, DV),
         jnp.broadcast_to(params["patch_b"].reshape(1, DV), (NP, DV))], axis=0)
        + params["vis_pos"])                                          # (17, DV)
    vis_addend = jnp.pad(vis_addend, ((0, LV - NPP1), (0, 0)))        # (LV, DV)
    vp.add("vis_addend", jnp.tile(vis_addend, (B, 1)))                # (B*LV, DV)
    vp.add("query_tokens",
           jnp.tile(params["query_tokens"].reshape(NQ, DV), (B * LSEQ // NQ, 1)))
    vp.add("lm_pos", jnp.tile(params["lm_pos"], (B, 1)))              # (B*LSEQ, DL)

    def add_block(prefix, bp):
        wp.add(prefix + "w_qkv", bp["attn"]["w_qkv"])                 # fused (D, 3D)
        wp.add(prefix + "w_o", bp["attn"]["w_o"])
        wp.add(prefix + "w1", bp["mlp"]["w1"])
        wp.add(prefix + "w2", bp["mlp"]["w2"])
        vp.add(prefix + "ln1_g", row(bp["ln1_g"])); vp.add(prefix + "ln1_b", row(bp["ln1_b"]))
        vp.add(prefix + "ln2_g", row(bp["ln2_g"])); vp.add(prefix + "ln2_b", row(bp["ln2_b"]))
        vp.add(prefix + "b_qkv", row(bp["attn"]["b_qkv"]))
        vp.add(prefix + "b_o", row(bp["attn"]["b_o"]))
        vp.add(prefix + "b1", row(bp["mlp"]["b1"])); vp.add(prefix + "b2", row(bp["mlp"]["b2"]))

    wp.add("patch_w", params["patch_w"])
    add_block("vit_", params["vit"])
    vp.add("vit_lnf_g", row(params["vit_lnf_g"])); vp.add("vit_lnf_b", row(params["vit_lnf_b"]))

    wp.add("qf_w_q", xa["w_q"])
    wp.add("qf_w_kv", jnp.concatenate([xa["w_k"], xa["w_v"]], axis=1))   # fused K|V
    wp.add("qf_w_o", xa["w_o"])
    wp.add("qf_w1", qf["mlp"]["w1"]); wp.add("qf_w2", qf["mlp"]["w2"])
    vp.add("qf_ln1_g", row(qf["ln1_g"])); vp.add("qf_ln1_b", row(qf["ln1_b"]))
    vp.add("qf_lnkv_g", row(qf["ln_kv_g"])); vp.add("qf_lnkv_b", row(qf["ln_kv_b"]))
    vp.add("qf_ln2_g", row(qf["ln2_g"])); vp.add("qf_ln2_b", row(qf["ln2_b"]))
    vp.add("qf_b_q", row(xa["b_q"]))
    vp.add("qf_b_kv", row(jnp.concatenate([xa["b_k"], xa["b_v"]])))
    vp.add("qf_b_o", row(xa["b_o"]))
    vp.add("qf_b1", row(qf["mlp"]["b1"])); vp.add("qf_b2", row(qf["mlp"]["b2"]))

    wp.add("proj_w", params["proj_w"]); vp.add("proj_b", row(params["proj_b"]))

    add_block("lm_", params["lm_block"])
    vp.add("lm_lnf_g", row(params["lm_lnf_g"])); vp.add("lm_lnf_b", row(params["lm_lnf_b"]))
    wp.add("lm_head_w", jnp.pad(params["lm_head_w"], ((0, 0), (0, VOCAB_PAD - VOCAB))))
    vp.add("lm_head_b", jnp.pad(row(params["lm_head_b"]), ((0, 0), (0, VOCAB_PAD - VOCAB))))

    wmat, woff = wp.finalize()
    vvec, voff = vp.finalize()
    return wmat, woff, vvec, voff


# ------------------------------ forward wrapper --------------------------------
def blip2_forward(params, image_nchw, text_ids):
    """image_nchw: (B, C, IMG, IMG) float32 (PyTorch NCHW); text_ids: (B, T) int32."""
    wmat, woff, vvec, voff = prepare_params(params)

    # conv patch embed (kernel == stride == P) as unfold; per-batch vision rows are
    # [CLS slot (zero), 16 patch rows, 7 zero pad rows] -> LV = 24 (8-aligned).
    x = image_nchw.reshape(B, C, IMG // P, P, IMG // P, P)
    x = x.transpose(0, 2, 4, 1, 3, 5).reshape(B, NP, CP2)
    patches = jnp.pad(x, ((0, 0), (1, LV - NPP1), (0, 0))).reshape(B * LV, CP2)

    # token embedding gather (glue); query-row slots are zero and get replaced in-kernel
    tok = jnp.take(params["tok_emb"], text_ids, axis=0)                # (B, T, DL)
    tok_seq = jnp.concatenate([jnp.zeros((B, NQ, DL), F32), tok],
                              axis=1).reshape(B * LSEQ, DL)

    # Single invocation (no grid): whole working set (< 0.5 MiB) lives in VMEM.
    # On single-TC chips (v5e/v6e) this removes all per-grid-step overhead; on
    # v7x a 2-TC split would only duplicate the weight DMA for a tiny kernel.
    logits = pl.pallas_call(
        functools.partial(_blip2_kernel, woff, voff),
        out_shape=jax.ShapeDtypeStruct((B * LSEQ, VOCAB_PAD), jnp.float32),
        in_specs=[pl.BlockSpec(memory_space=pltpu.MemorySpace.VMEM)] * 4,
        out_specs=pl.BlockSpec(memory_space=pltpu.MemorySpace.VMEM),
    )(patches, tok_seq, wmat, vvec)

    return logits.reshape(B, LSEQ, VOCAB_PAD)[:, :, :VOCAB]           # (B, NQ+T, VOCAB)


# ----------------------------- parameter init -----------------------------------
def init_params(key):
    keys = iter(jax.random.split(key, 128))

    def nrm(shape, scale=0.02):
        return scale * jax.random.normal(next(keys), shape, F32)

    def attn_params(d):
        return {"w_qkv": nrm((d, 3 * d)), "b_qkv": jnp.zeros((3 * d,), F32),
                "w_o": nrm((d, d)), "b_o": jnp.zeros((d,), F32)}

    def xattn_params(d):
        return {"w_q": nrm((d, d)), "b_q": jnp.zeros((d,), F32),
                "w_k": nrm((d, d)), "b_k": jnp.zeros((d,), F32),
                "w_v": nrm((d, d)), "b_v": jnp.zeros((d,), F32),
                "w_o": nrm((d, d)), "b_o": jnp.zeros((d,), F32)}

    def mlp_params(d, dh):
        return {"w1": nrm((d, dh)), "b1": jnp.zeros((dh,), F32),
                "w2": nrm((dh, d)), "b2": jnp.zeros((d,), F32)}

    def ln(d):
        return jnp.ones((d,), F32), jnp.zeros((d,), F32)

    def block(d):
        l1g, l1b = ln(d); l2g, l2b = ln(d)
        return {"ln1_g": l1g, "ln1_b": l1b, "ln2_g": l2g, "ln2_b": l2b,
                "attn": attn_params(d), "mlp": mlp_params(d, MLP)}

    vlnf_g, vlnf_b = ln(DV)
    qln1_g, qln1_b = ln(DV); qln2_g, qln2_b = ln(DV); qlnkv_g, qlnkv_b = ln(DV)
    llnf_g, llnf_b = ln(DL)

    return {
        "patch_w": nrm((CP2, DV)), "patch_b": jnp.zeros((DV,), F32),
        "cls": nrm((1, 1, DV)), "vis_pos": nrm((NP + 1, DV)),
        "vit": block(DV), "vit_lnf_g": vlnf_g, "vit_lnf_b": vlnf_b,
        "query_tokens": nrm((1, NQ, DV)),
        "qformer": {"ln1_g": qln1_g, "ln1_b": qln1_b,
                    "ln_kv_g": qlnkv_g, "ln_kv_b": qlnkv_b,
                    "ln2_g": qln2_g, "ln2_b": qln2_b,
                    "xattn": xattn_params(DV), "mlp": mlp_params(DV, MLP)},
        "proj_w": nrm((DV, DL)), "proj_b": jnp.zeros((DL,), F32),
        "tok_emb": nrm((VOCAB, DL)), "lm_pos": nrm((NQ + T, DL)),
        "lm_block": block(DL), "lm_lnf_g": llnf_g, "lm_lnf_b": llnf_b,
        "lm_head_w": nrm((DL, VOCAB)), "lm_head_b": jnp.zeros((VOCAB,), F32),
    }


# TODO(synk): the original Blip2 wrapper also runs the HF text/image processor
# (tokenization, resize/normalize) and autoregressive .generate(); tokenization
# has no Pallas equivalent, so we take pre-tokenized ids / pre-normalized pixels.

if __name__ == "__main__":
    key = jax.random.PRNGKey(0)
    k_param, k_img, k_txt = jax.random.split(key, 3)

    params = init_params(k_param)
    image = jax.random.normal(k_img, (B, C, IMG, IMG), F32)            # NCHW, like PyTorch
    text_ids = jax.random.randint(k_txt, (B, T), 0, VOCAB, jnp.int32)

    logits = jax.jit(blip2_forward)(params, image, text_ids)
    logits = jax.block_until_ready(logits)

    assert logits.shape == (B, NQ + T, VOCAB)
    assert bool(jnp.all(jnp.isfinite(logits)))
    print("KERNEL_OK")
</pallas_src>

<mosaic_0001>
module attributes {stable_mosaic.version = 11 : i64} {
  func.func @_blip2_kernel(%arg0: memref<48x48xf32, #tpu.memory_space<vmem>>, %arg1: memref<32x32xf32, #tpu.memory_space<vmem>>, %arg2: memref<816x128xbf16, #tpu.memory_space<vmem>>, %arg3: memref<152x128xf32, #tpu.memory_space<vmem>>, %arg4: memref<32x128xf32, #tpu.memory_space<vmem>>) attributes {dimension_semantics = [], scalar_prefetch = 0 : i64, scratch_operands = 0 : i64, tpu.core_type = #tpu.core_type<tc>} {
    %c0 = arith.constant 0 : index
    %c0_0 = arith.constant 0 : index
    %0 = vector.load %arg0[%c0, %c0_0] : memref<48x48xf32, #tpu.memory_space<vmem>>, vector<48x48xf32>
    %1 = arith.truncf %0 : vector<48x48xf32> to vector<48x48xbf16>
    %c0_1 = arith.constant 0 : index
    %c0_2 = arith.constant 0 : index
    %2 = vector.load %arg2[%c0_1, %c0_2] : memref<816x128xbf16, #tpu.memory_space<vmem>>, vector<48x32xbf16>
    %cst = arith.constant dense<0.000000e+00> : vector<48x32xf32>
    %3 = tpu.matmul %1, %2, %cst {dimension_numbers = #tpu.dot_dimension_numbers<[1], [0], [0], [1], [0, 0, 1, 1], [], []>} : vector<48x48xbf16>, vector<48x32xbf16>, vector<48x32xf32> -> vector<48x32xf32>
    %c0_3 = arith.constant 0 : index
    %c0_4 = arith.constant 0 : index
    %4 = vector.load %arg3[%c0_3, %c0_4] : memref<152x128xf32, #tpu.memory_space<vmem>>, vector<48x32xf32>
    %5 = arith.addf %3, %4 : vector<48x32xf32>
    %6 = tpu.iota {dimensions = array<i32: 0>} : vector<48x48xi32>
    %7 = tpu.iota {dimensions = array<i32: 1>} : vector<48x48xi32>
    %c24_i32 = arith.constant 24 : i32
    %8 = vector.broadcast %c24_i32 : i32 to vector<48x48xi32>
    %9 = arith.cmpi sge, %6, %8 : vector<48x48xi32>
    %c24_i32_5 = arith.constant 24 : i32
    %10 = vector.broadcast %c24_i32_5 : i32 to vector<48x48xi32>
    %11 = arith.cmpi sge, %7, %10 : vector<48x48xi32>
    %c24_i32_6 = arith.constant 24 : i32
    %c0_i32 = arith.constant 0 : i32
    %12 = vector.broadcast %c24_i32_6 : i32 to vector<48x48xi32>
    %13 = vector.broadcast %c0_i32 : i32 to vector<48x48xi32>
    %14 = arith.select %11, %12, %13 : vector<48x48xi1>, vector<48x48xi32>
    %15 = arith.subi %7, %14 : vector<48x48xi32>
    %16 = arith.xori %9, %11 : vector<48x48xi1>
    %cst_7 = arith.constant dense<true> : vector<48x48xi1>
    %17 = arith.xori %16, %cst_7 : vector<48x48xi1>
    %c17_i32 = arith.constant 17 : i32
    %18 = vector.broadcast %c17_i32 : i32 to vector<48x48xi32>
    %19 = arith.cmpi slt, %15, %18 : vector<48x48xi32>
    %20 = arith.andi %17, %19 : vector<48x48xi1>
    %cst_8 = arith.constant 0.000000e+00 : f32
    %cst_9 = arith.constant -1.000000e+30 : f32
    %21 = vector.broadcast %cst_8 : f32 to vector<48x48xf32>
    %22 = vector.broadcast %cst_9 : f32 to vector<48x48xf32>
    %23 = arith.select %20, %21, %22 : vector<48x48xi1>, vector<48x48xf32>
    %c112 = arith.constant 112 : index
    %c0_10 = arith.constant 0 : index
    %24 = vector.load %arg3[%c112, %c0_10] : memref<152x128xf32, #tpu.memory_space<vmem>>, vector<1x32xf32>
    %c113 = arith.constant 113 : index
    %c0_11 = arith.constant 0 : index
    %25 = vector.load %arg3[%c113, %c0_11] : memref<152x128xf32, #tpu.memory_space<vmem>>, vector<1x32xf32>
    %cst_12 = arith.constant dense<0.000000e+00> : vector<48xf32>
    %26 = vector.multi_reduction <add>, %5, %cst_12 [1] : vector<48x32xf32> to vector<48xf32>
    %27 = vector.shape_cast %26 : vector<48xf32> to vector<48x1xf32>
    %cst_13 = arith.constant 3.200000e+01 : f32
    %28 = vector.broadcast %cst_13 : f32 to vector<48x1xf32>
    %29 = arith.divf %27, %28 : vector<48x1xf32>
    %30 = vector.broadcast %29 : vector<48x1xf32> to vector<48x32xf32>
    %31 = arith.subf %5, %30 : vector<48x32xf32>
    %32 = arith.mulf %31, %31 : vector<48x32xf32>
    %cst_14 = arith.constant dense<0.000000e+00> : vector<48xf32>
    %33 = vector.multi_reduction <add>, %32, %cst_14 [1] : vector<48x32xf32> to vector<48xf32>
    %34 = vector.shape_cast %33 : vector<48xf32> to vector<48x1xf32>
    %cst_15 = arith.constant 3.200000e+01 : f32
    %35 = vector.broadcast %cst_15 : f32 to vector<48x1xf32>
    %36 = arith.divf %34, %35 : vector<48x1xf32>
    %37 = vector.broadcast %29 : vector<48x1xf32> to vector<48x32xf32>
    %38 = arith.subf %5, %37 : vector<48x32xf32>
    %cst_16 = arith.constant 9.99999974E-6 : f32
    %39 = vector.broadcast %cst_16 : f32 to vector<48x1xf32>
    %40 = arith.addf %36, %39 : vector<48x1xf32>
    %41 = math.rsqrt %40 : vector<48x1xf32>
    %42 = vector.broadcast %41 : vector<48x1xf32> to vector<48x32xf32>
    %43 = arith.mulf %38, %42 : vector<48x32xf32>
    %44 = vector.broadcast %24 : vector<1x32xf32> to vector<48x32xf32>
    %45 = arith.mulf %43, %44 : vector<48x32xf32>
    %46 = vector.broadcast %25 : vector<1x32xf32> to vector<48x32xf32>
    %47 = arith.addf %45, %46 : vector<48x32xf32>
    %48 = arith.truncf %47 : vector<48x32xf32> to vector<48x32xbf16>
    %c48 = arith.constant 48 : index
    %c0_17 = arith.constant 0 : index
    %49 = vector.load %arg2[%c48, %c0_17] : memref<816x128xbf16, #tpu.memory_space<vmem>>, vector<32x96xbf16>
    %cst_18 = arith.constant dense<0.000000e+00> : vector<48x96xf32>
    %50 = tpu.matmul %48, %49, %cst_18 {dimension_numbers = #tpu.dot_dimension_numbers<[1], [0], [0], [1], [0, 0, 1, 1], [], []>} : vector<48x32xbf16>, vector<32x96xbf16>, vector<48x96xf32> -> vector<48x96xf32>
    %c116 = arith.constant 116 : index
    %c0_19 = arith.constant 0 : index
    %51 = vector.load %arg3[%c116, %c0_19] : memref<152x128xf32, #tpu.memory_space<vmem>>, vector<1x96xf32>
    %52 = vector.broadcast %51 : vector<1x96xf32> to vector<48x96xf32>
    %53 = arith.addf %50, %52 : vector<48x96xf32>
    %54 = arith.truncf %53 : vector<48x96xf32> to vector<48x96xbf16>
    %55 = vector.extract_strided_slice %54 {offsets = [0, 0], sizes = [48, 32], strides = [1, 1]} : vector<48x96xbf16> to vector<48x32xbf16>
    %56 = vector.extract_strided_slice %54 {offsets = [0, 32], sizes = [48, 32], strides = [1, 1]} : vector<48x96xbf16> to vector<48x32xbf16>
    %57 = vector.extract_strided_slice %54 {offsets = [0, 64], sizes = [48, 32], strides = [1, 1]} : vector<48x96xbf16> to vector<48x32xbf16>
    %58 = vector.extract_strided_slice %55 {offsets = [0, 0], sizes = [48, 8], strides = [1, 1]} : vector<48x32xbf16> to vector<48x8xbf16>
    %59 = vector.extract_strided_slice %56 {offsets = [0, 0], sizes = [48, 8], strides = [1, 1]} : vector<48x32xbf16> to vector<48x8xbf16>
    %cst_20 = arith.constant dense<0.000000e+00> : vector<48x48xf32>
    %60 = tpu.matmul %58, %59, %cst_20 {dimension_numbers = #tpu.dot_dimension_numbers<[1], [1], [0], [0], [0, 0, 1, 0], [], []>} : vector<48x8xbf16>, vector<48x8xbf16>, vector<48x48xf32> -> vector<48x48xf32>
    %cst_21 = arith.constant 0.353553385 : f32
    %61 = vector.broadcast %cst_21 : f32 to vector<48x48xf32>
    %62 = arith.mulf %60, %61 : vector<48x48xf32>
    %63 = arith.addf %62, %23 : vector<48x48xf32>
    %cst_22 = arith.constant dense<0xFF800000> : vector<48xf32>
    %64 = vector.multi_reduction <maximumf>, %63, %cst_22 [1] : vector<48x48xf32> to vector<48xf32>
    %65 = vector.shape_cast %64 : vector<48xf32> to vector<48x1xf32>
    %66 = vector.broadcast %65 : vector<48x1xf32> to vector<48x48xf32>
    %67 = arith.subf %63, %66 : vector<48x48xf32>
    %68 = math.exp %67 : vector<48x48xf32>
    %cst_23 = arith.constant dense<0.000000e+00> : vector<48xf32>
    %69 = vector.multi_reduction <add>, %68, %cst_23 [1] : vector<48x48xf32> to vector<48xf32>
    %70 = vector.shape_cast %69 : vector<48xf32> to vector<48x1xf32>
    %71 = arith.truncf %68 : vector<48x48xf32> to vector<48x48xbf16>
    %72 = vector.extract_strided_slice %57 {offsets = [0, 0], sizes = [48, 8], strides = [1, 1]} : vector<48x32xbf16> to vector<48x8xbf16>
    %cst_24 = arith.constant dense<0.000000e+00> : vector<48x8xf32>
    %73 = tpu.matmul %71, %72, %cst_24 {dimension_numbers = #tpu.dot_dimension_numbers<[1], [0], [0], [1], [0, 0, 1, 1], [], []>} : vector<48x48xbf16>, vector<48x8xbf16>, vector<48x8xf32> -> vector<48x8xf32>
    %74 = tpu.reciprocal %70 {approx = true} : vector<48x1xf32> -> vector<48x1xf32>
    %75 = vector.broadcast %74 : vector<48x1xf32> to vector<48x8xf32>
    %76 = arith.mulf %73, %75 : vector<48x8xf32>
    %77 = vector.extract_strided_slice %55 {offsets = [0, 8], sizes = [48, 8], strides = [1, 1]} : vector<48x32xbf16> to vector<48x8xbf16>
    %78 = vector.extract_strided_slice %56 {offsets = [0, 8], sizes = [48, 8], strides = [1, 1]} : vector<48x32xbf16> to vector<48x8xbf16>
    %cst_25 = arith.constant dense<0.000000e+00> : vector<48x48xf32>
    %79 = tpu.matmul %77, %78, %cst_25 {dimension_numbers = #tpu.dot_dimension_numbers<[1], [1], [0], [0], [0, 0, 1, 0], [], []>} : vector<48x8xbf16>, vector<48x8xbf16>, vector<48x48xf32> -> vector<48x48xf32>
    %cst_26 = arith.constant 0.353553385 : f32
    %80 = vector.broadcast %cst_26 : f32 to vector<48x48xf32>
    %81 = arith.mulf %79, %80 : vector<48x48xf32>
    %82 = arith.addf %81, %23 : vector<48x48xf32>
    %cst_27 = arith.constant dense<0xFF800000> : vector<48xf32>
    %83 = vector.multi_reduction <maximumf>, %82, %cst_27 [1] : vector<48x48xf32> to vector<48xf32>
    %84 = vector.shape_cast %83 : vector<48xf32> to vector<48x1xf32>
    %85 = vector.broadcast %84 : vector<48x1xf32> to vector<48x48xf32>
    %86 = arith.subf %82, %85 : vector<48x48xf32>
    %87 = math.exp %86 : vector<48x48xf32>
    %cst_28 = arith.constant dense<0.000000e+00> : vector<48xf32>
    %88 = vector.multi_reduction <add>, %87, %cst_28 [1] : vector<48x48xf32> to vector<48xf32>
    %89 = vector.shape_cast %88 : vector<48xf32> to vector<48x1xf32>
    %90 = arith.truncf %87 : vector<48x48xf32> to vector<48x48xbf16>
    %91 = vector.extract_strided_slice %57 {offsets = [0, 8], sizes = [48, 8], strides = [1, 1]} : vector<48x32xbf16> to vector<48x8xbf16>
    %cst_29 = arith.constant dense<0.000000e+00> : vector<48x8xf32>
    %92 = tpu.matmul %90, %91, %cst_29 {dimension_numbers = #tpu.dot_dimension_numbers<[1], [0], [0], [1], [0, 0, 1, 1], [], []>} : vector<48x48xbf16>, vector<48x8xbf16>, vector<48x8xf32> -> vector<48x8xf32>
    %93 = tpu.reciprocal %89 {approx = true} : vector<48x1xf32> -> vector<48x1xf32>
    %94 = vector.broadcast %93 : vector<48x1xf32> to vector<48x8xf32>
    %95 = arith.mulf %92, %94 : vector<48x8xf32>
    %96 = vector.extract_strided_slice %55 {offsets = [0, 16], sizes = [48, 8], strides = [1, 1]} : vector<48x32xbf16> to vector<48x8xbf16>
    %97 = vector.extract_strided_slice %56 {offsets = [0, 16], sizes = [48, 8], strides = [1, 1]} : vector<48x32xbf16> to vector<48x8xbf16>
    %cst_30 = arith.constant dense<0.000000e+00> : vector<48x48xf32>
    %98 = tpu.matmul %96, %97, %cst_30 {dimension_numbers = #tpu.dot_dimension_numbers<[1], [1], [0], [0], [0, 0, 1, 0], [], []>} : vector<48x8xbf16>, vector<48x8xbf16>, vector<48x48xf32> -> vector<48x48xf32>
    %cst_31 = arith.constant 0.353553385 : f32
    %99 = vector.broadcast %cst_31 : f32 to vector<48x48xf32>
    %100 = arith.mulf %98, %99 : vector<48x48xf32>
    %101 = arith.addf %100, %23 : vector<48x48xf32>
    %cst_32 = arith.constant dense<0xFF800000> : vector<48xf32>
    %102 = vector.multi_reduction <maximumf>, %101, %cst_32 [1] : vector<48x48xf32> to vector<48xf32>
    %103 = vector.shape_cast %102 : vector<48xf32> to vector<48x1xf32>
    %104 = vector.broadcast %103 : vector<48x1xf32> to vector<48x48xf32>
    %105 = arith.subf %101, %104 : vector<48x48xf32>
    %106 = math.exp %105 : vector<48x48xf32>
    %cst_33 = arith.constant dense<0.000000e+00> : vector<48xf32>
    %107 = vector.multi_reduction <add>, %106, %cst_33 [1] : vector<48x48xf32> to vector<48xf32>
    %108 = vector.shape_cast %107 : vector<48xf32> to vector<48x1xf32>
    %109 = arith.truncf %106 : vector<48x48xf32> to vector<48x48xbf16>
    %110 = vector.extract_strided_slice %57 {offsets = [0, 16], sizes = [48, 8], strides = [1, 1]} : vector<48x32xbf16> to vector<48x8xbf16>
    %cst_34 = arith.constant dense<0.000000e+00> : vector<48x8xf32>
    %111 = tpu.matmul %109, %110, %cst_34 {dimension_numbers = #tpu.dot_dimension_numbers<[1], [0], [0], [1], [0, 0, 1, 1], [], []>} : vector<48x48xbf16>, vector<48x8xbf16>, vector<48x8xf32> -> vector<48x8xf32>
    %112 = tpu.reciprocal %108 {approx = true} : vector<48x1xf32> -> vector<48x1xf32>
    %113 = vector.broadcast %112 : vector<48x1xf32> to vector<48x8xf32>
    %114 = arith.mulf %111, %113 : vector<48x8xf32>
    %115 = vector.extract_strided_slice %55 {offsets = [0, 24], sizes = [48, 8], strides = [1, 1]} : vector<48x32xbf16> to vector<48x8xbf16>
    %116 = vector.extract_strided_slice %56 {offsets = [0, 24], sizes = [48, 8], strides = [1, 1]} : vector<48x32xbf16> to vector<48x8xbf16>
    %cst_35 = arith.constant dense<0.000000e+00> : vector<48x48xf32>
    %117 = tpu.matmul %115, %116, %cst_35 {dimension_numbers = #tpu.dot_dimension_numbers<[1], [1], [0], [0], [0, 0, 1, 0], [], []>} : vector<48x8xbf16>, vector<48x8xbf16>, vector<48x48xf32> -> vector<48x48xf32>
    %cst_36 = arith.constant 0.353553385 : f32
    %118 = vector.broadcast %cst_36 : f32 to vector<48x48xf32>
    %119 = arith.mulf %117, %118 : vector<48x48xf32>
    %120 = arith.addf %119, %23 : vector<48x48xf32>
    %cst_37 = arith.constant dense<0xFF800000> : vector<48xf32>
    %121 = vector.multi_reduction <maximumf>, %120, %cst_37 [1] : vector<48x48xf32> to vector<48xf32>
    %122 = vector.shape_cast %121 : vector<48xf32> to vector<48x1xf32>
    %123 = vector.broadcast %122 : vector<48x1xf32> to vector<48x48xf32>
    %124 = arith.subf %120, %123 : vector<48x48xf32>
    %125 = math.exp %124 : vector<48x48xf32>
    %cst_38 = arith.constant dense<0.000000e+00> : vector<48xf32>
    %126 = vector.multi_reduction <add>, %125, %cst_38 [1] : vector<48x48xf32> to vector<48xf32>
    %127 = vector.shape_cast %126 : vector<48xf32> to vector<48x1xf32>
    %128 = arith.truncf %125 : vector<48x48xf32> to vector<48x48xbf16>
    %129 = vector.extract_strided_slice %57 {offsets = [0, 24], sizes = [48, 8], strides = [1, 1]} : vector<48x32xbf16> to vector<48x8xbf16>
    %cst_39 = arith.constant dense<0.000000e+00> : vector<48x8xf32>
    %130 = tpu.matmul %128, %129, %cst_39 {dimension_numbers = #tpu.dot_dimension_numbers<[1], [0], [0], [1], [0, 0, 1, 1], [], []>} : vector<48x48xbf16>, vector<48x8xbf16>, vector<48x8xf32> -> vector<48x8xf32>
    %131 = tpu.reciprocal %127 {approx = true} : vector<48x1xf32> -> vector<48x1xf32>
    %132 = vector.broadcast %131 : vector<48x1xf32> to vector<48x8xf32>
    %133 = arith.mulf %130, %132 : vector<48x8xf32>
    %134 = tpu.concatenate %76, %95, %114, %133 in 1 : vector<48x8xf32>, vector<48x8xf32>, vector<48x8xf32>, vector<48x8xf32> -> vector<48x32xf32>
    %135 = arith.truncf %134 : vector<48x32xf32> to vector<48x32xbf16>
    %c80 = arith.constant 80 : index
    %c0_40 = arith.constant 0 : index
    %136 = vector.load %arg2[%c80, %c0_40] : memref<816x128xbf16, #tpu.memory_space<vmem>>, vector<32x32xbf16>
    %cst_41 = arith.constant dense<0.000000e+00> : vector<48x32xf32>
    %137 = tpu.matmul %135, %136, %cst_41 {dimension_numbers = #tpu.dot_dimension_numbers<[1], [0], [0], [1], [0, 0, 1, 1], [], []>} : vector<48x32xbf16>, vector<32x32xbf16>, vector<48x32xf32> -> vector<48x32xf32>
    %138 = arith.addf %5, %137 : vector<48x32xf32>
    %c117 = arith.constant 117 : index
    %c0_42 = arith.constant 0 : index
    %139 = vector.load %arg3[%c117, %c0_42] : memref<152x128xf32, #tpu.memory_space<vmem>>, vector<1x32xf32>
    %140 = vector.broadcast %139 : vector<1x32xf32> to vector<48x32xf32>
    %141 = arith.addf %138, %140 : vector<48x32xf32>
    %c114 = arith.constant 114 : index
    %c0_43 = arith.constant 0 : index
    %142 = vector.load %arg3[%c114, %c0_43] : memref<152x128xf32, #tpu.memory_space<vmem>>, vector<1x32xf32>
    %c115 = arith.constant 115 : index
    %c0_44 = arith.constant 0 : index
    %143 = vector.load %arg3[%c115, %c0_44] : memref<152x128xf32, #tpu.memory_space<vmem>>, vector<1x32xf32>
    %cst_45 = arith.constant dense<0.000000e+00> : vector<48xf32>
    %144 = vector.multi_reduction <add>, %141, %cst_45 [1] : vector<48x32xf32> to vector<48xf32>
    %145 = vector.shape_cast %144 : vector<48xf32> to vector<48x1xf32>
    %cst_46 = arith.constant 3.200000e+01 : f32
    %146 = vector.broadcast %cst_46 : f32 to vector<48x1xf32>
    %147 = arith.divf %145, %146 : vector<48x1xf32>
    %148 = vector.broadcast %147 : vector<48x1xf32> to vector<48x32xf32>
    %149 = arith.subf %141, %148 : vector<48x32xf32>
    %150 = arith.mulf %149, %149 : vector<48x32xf32>
    %cst_47 = arith.constant dense<0.000000e+00> : vector<48xf32>
    %151 = vector.multi_reduction <add>, %150, %cst_47 [1] : vector<48x32xf32> to vector<48xf32>
    %152 = vector.shape_cast %151 : vector<48xf32> to vector<48x1xf32>
    %cst_48 = arith.constant 3.200000e+01 : f32
    %153 = vector.broadcast %cst_48 : f32 to vector<48x1xf32>
    %154 = arith.divf %152, %153 : vector<48x1xf32>
    %155 = vector.broadcast %147 : vector<48x1xf32> to vector<48x32xf32>
    %156 = arith.subf %141, %155 : vector<48x32xf32>
    %cst_49 = arith.constant 9.99999974E-6 : f32
    %157 = vector.broadcast %cst_49 : f32 to vector<48x1xf32>
    %158 = arith.addf %154, %157 : vector<48x1xf32>
    %159 = math.rsqrt %158 : vector<48x1xf32>
    %160 = vector.broadcast %159 : vector<48x1xf32> to vector<48x32xf32>
    %161 = arith.mulf %156, %160 : vector<48x32xf32>
    %162 = vector.broadcast %142 : vector<1x32xf32> to vector<48x32xf32>
    %163 = arith.mulf %161, %162 : vector<48x32xf32>
    %164 = vector.broadcast %143 : vector<1x32xf32> to vector<48x32xf32>
    %165 = arith.addf %163, %164 : vector<48x32xf32>
    %166 = arith.truncf %165 : vector<48x32xf32> to vector<48x32xbf16>
    %c112_50 = arith.constant 112 : index
    %c0_51 = arith.constant 0 : index
    %167 = vector.load %arg2[%c112_50, %c0_51] : memref<816x128xbf16, #tpu.memory_space<vmem>>, vector<32x128xbf16>
    %cst_52 = arith.constant dense<0.000000e+00> : vector<48x128xf32>
    %168 = tpu.matmul %166, %167, %cst_52 {dimension_numbers = #tpu.dot_dimension_numbers<[1], [0], [0], [1], [0, 0, 1, 1], [], []>} : vector<48x32xbf16>, vector<32x128xbf16>, vector<48x128xf32> -> vector<48x128xf32>
    %c118 = arith.constant 118 : index
    %c0_53 = arith.constant 0 : index
    %169 = vector.load %arg3[%c118, %c0_53] : memref<152x128xf32, #tpu.memory_space<vmem>>, vector<1x128xf32>
    %170 = vector.broadcast %169 : vector<1x128xf32> to vector<48x128xf32>
    %171 = arith.addf %168, %170 : vector<48x128xf32>
    %172 = arith.mulf %171, %171 : vector<48x128xf32>
    %173 = arith.mulf %171, %172 : vector<48x128xf32>
    %cst_54 = arith.constant 4.471500e-02 : f32
    %174 = vector.broadcast %cst_54 : f32 to vector<48x128xf32>
    %175 = arith.mulf %174, %173 : vector<48x128xf32>
    %176 = arith.addf %171, %175 : vector<48x128xf32>
    %cst_55 = arith.constant 0.797884583 : f32
    %177 = vector.broadcast %cst_55 : f32 to vector<48x128xf32>
    %178 = arith.mulf %177, %176 : vector<48x128xf32>
    %179 = math.tanh %178 : vector<48x128xf32>
    %cst_56 = arith.constant 1.000000e+00 : f32
    %180 = vector.broadcast %cst_56 : f32 to vector<48x128xf32>
    %181 = arith.addf %180, %179 : vector<48x128xf32>
    %cst_57 = arith.constant 5.000000e-01 : f32
    %182 = vector.broadcast %cst_57 : f32 to vector<48x128xf32>
    %183 = arith.mulf %182, %181 : vector<48x128xf32>
    %184 = arith.mulf %171, %183 : vector<48x128xf32>
    %185 = arith.truncf %184 : vector<48x128xf32> to vector<48x128xbf16>
    %c144 = arith.constant 144 : index
    %c0_58 = arith.constant 0 : index
    %186 = vector.load %arg2[%c144, %c0_58] : memref<816x128xbf16, #tpu.memory_space<vmem>>, vector<128x32xbf16>
    %cst_59 = arith.constant dense<0.000000e+00> : vector<48x32xf32>
    %187 = tpu.matmul %185, %186, %cst_59 {dimension_numbers = #tpu.dot_dimension_numbers<[1], [0], [0], [1], [0, 0, 1, 1], [], []>} : vector<48x128xbf16>, vector<128x32xbf16>, vector<48x32xf32> -> vector<48x32xf32>
    %188 = arith.addf %141, %187 : vector<48x32xf32>
    %c119 = arith.constant 119 : index
    %c0_60 = arith.constant 0 : index
    %189 = vector.load %arg3[%c119, %c0_60] : memref<152x128xf32, #tpu.memory_space<vmem>>, vector<1x32xf32>
    %190 = vector.broadcast %189 : vector<1x32xf32> to vector<48x32xf32>
    %191 = arith.addf %188, %190 : vector<48x32xf32>
    %c120 = arith.constant 120 : index
    %c0_61 = arith.constant 0 : index
    %192 = vector.load %arg3[%c120, %c0_61] : memref<152x128xf32, #tpu.memory_space<vmem>>, vector<1x32xf32>
    %c121 = arith.constant 121 : index
    %c0_62 = arith.constant 0 : index
    %193 = vector.load %arg3[%c121, %c0_62] : memref<152x128xf32, #tpu.memory_space<vmem>>, vector<1x32xf32>
    %cst_63 = arith.constant dense<0.000000e+00> : vector<48xf32>
    %194 = vector.multi_reduction <add>, %191, %cst_63 [1] : vector<48x32xf32> to vector<48xf32>
    %195 = vector.shape_cast %194 : vector<48xf32> to vector<48x1xf32>
    %cst_64 = arith.constant 3.200000e+01 : f32
    %196 = vector.broadcast %cst_64 : f32 to vector<48x1xf32>
    %197 = arith.divf %195, %196 : vector<48x1xf32>
    %198 = vector.broadcast %197 : vector<48x1xf32> to vector<48x32xf32>
    %199 = arith.subf %191, %198 : vector<48x32xf32>
    %200 = arith.mulf %199, %199 : vector<48x32xf32>
    %cst_65 = arith.constant dense<0.000000e+00> : vector<48xf32>
    %201 = vector.multi_reduction <add>, %200, %cst_65 [1] : vector<48x32xf32> to vector<48xf32>
    %202 = vector.shape_cast %201 : vector<48xf32> to vector<48x1xf32>
    %cst_66 = arith.constant 3.200000e+01 : f32
    %203 = vector.broadcast %cst_66 : f32 to vector<48x1xf32>
    %204 = arith.divf %202, %203 : vector<48x1xf32>
    %205 = vector.broadcast %197 : vector<48x1xf32> to vector<48x32xf32>
    %206 = arith.subf %191, %205 : vector<48x32xf32>
    %cst_67 = arith.constant 9.99999974E-6 : f32
    %207 = vector.broadcast %cst_67 : f32 to vector<48x1xf32>
    %208 = arith.addf %204, %207 : vector<48x1xf32>
    %209 = math.rsqrt %208 : vector<48x1xf32>
    %210 = vector.broadcast %209 : vector<48x1xf32> to vector<48x32xf32>
    %211 = arith.mulf %206, %210 : vector<48x32xf32>
    %212 = vector.broadcast %192 : vector<1x32xf32> to vector<48x32xf32>
    %213 = arith.mulf %211, %212 : vector<48x32xf32>
    %214 = vector.broadcast %193 : vector<1x32xf32> to vector<48x32xf32>
    %215 = arith.addf %213, %214 : vector<48x32xf32>
    %c48_68 = arith.constant 48 : index
    %c0_69 = arith.constant 0 : index
    %216 = vector.load %arg3[%c48_68, %c0_69] : memref<152x128xf32, #tpu.memory_space<vmem>>, vector<32x32xf32>
    %c122 = arith.constant 122 : index
    %c0_70 = arith.constant 0 : index
    %217 = vector.load %arg3[%c122, %c0_70] : memref<152x128xf32, #tpu.memory_space<vmem>>, vector<1x32xf32>
    %c123 = arith.constant 123 : index
    %c0_71 = arith.constant 0 : index
    %218 = vector.load %arg3[%c123, %c0_71] : memref<152x128xf32, #tpu.memory_space<vmem>>, vector<1x32xf32>
    %cst_72 = arith.constant dense<0.000000e+00> : vector<32xf32>
    %219 = vector.multi_reduction <add>, %216, %cst_72 [1] : vector<32x32xf32> to vector<32xf32>
    %220 = vector.shape_cast %219 : vector<32xf32> to vector<32x1xf32>
    %cst_73 = arith.constant 3.200000e+01 : f32
    %221 = vector.broadcast %cst_73 : f32 to vector<32x1xf32>
    %222 = arith.divf %220, %221 : vector<32x1xf32>
    %223 = vector.broadcast %222 : vector<32x1xf32> to vector<32x32xf32>
    %224 = arith.subf %216, %223 : vector<32x32xf32>
    %225 = arith.mulf %224, %224 : vector<32x32xf32>
    %cst_74 = arith.constant dense<0.000000e+00> : vector<32xf32>
    %226 = vector.multi_reduction <add>, %225, %cst_74 [1] : vector<32x32xf32> to vector<32xf32>
    %227 = vector.shape_cast %226 : vector<32xf32> to vector<32x1xf32>
    %cst_75 = arith.constant 3.200000e+01 : f32
    %228 = vector.broadcast %cst_75 : f32 to vector<32x1xf32>
    %229 = arith.divf %227, %228 : vector<32x1xf32>
    %230 = vector.broadcast %222 : vector<32x1xf32> to vector<32x32xf32>
    %231 = arith.subf %216, %230 : vector<32x32xf32>
    %cst_76 = arith.constant 9.99999974E-6 : f32
    %232 = vector.broadcast %cst_76 : f32 to vector<32x1xf32>
    %233 = arith.addf %229, %232 : vector<32x1xf32>
    %234 = math.rsqrt %233 : vector<32x1xf32>
    %235 = vector.broadcast %234 : vector<32x1xf32> to vector<32x32xf32>
    %236 = arith.mulf %231, %235 : vector<32x32xf32>
    %237 = vector.broadcast %217 : vector<1x32xf32> to vector<32x32xf32>
    %238 = arith.mulf %236, %237 : vector<32x32xf32>
    %239 = vector.broadcast %218 : vector<1x32xf32> to vector<32x32xf32>
    %240 = arith.addf %238, %239 : vector<32x32xf32>
    %241 = arith.truncf %240 : vector<32x32xf32> to vector<32x32xbf16>
    %c272 = arith.constant 272 : index
    %c0_77 = arith.constant 0 : index
    %242 = vector.load %arg2[%c272, %c0_77] : memref<816x128xbf16, #tpu.memory_space<vmem>>, vector<32x32xbf16>
    %cst_78 = arith.constant dense<0.000000e+00> : vector<32x32xf32>
    %243 = tpu.matmul %241, %242, %cst_78 {dimension_numbers = #tpu.dot_dimension_numbers<[1], [0], [0], [1], [0, 0, 1, 1], [], []>} : vector<32x32xbf16>, vector<32x32xbf16>, vector<32x32xf32> -> vector<32x32xf32>
    %c128 = arith.constant 128 : index
    %c0_79 = arith.constant 0 : index
    %244 = vector.load %arg3[%c128, %c0_79] : memref<152x128xf32, #tpu.memory_space<vmem>>, vector<1x32xf32>
    %245 = vector.broadcast %244 : vector<1x32xf32> to vector<32x32xf32>
    %246 = arith.addf %243, %245 : vector<32x32xf32>
    %247 = arith.truncf %246 : vector<32x32xf32> to vector<32x32xbf16>
    %c124 = arith.constant 124 : index
    %c0_80 = arith.constant 0 : index
    %248 = vector.load %arg3[%c124, %c0_80] : memref<152x128xf32, #tpu.memory_space<vmem>>, vector<1x32xf32>
    %c125 = arith.constant 125 : index
    %c0_81 = arith.constant 0 : index
    %249 = vector.load %arg3[%c125, %c0_81] : memref<152x128xf32, #tpu.memory_space<vmem>>, vector<1x32xf32>
    %cst_82 = arith.constant dense<0.000000e+00> : vector<48xf32>
    %250 = vector.multi_reduction <add>, %215, %cst_82 [1] : vector<48x32xf32> to vector<48xf32>
    %251 = vector.shape_cast %250 : vector<48xf32> to vector<48x1xf32>
    %cst_83 = arith.constant 3.200000e+01 : f32
    %252 = vector.broadcast %cst_83 : f32 to vector<48x1xf32>
    %253 = arith.divf %251, %252 : vector<48x1xf32>
    %254 = vector.broadcast %253 : vector<48x1xf32> to vector<48x32xf32>
    %255 = arith.subf %215, %254 : vector<48x32xf32>
    %256 = arith.mulf %255, %255 : vector<48x32xf32>
    %cst_84 = arith.constant dense<0.000000e+00> : vector<48xf32>
    %257 = vector.multi_reduction <add>, %256, %cst_84 [1] : vector<48x32xf32> to vector<48xf32>
    %258 = vector.shape_cast %257 : vector<48xf32> to vector<48x1xf32>
    %cst_85 = arith.constant 3.200000e+01 : f32
    %259 = vector.broadcast %cst_85 : f32 to vector<48x1xf32>
    %260 = arith.divf %258, %259 : vector<48x1xf32>
    %261 = vector.broadcast %253 : vector<48x1xf32> to vector<48x32xf32>
    %262 = arith.subf %215, %261 : vector<48x32xf32>
    %cst_86 = arith.constant 9.99999974E-6 : f32
    %263 = vector.broadcast %cst_86 : f32 to vector<48x1xf32>
    %264 = arith.addf %260, %263 : vector<48x1xf32>
    %265 = math.rsqrt %264 : vector<48x1xf32>
    %266 = vector.broadcast %265 : vector<48x1xf32> to vector<48x32xf32>
    %267 = arith.mulf %262, %266 : vector<48x32xf32>
    %268 = vector.broadcast %248 : vector<1x32xf32> to vector<48x32xf32>
    %269 = arith.mulf %267, %268 : vector<48x32xf32>
    %270 = vector.broadcast %249 : vector<1x32xf32> to vector<48x32xf32>
    %271 = arith.addf %269, %270 : vector<48x32xf32>
    %272 = arith.truncf %271 : vector<48x32xf32> to vector<48x32xbf16>
    %c304 = arith.constant 304 : index
    %c0_87 = arith.constant 0 : index
    %273 = vector.load %arg2[%c304, %c0_87] : memref<816x128xbf16, #tpu.memory_space<vmem>>, vector<32x64xbf16>
    %cst_88 = arith.constant dense<0.000000e+00> : vector<48x64xf32>
    %274 = tpu.matmul %272, %273, %cst_88 {dimension_numbers = #tpu.dot_dimension_numbers<[1], [0], [0], [1], [0, 0, 1, 1], [], []>} : vector<48x32xbf16>, vector<32x64xbf16>, vector<48x64xf32> -> vector<48x64xf32>
    %c129 = arith.constant 129 : index
    %c0_89 = arith.constant 0 : index
    %275 = vector.load %arg3[%c129, %c0_89] : memref<152x128xf32, #tpu.memory_space<vmem>>, vector<1x64xf32>
    %276 = vector.broadcast %275 : vector<1x64xf32> to vector<48x64xf32>
    %277 = arith.addf %274, %276 : vector<48x64xf32>
    %278 = arith.truncf %277 : vector<48x64xf32> to vector<48x64xbf16>
    %279 = tpu.iota {dimensions = array<i32: 0>} : vector<32x48xi32>
    %280 = tpu.iota {dimensions = array<i32: 1>} : vector<32x48xi32>
    %c16_i32 = arith.constant 16 : i32
    %281 = vector.broadcast %c16_i32 : i32 to vector<32x48xi32>
    %282 = arith.cmpi sge, %279, %281 : vector<32x48xi32>
    %c24_i32_90 = arith.constant 24 : i32
    %283 = vector.broadcast %c24_i32_90 : i32 to vector<32x48xi32>
    %284 = arith.cmpi sge, %280, %283 : vector<32x48xi32>
    %c24_i32_91 = arith.constant 24 : i32
    %c0_i32_92 = arith.constant 0 : i32
    %285 = vector.broadcast %c24_i32_91 : i32 to vector<32x48xi32>
    %286 = vector.broadcast %c0_i32_92 : i32 to vector<32x48xi32>
    %287 = arith.select %284, %285, %286 : vector<32x48xi1>, vector<32x48xi32>
    %288 = arith.subi %280, %287 : vector<32x48xi32>
    %289 = arith.xori %282, %284 : vector<32x48xi1>
    %cst_93 = arith.constant dense<true> : vector<32x48xi1>
    %290 = arith.xori %289, %cst_93 : vector<32x48xi1>
    %c17_i32_94 = arith.constant 17 : i32
    %291 = vector.broadcast %c17_i32_94 : i32 to vector<32x48xi32>
    %292 = arith.cmpi slt, %288, %291 : vector<32x48xi32>
    %293 = arith.andi %290, %292 : vector<32x48xi1>
    %cst_95 = arith.constant 0.000000e+00 : f32
    %cst_96 = arith.constant -1.000000e+30 : f32
    %294 = vector.broadcast %cst_95 : f32 to vector<32x48xf32>
    %295 = vector.broadcast %cst_96 : f32 to vector<32x48xf32>
    %296 = arith.select %293, %294, %295 : vector<32x48xi1>, vector<32x48xf32>
    %297 = vector.extract_strided_slice %278 {offsets = [0, 0], sizes = [48, 32], strides = [1, 1]} : vector<48x64xbf16> to vector<48x32xbf16>
    %298 = vector.extract_strided_slice %278 {offsets = [0, 32], sizes = [48, 32], strides = [1, 1]} : vector<48x64xbf16> to vector<48x32xbf16>
    %299 = vector.extract_strided_slice %247 {offsets = [0, 0], sizes = [32, 8], strides = [1, 1]} : vector<32x32xbf16> to vector<32x8xbf16>
    %300 = vector.extract_strided_slice %297 {offsets = [0, 0], sizes = [48, 8], strides = [1, 1]} : vector<48x32xbf16> to vector<48x8xbf16>
    %cst_97 = arith.constant dense<0.000000e+00> : vector<32x48xf32>
    %301 = tpu.matmul %299, %300, %cst_97 {dimension_numbers = #tpu.dot_dimension_numbers<[1], [1], [0], [0], [0, 0, 1, 0], [], []>} : vector<32x8xbf16>, vector<48x8xbf16>, vector<32x48xf32> -> vector<32x48xf32>
    %cst_98 = arith.constant 0.353553385 : f32
    %302 = vector.broadcast %cst_98 : f32 to vector<32x48xf32>
    %303 = arith.mulf %301, %302 : vector<32x48xf32>
    %304 = arith.addf %303, %296 : vector<32x48xf32>
    %cst_99 = arith.constant dense<0xFF800000> : vector<32xf32>
    %305 = vector.multi_reduction <maximumf>, %304, %cst_99 [1] : vector<32x48xf32> to vector<32xf32>
    %306 = vector.shape_cast %305 : vector<32xf32> to vector<32x1xf32>
    %307 = vector.broadcast %306 : vector<32x1xf32> to vector<32x48xf32>
    %308 = arith.subf %304, %307 : vector<32x48xf32>
    %309 = math.exp %308 : vector<32x48xf32>
    %cst_100 = arith.constant dense<0.000000e+00> : vector<32xf32>
    %310 = vector.multi_reduction <add>, %309, %cst_100 [1] : vector<32x48xf32> to vector<32xf32>
    %311 = vector.shape_cast %310 : vector<32xf32> to vector<32x1xf32>
    %312 = arith.truncf %309 : vector<32x48xf32> to vector<32x48xbf16>
    %313 = vector.extract_strided_slice %298 {offsets = [0, 0], sizes = [48, 8], strides = [1, 1]} : vector<48x32xbf16> to vector<48x8xbf16>
    %cst_101 = arith.constant dense<0.000000e+00> : vector<32x8xf32>
    %314 = tpu.matmul %312, %313, %cst_101 {dimension_numbers = #tpu.dot_dimension_numbers<[1], [0], [0], [1], [0, 0, 1, 1], [], []>} : vector<32x48xbf16>, vector<48x8xbf16>, vector<32x8xf32> -> vector<32x8xf32>
    %315 = tpu.reciprocal %311 {approx = true} : vector<32x1xf32> -> vector<32x1xf32>
    %316 = vector.broadcast %315 : vector<32x1xf32> to vector<32x8xf32>
    %317 = arith.mulf %314, %316 : vector<32x8xf32>
    %318 = vector.extract_strided_slice %247 {offsets = [0, 8], sizes = [32, 8], strides = [1, 1]} : vector<32x32xbf16> to vector<32x8xbf16>
    %319 = vector.extract_strided_slice %297 {offsets = [0, 8], sizes = [48, 8], strides = [1, 1]} : vector<48x32xbf16> to vector<48x8xbf16>
    %cst_102 = arith.constant dense<0.000000e+00> : vector<32x48xf32>
    %320 = tpu.matmul %318, %319, %cst_102 {dimension_numbers = #tpu.dot_dimension_numbers<[1], [1], [0], [0], [0, 0, 1, 0], [], []>} : vector<32x8xbf16>, vector<48x8xbf16>, vector<32x48xf32> -> vector<32x48xf32>
    %cst_103 = arith.constant 0.353553385 : f32
    %321 = vector.broadcast %cst_103 : f32 to vector<32x48xf32>
    %322 = arith.mulf %320, %321 : vector<32x48xf32>
    %323 = arith.addf %322, %296 : vector<32x48xf32>
    %cst_104 = arith.constant dense<0xFF800000> : vector<32xf32>
    %324 = vector.multi_reduction <maximumf>, %323, %cst_104 [1] : vector<32x48xf32> to vector<32xf32>
    %325 = vector.shape_cast %324 : vector<32xf32> to vector<32x1xf32>
    %326 = vector.broadcast %325 : vector<32x1xf32> to vector<32x48xf32>
    %327 = arith.subf %323, %326 : vector<32x48xf32>
    %328 = math.exp %327 : vector<32x48xf32>
    %cst_105 = arith.constant dense<0.000000e+00> : vector<32xf32>
    %329 = vector.multi_reduction <add>, %328, %cst_105 [1] : vector<32x48xf32> to vector<32xf32>
    %330 = vector.shape_cast %329 : vector<32xf32> to vector<32x1xf32>
    %331 = arith.truncf %328 : vector<32x48xf32> to vector<32x48xbf16>
    %332 = vector.extract_strided_slice %298 {offsets = [0, 8], sizes = [48, 8], strides = [1, 1]} : vector<48x32xbf16> to vector<48x8xbf16>
    %cst_106 = arith.constant dense<0.000000e+00> : vector<32x8xf32>
    %333 = tpu.matmul %331, %332, %cst_106 {dimension_numbers = #tpu.dot_dimension_numbers<[1], [0], [0], [1], [0, 0, 1, 1], [], []>} : vector<32x48xbf16>, vector<48x8xbf16>, vector<32x8xf32> -> vector<32x8xf32>
    %334 = tpu.reciprocal %330 {approx = true} : vector<32x1xf32> -> vector<32x1xf32>
    %335 = vector.broadcast %334 : vector<32x1xf32> to vector<32x8xf32>
    %336 = arith.mulf %333, %335 : vector<32x8xf32>
    %337 = vector.extract_strided_slice %247 {offsets = [0, 16], sizes = [32, 8], strides = [1, 1]} : vector<32x32xbf16> to vector<32x8xbf16>
    %338 = vector.extract_strided_slice %297 {offsets = [0, 16], sizes = [48, 8], strides = [1, 1]} : vector<48x32xbf16> to vector<48x8xbf16>
    %cst_107 = arith.constant dense<0.000000e+00> : vector<32x48xf32>
    %339 = tpu.matmul %337, %338, %cst_107 {dimension_numbers = #tpu.dot_dimension_numbers<[1], [1], [0], [0], [0, 0, 1, 0], [], []>} : vector<32x8xbf16>, vector<48x8xbf16>, vector<32x48xf32> -> vector<32x48xf32>
    %cst_108 = arith.constant 0.353553385 : f32
    %340 = vector.broadcast %cst_108 : f32 to vector<32x48xf32>
    %341 = arith.mulf %339, %340 : vector<32x48xf32>
    %342 = arith.addf %341, %296 : vector<32x48xf32>
    %cst_109 = arith.constant dense<0xFF800000> : vector<32xf32>
    %343 = vector.multi_reduction <maximumf>, %342, %cst_109 [1] : vector<32x48xf32> to vector<32xf32>
    %344 = vector.shape_cast %343 : vector<32xf32> to vector<32x1xf32>
    %345 = vector.broadcast %344 : vector<32x1xf32> to vector<32x48xf32>
    %346 = arith.subf %342, %345 : vector<32x48xf32>
    %347 = math.exp %346 : vector<32x48xf32>
    %cst_110 = arith.constant dense<0.000000e+00> : vector<32xf32>
    %348 = vector.multi_reduction <add>, %347, %cst_110 [1] : vector<32x48xf32> to vector<32xf32>
    %349 = vector.shape_cast %348 : vector<32xf32> to vector<32x1xf32>
    %350 = arith.truncf %347 : vector<32x48xf32> to vector<32x48xbf16>
    %351 = vector.extract_strided_slice %298 {offsets = [0, 16], sizes = [48, 8], strides = [1, 1]} : vector<48x32xbf16> to vector<48x8xbf16>
    %cst_111 = arith.constant dense<0.000000e+00> : vector<32x8xf32>
    %352 = tpu.matmul %350, %351, %cst_111 {dimension_numbers = #tpu.dot_dimension_numbers<[1], [0], [0], [1], [0, 0, 1, 1], [], []>} : vector<32x48xbf16>, vector<48x8xbf16>, vector<32x8xf32> -> vector<32x8xf32>
    %353 = tpu.reciprocal %349 {approx = true} : vector<32x1xf32> -> vector<32x1xf32>
    %354 = vector.broadcast %353 : vector<32x1xf32> to vector<32x8xf32>
    %355 = arith.mulf %352, %354 : vector<32x8xf32>
    %356 = vector.extract_strided_slice %247 {offsets = [0, 24], sizes = [32, 8], strides = [1, 1]} : vector<32x32xbf16> to vector<32x8xbf16>
    %357 = vector.extract_strided_slice %297 {offsets = [0, 24], sizes = [48, 8], strides = [1, 1]} : vector<48x32xbf16> to vector<48x8xbf16>
    %cst_112 = arith.constant dense<0.000000e+00> : vector<32x48xf32>
    %358 = tpu.matmul %356, %357, %cst_112 {dimension_numbers = #tpu.dot_dimension_numbers<[1], [1], [0], [0], [0, 0, 1, 0], [], []>} : vector<32x8xbf16>, vector<48x8xbf16>, vector<32x48xf32> -> vector<32x48xf32>
    %cst_113 = arith.constant 0.353553385 : f32
    %359 = vector.broadcast %cst_113 : f32 to vector<32x48xf32>
    %360 = arith.mulf %358, %359 : vector<32x48xf32>
    %361 = arith.addf %360, %296 : vector<32x48xf32>
    %cst_114 = arith.constant dense<0xFF800000> : vector<32xf32>
    %362 = vector.multi_reduction <maximumf>, %361, %cst_114 [1] : vector<32x48xf32> to vector<32xf32>
    %363 = vector.shape_cast %362 : vector<32xf32> to vector<32x1xf32>
    %364 = vector.broadcast %363 : vector<32x1xf32> to vector<32x48xf32>
    %365 = arith.subf %361, %364 : vector<32x48xf32>
    %366 = math.exp %365 : vector<32x48xf32>
    %cst_115 = arith.constant dense<0.000000e+00> : vector<32xf32>
    %367 = vector.multi_reduction <add>, %366, %cst_115 [1] : vector<32x48xf32> to vector<32xf32>
    %368 = vector.shape_cast %367 : vector<32xf32> to vector<32x1xf32>
    %369 = arith.truncf %366 : vector<32x48xf32> to vector<32x48xbf16>
    %370 = vector.extract_strided_slice %298 {offsets = [0, 24], sizes = [48, 8], strides = [1, 1]} : vector<48x32xbf16> to vector<48x8xbf16>
    %cst_116 = arith.constant dense<0.000000e+00> : vector<32x8xf32>
    %371 = tpu.matmul %369, %370, %cst_116 {dimension_numbers = #tpu.dot_dimension_numbers<[1], [0], [0], [1], [0, 0, 1, 1], [], []>} : vector<32x48xbf16>, vector<48x8xbf16>, vector<32x8xf32> -> vector<32x8xf32>
    %372 = tpu.reciprocal %368 {approx = true} : vector<32x1xf32> -> vector<32x1xf32>
    %373 = vector.broadcast %372 : vector<32x1xf32> to vector<32x8xf32>
    %374 = arith.mulf %371, %373 : vector<32x8xf32>
    %375 = tpu.concatenate %317, %336, %355, %374 in 1 : vector<32x8xf32>, vector<32x8xf32>, vector<32x8xf32>, vector<32x8xf32> -> vector<32x32xf32>
    %376 = arith.truncf %375 : vector<32x32xf32> to vector<32x32xbf16>
    %c336 = arith.constant 336 : index
    %c0_117 = arith.constant 0 : index
    %377 = vector.load %arg2[%c336, %c0_117] : memref<816x128xbf16, #tpu.memory_space<vmem>>, vector<32x32xbf16>
    %cst_118 = arith.constant dense<0.000000e+00> : vector<32x32xf32>
    %378 = tpu.matmul %376, %377, %cst_118 {dimension_numbers = #tpu.dot_dimension_numbers<[1], [0], [0], [1], [0, 0, 1, 1], [], []>} : vector<32x32xbf16>, vector<32x32xbf16>, vector<32x32xf32> -> vector<32x32xf32>
    %379 = arith.addf %216, %378 : vector<32x32xf32>
    %c130 = arith.constant 130 : index
    %c0_119 = arith.constant 0 : index
    %380 = vector.load %arg3[%c130, %c0_119] : memref<152x128xf32, #tpu.memory_space<vmem>>, vector<1x32xf32>
    %381 = vector.broadcast %380 : vector<1x32xf32> to vector<32x32xf32>
    %382 = arith.addf %379, %381 : vector<32x32xf32>
    %c126 = arith.constant 126 : index
    %c0_120 = arith.constant 0 : index
    %383 = vector.load %arg3[%c126, %c0_120] : memref<152x128xf32, #tpu.memory_space<vmem>>, vector<1x32xf32>
    %c127 = arith.constant 127 : index
    %c0_121 = arith.constant 0 : index
    %384 = vector.load %arg3[%c127, %c0_121] : memref<152x128xf32, #tpu.memory_space<vmem>>, vector<1x32xf32>
    %cst_122 = arith.constant dense<0.000000e+00> : vector<32xf32>
    %385 = vector.multi_reduction <add>, %382, %cst_122 [1] : vector<32x32xf32> to vector<32xf32>
    %386 = vector.shape_cast %385 : vector<32xf32> to vector<32x1xf32>
    %cst_123 = arith.constant 3.200000e+01 : f32
    %387 = vector.broadcast %cst_123 : f32 to vector<32x1xf32>
    %388 = arith.divf %386, %387 : vector<32x1xf32>
    %389 = vector.broadcast %388 : vector<32x1xf32> to vector<32x32xf32>
    %390 = arith.subf %382, %389 : vector<32x32xf32>
    %391 = arith.mulf %390, %390 : vector<32x32xf32>
    %cst_124 = arith.constant dense<0.000000e+00> : vector<32xf32>
    %392 = vector.multi_reduction <add>, %391, %cst_124 [1] : vector<32x32xf32> to vector<32xf32>
    %393 = vector.shape_cast %392 : vector<32xf32> to vector<32x1xf32>
    %cst_125 = arith.constant 3.200000e+01 : f32
    %394 = vector.broadcast %cst_125 : f32 to vector<32x1xf32>
    %395 = arith.divf %393, %394 : vector<32x1xf32>
    %396 = vector.broadcast %388 : vector<32x1xf32> to vector<32x32xf32>
    %397 = arith.subf %382, %396 : vector<32x32xf32>
    %cst_126 = arith.constant 9.99999974E-6 : f32
    %398 = vector.broadcast %cst_126 : f32 to vector<32x1xf32>
    %399 = arith.addf %395, %398 : vector<32x1xf32>
    %400 = math.rsqrt %399 : vector<32x1xf32>
    %401 = vector.broadcast %400 : vector<32x1xf32> to vector<32x32xf32>
    %402 = arith.mulf %397, %401 : vector<32x32xf32>
    %403 = vector.broadcast %383 : vector<1x32xf32> to vector<32x32xf32>
    %404 = arith.mulf %402, %403 : vector<32x32xf32>
    %405 = vector.broadcast %384 : vector<1x32xf32> to vector<32x32xf32>
    %406 = arith.addf %404, %405 : vector<32x32xf32>
    %407 = arith.truncf %406 : vector<32x32xf32> to vector<32x32xbf16>
    %c368 = arith.constant 368 : index
    %c0_127 = arith.constant 0 : index
    %408 = vector.load %arg2[%c368, %c0_127] : memref<816x128xbf16, #tpu.memory_space<vmem>>, vector<32x128xbf16>
    %cst_128 = arith.constant dense<0.000000e+00> : vector<32x128xf32>
    %409 = tpu.matmul %407, %408, %cst_128 {dimension_numbers = #tpu.dot_dimension_numbers<[1], [0], [0], [1], [0, 0, 1, 1], [], []>} : vector<32x32xbf16>, vector<32x128xbf16>, vector<32x128xf32> -> vector<32x128xf32>
    %c131 = arith.constant 131 : index
    %c0_129 = arith.constant 0 : index
    %410 = vector.load %arg3[%c131, %c0_129] : memref<152x128xf32, #tpu.memory_space<vmem>>, vector<1x128xf32>
    %411 = vector.broadcast %410 : vector<1x128xf32> to vector<32x128xf32>
    %412 = arith.addf %409, %411 : vector<32x128xf32>
    %413 = arith.mulf %412, %412 : vector<32x128xf32>
    %414 = arith.mulf %412, %413 : vector<32x128xf32>
    %cst_130 = arith.constant 4.471500e-02 : f32
    %415 = vector.broadcast %cst_130 : f32 to vector<32x128xf32>
    %416 = arith.mulf %415, %414 : vector<32x128xf32>
    %417 = arith.addf %412, %416 : vector<32x128xf32>
    %cst_131 = arith.constant 0.797884583 : f32
    %418 = vector.broadcast %cst_131 : f32 to vector<32x128xf32>
    %419 = arith.mulf %418, %417 : vector<32x128xf32>
    %420 = math.tanh %419 : vector<32x128xf32>
    %cst_132 = arith.constant 1.000000e+00 : f32
    %421 = vector.broadcast %cst_132 : f32 to vector<32x128xf32>
    %422 = arith.addf %421, %420 : vector<32x128xf32>
    %cst_133 = arith.constant 5.000000e-01 : f32
    %423 = vector.broadcast %cst_133 : f32 to vector<32x128xf32>
    %424 = arith.mulf %423, %422 : vector<32x128xf32>
    %425 = arith.mulf %412, %424 : vector<32x128xf32>
    %426 = arith.truncf %425 : vector<32x128xf32> to vector<32x128xbf16>
    %c400 = arith.constant 400 : index
    %c0_134 = arith.constant 0 : index
    %427 = vector.load %arg2[%c400, %c0_134] : memref<816x128xbf16, #tpu.memory_space<vmem>>, vector<128x32xbf16>
    %cst_135 = arith.constant dense<0.000000e+00> : vector<32x32xf32>
    %428 = tpu.matmul %426, %427, %cst_135 {dimension_numbers = #tpu.dot_dimension_numbers<[1], [0], [0], [1], [0, 0, 1, 1], [], []>} : vector<32x128xbf16>, vector<128x32xbf16>, vector<32x32xf32> -> vector<32x32xf32>
    %429 = arith.addf %382, %428 : vector<32x32xf32>
    %c132 = arith.constant 132 : index
    %c0_136 = arith.constant 0 : index
    %430 = vector.load %arg3[%c132, %c0_136] : memref<152x128xf32, #tpu.memory_space<vmem>>, vector<1x32xf32>
    %431 = vector.broadcast %430 : vector<1x32xf32> to vector<32x32xf32>
    %432 = arith.addf %429, %431 : vector<32x32xf32>
    %433 = arith.truncf %432 : vector<32x32xf32> to vector<32x32xbf16>
    %c528 = arith.constant 528 : index
    %c0_137 = arith.constant 0 : index
    %434 = vector.load %arg2[%c528, %c0_137] : memref<816x128xbf16, #tpu.memory_space<vmem>>, vector<32x32xbf16>
    %cst_138 = arith.constant dense<0.000000e+00> : vector<32x32xf32>
    %435 = tpu.matmul %433, %434, %cst_138 {dimension_numbers = #tpu.dot_dimension_numbers<[1], [0], [0], [1], [0, 0, 1, 1], [], []>} : vector<32x32xbf16>, vector<32x32xbf16>, vector<32x32xf32> -> vector<32x32xf32>
    %c133 = arith.constant 133 : index
    %c0_139 = arith.constant 0 : index
    %436 = vector.load %arg3[%c133, %c0_139] : memref<152x128xf32, #tpu.memory_space<vmem>>, vector<1x32xf32>
    %437 = vector.broadcast %436 : vector<1x32xf32> to vector<32x32xf32>
    %438 = arith.addf %435, %437 : vector<32x32xf32>
    %439 = tpu.iota {dimensions = array<i32: 0>} : vector<32x32xi32>
    %c16_i32_140 = arith.constant 16 : i32
    %440 = vector.broadcast %c16_i32_140 : i32 to vector<32x32xi32>
    %441 = arith.cmpi sge, %439, %440 : vector<32x32xi32>
    %c16_i32_141 = arith.constant 16 : i32
    %c0_i32_142 = arith.constant 0 : i32
    %442 = vector.broadcast %c16_i32_141 : i32 to vector<32x32xi32>
    %443 = vector.broadcast %c0_i32_142 : i32 to vector<32x32xi32>
    %444 = arith.select %441, %442, %443 : vector<32x32xi1>, vector<32x32xi32>
    %445 = arith.subi %439, %444 : vector<32x32xi32>
    %c8_i32 = arith.constant 8 : i32
    %446 = vector.broadcast %c8_i32 : i32 to vector<32x32xi32>
    %447 = arith.cmpi sge, %445, %446 : vector<32x32xi32>
    %c0_143 = arith.constant 0 : index
    %c0_144 = arith.constant 0 : index
    %448 = vector.load %arg1[%c0_143, %c0_144] : memref<32x32xf32, #tpu.memory_space<vmem>>, vector<32x32xf32>
    %449 = arith.select %447, %448, %438 : vector<32x32xi1>, vector<32x32xf32>
    %c80_145 = arith.constant 80 : index
    %c0_146 = arith.constant 0 : index
    %450 = vector.load %arg3[%c80_145, %c0_146] : memref<152x128xf32, #tpu.memory_space<vmem>>, vector<32x32xf32>
    %451 = arith.addf %449, %450 : vector<32x32xf32>
    %452 = tpu.iota {dimensions = array<i32: 0>} : vector<32x32xi32>
    %453 = tpu.iota {dimensions = array<i32: 1>} : vector<32x32xi32>
    %c16_i32_147 = arith.constant 16 : i32
    %454 = vector.broadcast %c16_i32_147 : i32 to vector<32x32xi32>
    %455 = arith.cmpi sge, %452, %454 : vector<32x32xi32>
    %c16_i32_148 = arith.constant 16 : i32
    %456 = vector.broadcast %c16_i32_148 : i32 to vector<32x32xi32>
    %457 = arith.cmpi sge, %453, %456 : vector<32x32xi32>
    %c16_i32_149 = arith.constant 16 : i32
    %c0_i32_150 = arith.constant 0 : i32
    %458 = vector.broadcast %c16_i32_149 : i32 to vector<32x32xi32>
    %459 = vector.broadcast %c0_i32_150 : i32 to vector<32x32xi32>
    %460 = arith.select %457, %458, %459 : vector<32x32xi1>, vector<32x32xi32>
    %461 = arith.subi %453, %460 : vector<32x32xi32>
    %462 = arith.xori %455, %457 : vector<32x32xi1>
    %cst_151 = arith.constant dense<true> : vector<32x32xi1>
    %463 = arith.xori %462, %cst_151 : vector<32x32xi1>
    %c16_i32_152 = arith.constant 16 : i32
    %c0_i32_153 = arith.constant 0 : i32
    %464 = vector.broadcast %c16_i32_152 : i32 to vector<32x32xi32>
    %465 = vector.broadcast %c0_i32_153 : i32 to vector<32x32xi32>
    %466 = arith.select %455, %464, %465 : vector<32x32xi1>, vector<32x32xi32>
    %467 = arith.subi %452, %466 : vector<32x32xi32>
    %468 = arith.cmpi sle, %461, %467 : vector<32x32xi32>
    %469 = arith.andi %463, %468 : vector<32x32xi1>
    %cst_154 = arith.constant 0.000000e+00 : f32
    %cst_155 = arith.constant -1.000000e+30 : f32
    %470 = vector.broadcast %cst_154 : f32 to vector<32x32xf32>
    %471 = vector.broadcast %cst_155 : f32 to vector<32x32xf32>
    %472 = arith.select %469, %470, %471 : vector<32x32xi1>, vector<32x32xf32>
    %c134 = arith.constant 134 : index
    %c0_156 = arith.constant 0 : index
    %473 = vector.load %arg3[%c134, %c0_156] : memref<152x128xf32, #tpu.memory_space<vmem>>, vector<1x32xf32>
    %c135 = arith.constant 135 : index
    %c0_157 = arith.constant 0 : index
    %474 = vector.load %arg3[%c135, %c0_157] : memref<152x128xf32, #tpu.memory_space<vmem>>, vector<1x32xf32>
    %cst_158 = arith.constant dense<0.000000e+00> : vector<32xf32>
    %475 = vector.multi_reduction <add>, %451, %cst_158 [1] : vector<32x32xf32> to vector<32xf32>
    %476 = vector.shape_cast %475 : vector<32xf32> to vector<32x1xf32>
    %cst_159 = arith.constant 3.200000e+01 : f32
    %477 = vector.broadcast %cst_159 : f32 to vector<32x1xf32>
    %478 = arith.divf %476, %477 : vector<32x1xf32>
    %479 = vector.broadcast %478 : vector<32x1xf32> to vector<32x32xf32>
    %480 = arith.subf %451, %479 : vector<32x32xf32>
    %481 = arith.mulf %480, %480 : vector<32x32xf32>
    %cst_160 = arith.constant dense<0.000000e+00> : vector<32xf32>
    %482 = vector.multi_reduction <add>, %481, %cst_160 [1] : vector<32x32xf32> to vector<32xf32>
    %483 = vector.shape_cast %482 : vector<32xf32> to vector<32x1xf32>
    %cst_161 = arith.constant 3.200000e+01 : f32
    %484 = vector.broadcast %cst_161 : f32 to vector<32x1xf32>
    %485 = arith.divf %483, %484 : vector<32x1xf32>
    %486 = vector.broadcast %478 : vector<32x1xf32> to vector<32x32xf32>
    %487 = arith.subf %451, %486 : vector<32x32xf32>
    %cst_162 = arith.constant 9.99999974E-6 : f32
    %488 = vector.broadcast %cst_162 : f32 to vector<32x1xf32>
    %489 = arith.addf %485, %488 : vector<32x1xf32>
    %490 = math.rsqrt %489 : vector<32x1xf32>
    %491 = vector.broadcast %490 : vector<32x1xf32> to vector<32x32xf32>
    %492 = arith.mulf %487, %491 : vector<32x32xf32>
    %493 = vector.broadcast %473 : vector<1x32xf32> to vector<32x32xf32>
    %494 = arith.mulf %492, %493 : vector<32x32xf32>
    %495 = vector.broadcast %474 : vector<1x32xf32> to vector<32x32xf32>
    %496 = arith.addf %494, %495 : vector<32x32xf32>
    %497 = arith.truncf %496 : vector<32x32xf32> to vector<32x32xbf16>
    %c560 = arith.constant 560 : index
    %c0_163 = arith.constant 0 : index
    %498 = vector.load %arg2[%c560, %c0_163] : memref<816x128xbf16, #tpu.memory_space<vmem>>, vector<32x96xbf16>
    %cst_164 = arith.constant dense<0.000000e+00> : vector<32x96xf32>
    %499 = tpu.matmul %497, %498, %cst_164 {dimension_numbers = #tpu.dot_dimension_numbers<[1], [0], [0], [1], [0, 0, 1, 1], [], []>} : vector<32x32xbf16>, vector<32x96xbf16>, vector<32x96xf32> -> vector<32x96xf32>
    %c138 = arith.constant 138 : index
    %c0_165 = arith.constant 0 : index
    %500 = vector.load %arg3[%c138, %c0_165] : memref<152x128xf32, #tpu.memory_space<vmem>>, vector<1x96xf32>
    %501 = vector.broadcast %500 : vector<1x96xf32> to vector<32x96xf32>
    %502 = arith.addf %499, %501 : vector<32x96xf32>
    %503 = arith.truncf %502 : vector<32x96xf32> to vector<32x96xbf16>
    %504 = vector.extract_strided_slice %503 {offsets = [0, 0], sizes = [32, 32], strides = [1, 1]} : vector<32x96xbf16> to vector<32x32xbf16>
    %505 = vector.extract_strided_slice %503 {offsets = [0, 32], sizes = [32, 32], strides = [1, 1]} : vector<32x96xbf16> to vector<32x32xbf16>
    %506 = vector.extract_strided_slice %503 {offsets = [0, 64], sizes = [32, 32], strides = [1, 1]} : vector<32x96xbf16> to vector<32x32xbf16>
    %507 = vector.extract_strided_slice %504 {offsets = [0, 0], sizes = [32, 8], strides = [1, 1]} : vector<32x32xbf16> to vector<32x8xbf16>
    %508 = vector.extract_strided_slice %505 {offsets = [0, 0], sizes = [32, 8], strides = [1, 1]} : vector<32x32xbf16> to vector<32x8xbf16>
    %cst_166 = arith.constant dense<0.000000e+00> : vector<32x32xf32>
    %509 = tpu.matmul %507, %508, %cst_166 {dimension_numbers = #tpu.dot_dimension_numbers<[1], [1], [0], [0], [0, 0, 1, 0], [], []>} : vector<32x8xbf16>, vector<32x8xbf16>, vector<32x32xf32> -> vector<32x32xf32>
    %cst_167 = arith.constant 0.353553385 : f32
    %510 = vector.broadcast %cst_167 : f32 to vector<32x32xf32>
    %511 = arith.mulf %509, %510 : vector<32x32xf32>
    %512 = arith.addf %511, %472 : vector<32x32xf32>
    %cst_168 = arith.constant dense<0xFF800000> : vector<32xf32>
    %513 = vector.multi_reduction <maximumf>, %512, %cst_168 [1] : vector<32x32xf32> to vector<32xf32>
    %514 = vector.shape_cast %513 : vector<32xf32> to vector<32x1xf32>
    %515 = vector.broadcast %514 : vector<32x1xf32> to vector<32x32xf32>
    %516 = arith.subf %512, %515 : vector<32x32xf32>
    %517 = math.exp %516 : vector<32x32xf32>
    %cst_169 = arith.constant dense<0.000000e+00> : vector<32xf32>
    %518 = vector.multi_reduction <add>, %517, %cst_169 [1] : vector<32x32xf32> to vector<32xf32>
    %519 = vector.shape_cast %518 : vector<32xf32> to vector<32x1xf32>
    %520 = arith.truncf %517 : vector<32x32xf32> to vector<32x32xbf16>
    %521 = vector.extract_strided_slice %506 {offsets = [0, 0], sizes = [32, 8], strides = [1, 1]} : vector<32x32xbf16> to vector<32x8xbf16>
    %cst_170 = arith.constant dense<0.000000e+00> : vector<32x8xf32>
    %522 = tpu.matmul %520, %521, %cst_170 {dimension_numbers = #tpu.dot_dimension_numbers<[1], [0], [0], [1], [0, 0, 1, 1], [], []>} : vector<32x32xbf16>, vector<32x8xbf16>, vector<32x8xf32> -> vector<32x8xf32>
    %523 = tpu.reciprocal %519 {approx = true} : vector<32x1xf32> -> vector<32x1xf32>
    %524 = vector.broadcast %523 : vector<32x1xf32> to vector<32x8xf32>
    %525 = arith.mulf %522, %524 : vector<32x8xf32>
    %526 = vector.extract_strided_slice %504 {offsets = [0, 8], sizes = [32, 8], strides = [1, 1]} : vector<32x32xbf16> to vector<32x8xbf16>
    %527 = vector.extract_strided_slice %505 {offsets = [0, 8], sizes = [32, 8], strides = [1, 1]} : vector<32x32xbf16> to vector<32x8xbf16>
    %cst_171 = arith.constant dense<0.000000e+00> : vector<32x32xf32>
    %528 = tpu.matmul %526, %527, %cst_171 {dimension_numbers = #tpu.dot_dimension_numbers<[1], [1], [0], [0], [0, 0, 1, 0], [], []>} : vector<32x8xbf16>, vector<32x8xbf16>, vector<32x32xf32> -> vector<32x32xf32>
    %cst_172 = arith.constant 0.353553385 : f32
    %529 = vector.broadcast %cst_172 : f32 to vector<32x32xf32>
    %530 = arith.mulf %528, %529 : vector<32x32xf32>
    %531 = arith.addf %530, %472 : vector<32x32xf32>
    %cst_173 = arith.constant dense<0xFF800000> : vector<32xf32>
    %532 = vector.multi_reduction <maximumf>, %531, %cst_173 [1] : vector<32x32xf32> to vector<32xf32>
    %533 = vector.shape_cast %532 : vector<32xf32> to vector<32x1xf32>
    %534 = vector.broadcast %533 : vector<32x1xf32> to vector<32x32xf32>
    %535 = arith.subf %531, %534 : vector<32x32xf32>
    %536 = math.exp %535 : vector<32x32xf32>
    %cst_174 = arith.constant dense<0.000000e+00> : vector<32xf32>
    %537 = vector.multi_reduction <add>, %536, %cst_174 [1] : vector<32x32xf32> to vector<32xf32>
    %538 = vector.shape_cast %537 : vector<32xf32> to vector<32x1xf32>
    %539 = arith.truncf %536 : vector<32x32xf32> to vector<32x32xbf16>
    %540 = vector.extract_strided_slice %506 {offsets = [0, 8], sizes = [32, 8], strides = [1, 1]} : vector<32x32xbf16> to vector<32x8xbf16>
    %cst_175 = arith.constant dense<0.000000e+00> : vector<32x8xf32>
    %541 = tpu.matmul %539, %540, %cst_175 {dimension_numbers = #tpu.dot_dimension_numbers<[1], [0], [0], [1], [0, 0, 1, 1], [], []>} : vector<32x32xbf16>, vector<32x8xbf16>, vector<32x8xf32> -> vector<32x8xf32>
    %542 = tpu.reciprocal %538 {approx = true} : vector<32x1xf32> -> vector<32x1xf32>
    %543 = vector.broadcast %542 : vector<32x1xf32> to vector<32x8xf32>
    %544 = arith.mulf %541, %543 : vector<32x8xf32>
    %545 = vector.extract_strided_slice %504 {offsets = [0, 16], sizes = [32, 8], strides = [1, 1]} : vector<32x32xbf16> to vector<32x8xbf16>
    %546 = vector.extract_strided_slice %505 {offsets = [0, 16], sizes = [32, 8], strides = [1, 1]} : vector<32x32xbf16> to vector<32x8xbf16>
    %cst_176 = arith.constant dense<0.000000e+00> : vector<32x32xf32>
    %547 = tpu.matmul %545, %546, %cst_176 {dimension_numbers = #tpu.dot_dimension_numbers<[1], [1], [0], [0], [0, 0, 1, 0], [], []>} : vector<32x8xbf16>, vector<32x8xbf16>, vector<32x32xf32> -> vector<32x32xf32>
    %cst_177 = arith.constant 0.353553385 : f32
    %548 = vector.broadcast %cst_177 : f32 to vector<32x32xf32>
    %549 = arith.mulf %547, %548 : vector<32x32xf32>
    %550 = arith.addf %549, %472 : vector<32x32xf32>
    %cst_178 = arith.constant dense<0xFF800000> : vector<32xf32>
    %551 = vector.multi_reduction <maximumf>, %550, %cst_178 [1] : vector<32x32xf32> to vector<32xf32>
    %552 = vector.shape_cast %551 : vector<32xf32> to vector<32x1xf32>
    %553 = vector.broadcast %552 : vector<32x1xf32> to vector<32x32xf32>
    %554 = arith.subf %550, %553 : vector<32x32xf32>
    %555 = math.exp %554 : vector<32x32xf32>
    %cst_179 = arith.constant dense<0.000000e+00> : vector<32xf32>
    %556 = vector.multi_reduction <add>, %555, %cst_179 [1] : vector<32x32xf32> to vector<32xf32>
    %557 = vector.shape_cast %556 : vector<32xf32> to vector<32x1xf32>
    %558 = arith.truncf %555 : vector<32x32xf32> to vector<32x32xbf16>
    %559 = vector.extract_strided_slice %506 {offsets = [0, 16], sizes = [32, 8], strides = [1, 1]} : vector<32x32xbf16> to vector<32x8xbf16>
    %cst_180 = arith.constant dense<0.000000e+00> : vector<32x8xf32>
    %560 = tpu.matmul %558, %559, %cst_180 {dimension_numbers = #tpu.dot_dimension_numbers<[1], [0], [0], [1], [0, 0, 1, 1], [], []>} : vector<32x32xbf16>, vector<32x8xbf16>, vector<32x8xf32> -> vector<32x8xf32>
    %561 = tpu.reciprocal %557 {approx = true} : vector<32x1xf32> -> vector<32x1xf32>
    %562 = vector.broadcast %561 : vector<32x1xf32> to vector<32x8xf32>
    %563 = arith.mulf %560, %562 : vector<32x8xf32>
    %564 = vector.extract_strided_slice %504 {offsets = [0, 24], sizes = [32, 8], strides = [1, 1]} : vector<32x32xbf16> to vector<32x8xbf16>
    %565 = vector.extract_strided_slice %505 {offsets = [0, 24], sizes = [32, 8], strides = [1, 1]} : vector<32x32xbf16> to vector<32x8xbf16>
    %cst_181 = arith.constant dense<0.000000e+00> : vector<32x32xf32>
    %566 = tpu.matmul %564, %565, %cst_181 {dimension_numbers = #tpu.dot_dimension_numbers<[1], [1], [0], [0], [0, 0, 1, 0], [], []>} : vector<32x8xbf16>, vector<32x8xbf16>, vector<32x32xf32> -> vector<32x32xf32>
    %cst_182 = arith.constant 0.353553385 : f32
    %567 = vector.broadcast %cst_182 : f32 to vector<32x32xf32>
    %568 = arith.mulf %566, %567 : vector<32x32xf32>
    %569 = arith.addf %568, %472 : vector<32x32xf32>
    %cst_183 = arith.constant dense<0xFF800000> : vector<32xf32>
    %570 = vector.multi_reduction <maximumf>, %569, %cst_183 [1] : vector<32x32xf32> to vector<32xf32>
    %571 = vector.shape_cast %570 : vector<32xf32> to vector<32x1xf32>
    %572 = vector.broadcast %571 : vector<32x1xf32> to vector<32x32xf32>
    %573 = arith.subf %569, %572 : vector<32x32xf32>
    %574 = math.exp %573 : vector<32x32xf32>
    %cst_184 = arith.constant dense<0.000000e+00> : vector<32xf32>
    %575 = vector.multi_reduction <add>, %574, %cst_184 [1] : vector<32x32xf32> to vector<32xf32>
    %576 = vector.shape_cast %575 : vector<32xf32> to vector<32x1xf32>
    %577 = arith.truncf %574 : vector<32x32xf32> to vector<32x32xbf16>
    %578 = vector.extract_strided_slice %506 {offsets = [0, 24], sizes = [32, 8], strides = [1, 1]} : vector<32x32xbf16> to vector<32x8xbf16>
    %cst_185 = arith.constant dense<0.000000e+00> : vector<32x8xf32>
    %579 = tpu.matmul %577, %578, %cst_185 {dimension_numbers = #tpu.dot_dimension_numbers<[1], [0], [0], [1], [0, 0, 1, 1], [], []>} : vector<32x32xbf16>, vector<32x8xbf16>, vector<32x8xf32> -> vector<32x8xf32>
    %580 = tpu.reciprocal %576 {approx = true} : vector<32x1xf32> -> vector<32x1xf32>
    %581 = vector.broadcast %580 : vector<32x1xf32> to vector<32x8xf32>
    %582 = arith.mulf %579, %581 : vector<32x8xf32>
    %583 = tpu.concatenate %525, %544, %563, %582 in 1 : vector<32x8xf32>, vector<32x8xf32>, vector<32x8xf32>, vector<32x8xf32> -> vector<32x32xf32>
    %584 = arith.truncf %583 : vector<32x32xf32> to vector<32x32xbf16>
    %c592 = arith.constant 592 : index
    %c0_186 = arith.constant 0 : index
    %585 = vector.load %arg2[%c592, %c0_186] : memref<816x128xbf16, #tpu.memory_space<vmem>>, vector<32x32xbf16>
    %cst_187 = arith.constant dense<0.000000e+00> : vector<32x32xf32>
    %586 = tpu.matmul %584, %585, %cst_187 {dimension_numbers = #tpu.dot_dimension_numbers<[1], [0], [0], [1], [0, 0, 1, 1], [], []>} : vector<32x32xbf16>, vector<32x32xbf16>, vector<32x32xf32> -> vector<32x32xf32>
    %587 = arith.addf %451, %586 : vector<32x32xf32>
    %c139 = arith.constant 139 : index
    %c0_188 = arith.constant 0 : index
    %588 = vector.load %arg3[%c139, %c0_188] : memref<152x128xf32, #tpu.memory_space<vmem>>, vector<1x32xf32>
    %589 = vector.broadcast %588 : vector<1x32xf32> to vector<32x32xf32>
    %590 = arith.addf %587, %589 : vector<32x32xf32>
    %c136 = arith.constant 136 : index
    %c0_189 = arith.constant 0 : index
    %591 = vector.load %arg3[%c136, %c0_189] : memref<152x128xf32, #tpu.memory_space<vmem>>, vector<1x32xf32>
    %c137 = arith.constant 137 : index
    %c0_190 = arith.constant 0 : index
    %592 = vector.load %arg3[%c137, %c0_190] : memref<152x128xf32, #tpu.memory_space<vmem>>, vector<1x32xf32>
    %cst_191 = arith.constant dense<0.000000e+00> : vector<32xf32>
    %593 = vector.multi_reduction <add>, %590, %cst_191 [1] : vector<32x32xf32> to vector<32xf32>
    %594 = vector.shape_cast %593 : vector<32xf32> to vector<32x1xf32>
    %cst_192 = arith.constant 3.200000e+01 : f32
    %595 = vector.broadcast %cst_192 : f32 to vector<32x1xf32>
    %596 = arith.divf %594, %595 : vector<32x1xf32>
    %597 = vector.broadcast %596 : vector<32x1xf32> to vector<32x32xf32>
    %598 = arith.subf %590, %597 : vector<32x32xf32>
    %599 = arith.mulf %598, %598 : vector<32x32xf32>
    %cst_193 = arith.constant dense<0.000000e+00> : vector<32xf32>
    %600 = vector.multi_reduction <add>, %599, %cst_193 [1] : vector<32x32xf32> to vector<32xf32>
    %601 = vector.shape_cast %600 : vector<32xf32> to vector<32x1xf32>
    %cst_194 = arith.constant 3.200000e+01 : f32
    %602 = vector.broadcast %cst_194 : f32 to vector<32x1xf32>
    %603 = arith.divf %601, %602 : vector<32x1xf32>
    %604 = vector.broadcast %596 : vector<32x1xf32> to vector<32x32xf32>
    %605 = arith.subf %590, %604 : vector<32x32xf32>
    %cst_195 = arith.constant 9.99999974E-6 : f32
    %606 = vector.broadcast %cst_195 : f32 to vector<32x1xf32>
    %607 = arith.addf %603, %606 : vector<32x1xf32>
    %608 = math.rsqrt %607 : vector<32x1xf32>
    %609 = vector.broadcast %608 : vector<32x1xf32> to vector<32x32xf32>
    %610 = arith.mulf %605, %609 : vector<32x32xf32>
    %611 = vector.broadcast %591 : vector<1x32xf32> to vector<32x32xf32>
    %612 = arith.mulf %610, %611 : vector<32x32xf32>
    %613 = vector.broadcast %592 : vector<1x32xf32> to vector<32x32xf32>
    %614 = arith.addf %612, %613 : vector<32x32xf32>
    %615 = arith.truncf %614 : vector<32x32xf32> to vector<32x32xbf16>
    %c624 = arith.constant 624 : index
    %c0_196 = arith.constant 0 : index
    %616 = vector.load %arg2[%c624, %c0_196] : memref<816x128xbf16, #tpu.memory_space<vmem>>, vector<32x128xbf16>
    %cst_197 = arith.constant dense<0.000000e+00> : vector<32x128xf32>
    %617 = tpu.matmul %615, %616, %cst_197 {dimension_numbers = #tpu.dot_dimension_numbers<[1], [0], [0], [1], [0, 0, 1, 1], [], []>} : vector<32x32xbf16>, vector<32x128xbf16>, vector<32x128xf32> -> vector<32x128xf32>
    %c140 = arith.constant 140 : index
    %c0_198 = arith.constant 0 : index
    %618 = vector.load %arg3[%c140, %c0_198] : memref<152x128xf32, #tpu.memory_space<vmem>>, vector<1x128xf32>
    %619 = vector.broadcast %618 : vector<1x128xf32> to vector<32x128xf32>
    %620 = arith.addf %617, %619 : vector<32x128xf32>
    %621 = arith.mulf %620, %620 : vector<32x128xf32>
    %622 = arith.mulf %620, %621 : vector<32x128xf32>
    %cst_199 = arith.constant 4.471500e-02 : f32
    %623 = vector.broadcast %cst_199 : f32 to vector<32x128xf32>
    %624 = arith.mulf %623, %622 : vector<32x128xf32>
    %625 = arith.addf %620, %624 : vector<32x128xf32>
    %cst_200 = arith.constant 0.797884583 : f32
    %626 = vector.broadcast %cst_200 : f32 to vector<32x128xf32>
    %627 = arith.mulf %626, %625 : vector<32x128xf32>
    %628 = math.tanh %627 : vector<32x128xf32>
    %cst_201 = arith.constant 1.000000e+00 : f32
    %629 = vector.broadcast %cst_201 : f32 to vector<32x128xf32>
    %630 = arith.addf %629, %628 : vector<32x128xf32>
    %cst_202 = arith.constant 5.000000e-01 : f32
    %631 = vector.broadcast %cst_202 : f32 to vector<32x128xf32>
    %632 = arith.mulf %631, %630 : vector<32x128xf32>
    %633 = arith.mulf %620, %632 : vector<32x128xf32>
    %634 = arith.truncf %633 : vector<32x128xf32> to vector<32x128xbf16>
    %c656 = arith.constant 656 : index
    %c0_203 = arith.constant 0 : index
    %635 = vector.load %arg2[%c656, %c0_203] : memref<816x128xbf16, #tpu.memory_space<vmem>>, vector<128x32xbf16>
    %cst_204 = arith.constant dense<0.000000e+00> : vector<32x32xf32>
    %636 = tpu.matmul %634, %635, %cst_204 {dimension_numbers = #tpu.dot_dimension_numbers<[1], [0], [0], [1], [0, 0, 1, 1], [], []>} : vector<32x128xbf16>, vector<128x32xbf16>, vector<32x32xf32> -> vector<32x32xf32>
    %637 = arith.addf %590, %636 : vector<32x32xf32>
    %c141 = arith.constant 141 : index
    %c0_205 = arith.constant 0 : index
    %638 = vector.load %arg3[%c141, %c0_205] : memref<152x128xf32, #tpu.memory_space<vmem>>, vector<1x32xf32>
    %639 = vector.broadcast %638 : vector<1x32xf32> to vector<32x32xf32>
    %640 = arith.addf %637, %639 : vector<32x32xf32>
    %c142 = arith.constant 142 : index
    %c0_206 = arith.constant 0 : index
    %641 = vector.load %arg3[%c142, %c0_206] : memref<152x128xf32, #tpu.memory_space<vmem>>, vector<1x32xf32>
    %c143 = arith.constant 143 : index
    %c0_207 = arith.constant 0 : index
    %642 = vector.load %arg3[%c143, %c0_207] : memref<152x128xf32, #tpu.memory_space<vmem>>, vector<1x32xf32>
    %cst_208 = arith.constant dense<0.000000e+00> : vector<32xf32>
    %643 = vector.multi_reduction <add>, %640, %cst_208 [1] : vector<32x32xf32> to vector<32xf32>
    %644 = vector.shape_cast %643 : vector<32xf32> to vector<32x1xf32>
    %cst_209 = arith.constant 3.200000e+01 : f32
    %645 = vector.broadcast %cst_209 : f32 to vector<32x1xf32>
    %646 = arith.divf %644, %645 : vector<32x1xf32>
    %647 = vector.broadcast %646 : vector<32x1xf32> to vector<32x32xf32>
    %648 = arith.subf %640, %647 : vector<32x32xf32>
    %649 = arith.mulf %648, %648 : vector<32x32xf32>
    %cst_210 = arith.constant dense<0.000000e+00> : vector<32xf32>
    %650 = vector.multi_reduction <add>, %649, %cst_210 [1] : vector<32x32xf32> to vector<32xf32>
    %651 = vector.shape_cast %650 : vector<32xf32> to vector<32x1xf32>
    %cst_211 = arith.constant 3.200000e+01 : f32
    %652 = vector.broadcast %cst_211 : f32 to vector<32x1xf32>
    %653 = arith.divf %651, %652 : vector<32x1xf32>
    %654 = vector.broadcast %646 : vector<32x1xf32> to vector<32x32xf32>
    %655 = arith.subf %640, %654 : vector<32x32xf32>
    %cst_212 = arith.constant 9.99999974E-6 : f32
    %656 = vector.broadcast %cst_212 : f32 to vector<32x1xf32>
    %657 = arith.addf %653, %656 : vector<32x1xf32>
    %658 = math.rsqrt %657 : vector<32x1xf32>
    %659 = vector.broadcast %658 : vector<32x1xf32> to vector<32x32xf32>
    %660 = arith.mulf %655, %659 : vector<32x32xf32>
    %661 = vector.broadcast %641 : vector<1x32xf32> to vector<32x32xf32>
    %662 = arith.mulf %660, %661 : vector<32x32xf32>
    %663 = vector.broadcast %642 : vector<1x32xf32> to vector<32x32xf32>
    %664 = arith.addf %662, %663 : vector<32x32xf32>
    %665 = arith.truncf %664 : vector<32x32xf32> to vector<32x32xbf16>
    %c784 = arith.constant 784 : index
    %c0_213 = arith.constant 0 : index
    %666 = vector.load %arg2[%c784, %c0_213] : memref<816x128xbf16, #tpu.memory_space<vmem>>, vector<32x128xbf16>
    %cst_214 = arith.constant dense<0.000000e+00> : vector<32x128xf32>
    %667 = tpu.matmul %665, %666, %cst_214 {dimension_numbers = #tpu.dot_dimension_numbers<[1], [0], [0], [1], [0, 0, 1, 1], [], []>} : vector<32x32xbf16>, vector<32x128xbf16>, vector<32x128xf32> -> vector<32x128xf32>
    %c144_215 = arith.constant 144 : index
    %c0_216 = arith.constant 0 : index
    %668 = vector.load %arg3[%c144_215, %c0_216] : memref<152x128xf32, #tpu.memory_space<vmem>>, vector<1x128xf32>
    %669 = vector.broadcast %668 : vector<1x128xf32> to vector<32x128xf32>
    %670 = arith.addf %667, %669 : vector<32x128xf32>
    %c0_217 = arith.constant 0 : index
    %c0_218 = arith.constant 0 : index
    %671 = vector.load %arg4[%c0_217, %c0_218] : memref<32x128xf32, #tpu.memory_space<vmem>>, vector<32x128xf32>
    tpu.vector_store %arg4[%c0_217, %c0_218], %670 {strides = array<i32>} : memref<32x128xf32, #tpu.memory_space<vmem>>, vector<32x128xf32>,
    return
  }
}

</mosaic_0001>

<llo_original>
// kernel: blip2_forward.1
$region0: #{blip2_forward.1}
  #allocation0 [shape = 'u32[]', space=smem, size = 0x4, offset = 0x4, fixed_abs, tag = 'smem constant byte address 0x4 - core index']
  #allocation1 [shape = 'u32[144,128]{1,0:T(1,128)}', space=vmem, size = 0x12000, scoped, tag = 'internal scratch']
  %s0 = inlined_call_operand.vmem [shape: f32[48,48], index: 0, kind: input, shape index: {}]
  %s1 = inlined_call_operand.vmem [shape: f32[32,32], index: 1, kind: input, shape index: {}]
  %s2 = inlined_call_operand.vmem [shape: bf16[816,128], index: 2, kind: input, shape index: {}]
  %s3 = inlined_call_operand.vmem [shape: f32[152,128], index: 3, kind: input, shape index: {}]
  %s4 = inlined_call_operand.hbm [shape: f32[32,128], index: 4, kind: output, shape index: {}]
  %s5 = sld [smem:[#allocation0]]
  $region26: #{blip2_forward.1} parent=0
    _
  %s7 = ssub.s32 1, %s5
  %s8 = scalar_select 0, %s7, %s5
  $region1: #{blip2_forward.1} parent=0
    #allocation2 [shape = 'u8[16384]{0}', space=vmem, size = 0x4000, scoped, tag = 'output window, operand 0, single buffered']
    #allocation3 [shape = 's32[1]{0}', space=sflag, size = 0x4, scoped, tag = 'scoped memory for blip2_forward.1']
    %9 = vsyncpa [#allocation3], 0
    // Predicated region
    $region2: #{blip2_forward.1} parent=1 // pred_check
      _
    $region3: #{blip2_forward.1} parent=1 // pred_check_branch
      %11 = sbr.rel (0) target = $region5
    $region4: #{blip2_forward.1} parent=1 // pred_region
      _
    $region5: #{blip2_forward.1} parent=1 // pred_fallthru
      _
    // Predicated region
    $region6: #{blip2_forward.1} parent=1 // pred_check
      _
    $region7: #{blip2_forward.1} parent=1 // pred_check_branch
      %13 = sbr.rel (0) target = $region9
    $region8: #{blip2_forward.1} parent=1 // pred_region
      _
    $region9: #{blip2_forward.1} parent=1 // pred_fallthru
      _
    // Predicated region
    $region10: #{blip2_forward.1} parent=1 // pred_check
      _
    $region11: #{blip2_forward.1} parent=1 // pred_check_branch
      %15 = sbr.rel (0) target = $region13
    $region12: #{blip2_forward.1} parent=1 // pred_region
      _
    $region13: #{blip2_forward.1} parent=1 // pred_fallthru
      _
    // Predicated region
    $region14: #{blip2_forward.1} parent=1 // pred_check
      _
    $region15: #{blip2_forward.1} parent=1 // pred_check_branch
      %17 = sbr.rel (0) target = $region17
    $region16: #{blip2_forward.1} parent=1 // pred_region
      _
    $region17: #{blip2_forward.1} parent=1 // pred_fallthru
      _
    %v19 = vld [vmem:[%s0] sm:$0xff]
    %v20 = vld [vmem:[%s0 + $0x8] sm:$0xff]
    %v21 = vld [vmem:[%s0 + $0x10] sm:$0xff]
    %v22 = vld [vmem:[%s0 + $0x18] sm:$0xff]
    %v23 = vld [vmem:[%s0 + $0x20] sm:$0xff]
    %v24 = vld [vmem:[%s0 + $0x28] sm:$0xff]
    %v25 = vpack.c.bf16 %v20, %v19
    %v26 = vpack.c.bf16 %v22, %v21
    %v27 = vpack.c.bf16 %v24, %v23
    %v28 = vld [vmem:[%s2] sm:$0xf]
    %v29 = vld [vmem:[%s2 + $0x4] sm:$0xf]
    %v30 = vld [vmem:[%s2 + $0x8] sm:$0xf]
    %v31 = vld [vmem:[%s2 + $0xc] sm:$0xf]
    %v32 = vld [vmem:[%s2 + $0x10] sm:$0xf]
    %v33 = vld [vmem:[%s2 + $0x14] sm:$0xf]
    %v34 = vld [vmem:[%s3] sm:$0xff]
    %v35 = vld [vmem:[%s3 + $0x8] sm:$0xff]
    %v36 = vld [vmem:[%s3 + $0x10] sm:$0xff]
    %v37 = vld [vmem:[%s3 + $0x18] sm:$0xff]
    %v38 = vld [vmem:[%s3 + $0x20] sm:$0xff]
    %v39 = vld [vmem:[%s3 + $0x28] sm:$0xff]
    %v46 = vunpack.c.l.b16 %v28
    %v47 = vunpack.c.l.b16 %v29
    %v48 = vunpack.c.l.b16 %v30
    %v49 = vunpack.c.l.b16 %v31
    %v50 = vunpack.c.l.b16 %v32
    %v51 = vunpack.c.l.b16 %v33
    %v52 = vpack.c.b16 %v47, %v46
    %v53 = vpack.c.b16 %v49, %v48
    %v54 = vpack.c.b16 %v51, %v50
    %vm58 = vcmask 392192
    %v60 = vsel %vm58, %v25, 0
    %v63 = vsel %vm58, %v26, 0
    %v66 = vsel %vm58, %v27, 0
    %68 = vmatprep.subr.bf16.mxu0 0
    %69 = vmatpush1.bf16.msra.mxu0 0
    %70 = vmatprep.subr.bf16.mxu0 0
    %71 = vmatpush1.bf16.msra.mxu0 0
    %72 = vmatprep.subr.bf16.mxu0 0
    %73 = vmatpush1.bf16.msra.mxu0 0
    %74 = vmatprep.subr.bf16.mxu0 0
    %75 = vmatpush1.bf16.msra.mxu0 0
    %76 = vmatprep.subr.bf16.mxu0 0
    %77 = vmatpush1.bf16.msra.mxu0 0
    %78 = vmatprep.subr.bf16.mxu0 0
    %79 = vmatpush1.bf16.msra.mxu0 %v54
    %80 = vmatprep.subr.bf16.mxu0 0
    %81 = vmatpush1.bf16.msra.mxu0 %v53
    %82 = vmatprep.subr.bf16.mxu0 0
    %83 = vmatpush1.bf16.msra.mxu0 %v52
    %84 = vmatprep.subr.bf16.mxu0 0
    %85 = vmatpush2.bf16.msra.mxu0 0
    %86 = vmatprep.subr.bf16.mxu0 0
    %87 = vmatpush2.bf16.msra.mxu0 0
    %88 = vmatprep.subr.bf16.mxu0 0
    %89 = vmatpush2.bf16.msra.mxu0 0
    %90 = vmatprep.subr.bf16.mxu0 0
    %91 = vmatpush2.bf16.msra.mxu0 0
    %92 = vmatprep.subr.bf16.mxu0 0
    %93 = vmatpush2.bf16.msra.mxu0 0
    %94 = vmatprep.subr.bf16.mxu0 0
    %95 = vmatpush2.bf16.msra.mxu0 0
    %96 = vmatprep.subr.bf16.mxu0 0
    %97 = vmatpush2.bf16.msra.mxu0 0
    %98 = vmatprep.subr.bf16.mxu0 0
    %99 = vmatpush2.bf16.msra.mxu0 0
    %100 = vmatprep.mubr.bf16.mxu0 0
    %101 = vmatmul.mubr.bf16.gmra.mxu0 %v60
    %v102 = vpop.f32.mrf.mxu0
    %v103 = vadd.f32 %v34, %v102
    %v104 = vpop.f32.mrf.mxu0
    %v105 = vpop.f32.mrf.mxu0
    %v106 = vadd.f32 %v35, %v105
    %v107 = vpop.f32.mrf.mxu0
    %108 = vmatprep.mubr.bf16.mxu0 0
    %109 = vmatmul.mubr.bf16.gmra.mxu0 %v63
    %v110 = vpop.f32.mrf.mxu0
    %v111 = vadd.f32 %v36, %v110
    %v112 = vpop.f32.mrf.mxu0
    %v113 = vpop.f32.mrf.mxu0
    %v114 = vadd.f32 %v37, %v113
    %v115 = vpop.f32.mrf.mxu0
    %116 = vmatprep.mubr.bf16.mxu0 0
    %117 = vmatmul.mubr.bf16.gmra.mxu0 %v66
    %v118 = vpop.f32.mrf.mxu0
    %v119 = vadd.f32 %v38, %v118
    %v120 = vpop.f32.mrf.mxu0
    %v121 = vpop.f32.mrf.mxu0
    %v122 = vadd.f32 %v39, %v121
    %v123 = vpop.f32.mrf.mxu0
    %124 = vdwg.mxu0
    %v125 = vlaneseq
    %v126 = vshrl.u32 %v125, 7
    %v127 = vadd.s32 %v126, 8
    %v128 = vadd.s32 %v126, 16
    %v129 = vadd.s32 %v126, 24
    %v130 = vadd.s32 %v126, 32
    %v131 = vadd.s32 %v126, 40
    %v132 = vlaneseq
    %v133 = vand.u32 %v132, 127
    %vm134 = vcmp.ge.s32.totalorder %v126, 24
    %vm135 = vcmp.ge.s32.totalorder %v127, 24
    %vm136 = vcmp.ge.s32.totalorder %v128, 24
    %vm137 = vcmp.ge.s32.totalorder %v129, 24
    %vm138 = vcmp.ge.s32.totalorder %v130, 24
    %vm139 = vcmp.ge.s32.totalorder %v131, 24
    %vm140 = vcmp.ge.s32.totalorder %v133, 24
    %v141 = vsel %vm140, 24, 0
    %v142 = vsub.s32 %v133, %v141
    %vm143 = vmxor %vm134, %vm140
    %vm144 = vmxor %vm135, %vm140
    %vm145 = vmxor %vm136, %vm140
    %vm146 = vmxor %vm137, %vm140
    %vm147 = vmxor %vm138, %vm140
    %vm148 = vmxor %vm139, %vm140
    %vm149 = vmxor %vm143, 1
    %vm150 = vmxor %vm144, 1
    %vm151 = vmxor %vm145, 1
    %vm152 = vmxor %vm146, 1
    %vm153 = vmxor %vm147, 1
    %vm154 = vmxor %vm148, 1
    %vm155 = vcmp.lt.s32.totalorder %v142, 17
    %vm156 = vmand %vm149, %vm155
    %vm157 = vmand %vm150, %vm155
    %vm158 = vmand %vm151, %vm155
    %vm159 = vmand %vm152, %vm155
    %vm160 = vmand %vm153, %vm155
    %vm161 = vmand %vm154, %vm155
    %v162 = vsel %vm156, 0.0, -1e+30
    %v163 = vsel %vm157, 0.0, -1e+30
    %v164 = vsel %vm158, 0.0, -1e+30
    %v165 = vsel %vm159, 0.0, -1e+30
    %v166 = vsel %vm160, 0.0, -1e+30
    %v167 = vsel %vm161, 0.0, -1e+30
    %v168 = vld [vmem:[%s3 + $0x70] sm:$0x1]
    %v169 = vld [vmem:[%s3 + $0x71] sm:$0x1]
    %vm170 = vcmask 261120
    %v171 = vsel %vm170, %v103, 0.0
    %172 = vadd.xlane.f32.xlu0 %v171
    %v173 = vpop.xlane.xlu0 %172
    %v174 = vsel %vm170, %v106, 0.0
    %175 = vadd.xlane.f32.xlu0 %v174
    %v176 = vpop.xlane.xlu0 %175
    %v177 = vsel %vm170, %v111, 0.0
    %178 = vadd.xlane.f32.xlu0 %v177
    %v179 = vpop.xlane.xlu0 %178
    %v180 = vsel %vm170, %v114, 0.0
    %181 = vadd.xlane.f32.xlu0 %v180
    %v182 = vpop.xlane.xlu0 %181
    %v183 = vsel %vm170, %v119, 0.0
    %184 = vadd.xlane.f32.xlu0 %v183
    %v185 = vpop.xlane.xlu0 %184
    %v186 = vsel %vm170, %v122, 0.0
    %187 = vadd.xlane.f32.xlu0 %v186
    %v188 = vpop.xlane.xlu0 %187
    %v189 = vrcp.pop 32.0
    %v190 = vmul.f32 %v173, %v189
    %v191 = vmul.f32 %v176, %v189
    %v192 = vmul.f32 %v179, %v189
    %v193 = vmul.f32 %v182, %v189
    %v194 = vmul.f32 %v185, %v189
    %v195 = vmul.f32 %v188, %v189
    %v196 = vsub.f32 %v103, %v190
    %v197 = vsub.f32 %v106, %v191
    %v198 = vsub.f32 %v111, %v192
    %v199 = vsub.f32 %v114, %v193
    %v200 = vsub.f32 %v119, %v194
    %v201 = vsub.f32 %v122, %v195
    %v202 = vmul.f32 %v196, %v196
    %v203 = vmul.f32 %v197, %v197
    %v204 = vmul.f32 %v198, %v198
    %v205 = vmul.f32 %v199, %v199
    %v206 = vmul.f32 %v200, %v200
    %v207 = vmul.f32 %v201, %v201
    %v208 = vsel %vm170, %v202, 0.0
    %209 = vadd.xlane.f32.xlu0 %v208
    %v210 = vpop.xlane.xlu0 %209
    %v211 = vsel %vm170, %v203, 0.0
    %212 = vadd.xlane.f32.xlu0 %v211
    %v213 = vpop.xlane.xlu0 %212
    %v214 = vsel %vm170, %v204, 0.0
    %215 = vadd.xlane.f32.xlu0 %v214
    %v216 = vpop.xlane.xlu0 %215
    %v217 = vsel %vm170, %v205, 0.0
    %218 = vadd.xlane.f32.xlu0 %v217
    %v219 = vpop.xlane.xlu0 %218
    %v220 = vsel %vm170, %v206, 0.0
    %221 = vadd.xlane.f32.xlu0 %v220
    %v222 = vpop.xlane.xlu0 %221
    %v223 = vsel %vm170, %v207, 0.0
    %224 = vadd.xlane.f32.xlu0 %v223
    %v225 = vpop.xlane.xlu0 %224
    %v226 = vmul.f32 %v210, %v189
    %v227 = vmul.f32 %v213, %v189
    %v228 = vmul.f32 %v216, %v189
    %v229 = vmul.f32 %v219, %v189
    %v230 = vmul.f32 %v222, %v189
    %v231 = vmul.f32 %v225, %v189
    %v232 = vadd.f32 %v226, 1e-05
    %v233 = vadd.f32 %v227, 1e-05
    %v234 = vadd.f32 %v228, 1e-05
    %v235 = vadd.f32 %v229, 1e-05
    %v236 = vadd.f32 %v230, 1e-05
    %v237 = vadd.f32 %v231, 1e-05
    %v238 = vrsqrt.pop %v232
    %v239 = vrsqrt.pop %v233
    %v240 = vrsqrt.pop %v234
    %v241 = vrsqrt.pop %v235
    %v242 = vrsqrt.pop %v236
    %v243 = vrsqrt.pop %v237
    %v244 = vmul.f32 %v196, %v238
    %v245 = vmul.f32 %v197, %v239
    %v246 = vmul.f32 %v198, %v240
    %v247 = vmul.f32 %v199, %v241
    %v248 = vmul.f32 %v200, %v242
    %v249 = vmul.f32 %v201, %v243
    %v250 = vlaneseq
    %v251 = vshrl.u32 %v250, 7
    %v252 = vsub.s32 0, %v251
    %v253 = vrot.slane %v168, %v252
    %v254 = vmul.f32 %v244, %v253
    %v255 = vmul.f32 %v245, %v253
    %v256 = vmul.f32 %v246, %v253
    %v257 = vmul.f32 %v247, %v253
    %v258 = vmul.f32 %v248, %v253
    %v259 = vmul.f32 %v249, %v253
    %v260 = vlaneseq
    %v261 = vshrl.u32 %v260, 7
    %v262 = vsub.s32 0, %v261
    %v263 = vrot.slane %v169, %v262
    %v264 = vadd.f32 %v254, %v263
    %v265 = vadd.f32 %v255, %v263
    %v266 = vadd.f32 %v256, %v263
    %v267 = vadd.f32 %v257, %v263
    %v268 = vadd.f32 %v258, %v263
    %v269 = vadd.f32 %v259, %v263
    %v270 = vpack.c.bf16 %v265, %v264
    %v271 = vpack.c.bf16 %v267, %v266
    %v272 = vpack.c.bf16 %v269, %v268
    %v273 = vld [vmem:[%s2 + $0x18] sm:$0xf]
    %v274 = vld [vmem:[%s2 + $0x1c] sm:$0xf]
    %v275 = vld [vmem:[%s2 + $0x20] sm:$0xf]
    %v276 = vld [vmem:[%s2 + $0x24] sm:$0xf]
    %v277 = vld [vmem:[%s3 + $0x74] sm:$0x1]
    %v278 = vlaneseq
    %v279 = vshrl.u32 %v278, 7
    %v280 = vsub.s32 0, %v279
    %v281 = vrot.slane %v277, %v280
    %v286 = vunpack.c.l.b16 %v273
    %v287 = vunpack.c.l.b16 %v274
    %v288 = vunpack.c.l.b16 %v275
    %v289 = vunpack.c.l.b16 %v276
    %v290 = vpack.c.b16 %v287, %v286
    %v291 = vpack.c.b16 %v289, %v288
    %v295 = vsel %vm170, %v270, 0
    %v298 = vsel %vm170, %v271, 0
    %v301 = vsel %vm170, %v272, 0
    %303 = vmatprep.subr.bf16.mxu0 0
    %304 = vmatpush1.bf16.msra.mxu0 0
    %305 = vmatprep.subr.bf16.mxu0 0
    %306 = vmatpush1.bf16.msra.mxu0 0
    %307 = vmatprep.subr.bf16.mxu0 0
    %308 = vmatpush1.bf16.msra.mxu0 0
    %309 = vmatprep.subr.bf16.mxu0 0
    %310 = vmatpush1.bf16.msra.mxu0 0
    %311 = vmatprep.subr.bf16.mxu0 0
    %312 = vmatpush1.bf16.msra.mxu0 0
    %313 = vmatprep.subr.bf16.mxu0 0
    %314 = vmatpush1.bf16.msra.mxu0 0
    %315 = vmatprep.subr.bf16.mxu0 0
    %316 = vmatpush1.bf16.msra.mxu0 %v291
    %317 = vmatprep.subr.bf16.mxu0 0
    %318 = vmatpush1.bf16.msra.mxu0 %v290
    %319 = vmatprep.subr.bf16.mxu0 0
    %320 = vmatpush2.bf16.msra.mxu0 0
    %321 = vmatprep.subr.bf16.mxu0 0
    %322 = vmatpush2.bf16.msra.mxu0 0
    %323 = vmatprep.subr.bf16.mxu0 0
    %324 = vmatpush2.bf16.msra.mxu0 0
    %325 = vmatprep.subr.bf16.mxu0 0
    %326 = vmatpush2.bf16.msra.mxu0 0
    %327 = vmatprep.subr.bf16.mxu0 0
    %328 = vmatpush2.bf16.msra.mxu0 0
    %329 = vmatprep.subr.bf16.mxu0 0
    %330 = vmatpush2.bf16.msra.mxu0 0
    %331 = vmatprep.subr.bf16.mxu0 0
    %332 = vmatpush2.bf16.msra.mxu0 0
    %333 = vmatprep.subr.bf16.mxu0 0
    %334 = vmatpush2.bf16.msra.mxu0 0
    %335 = vmatprep.mubr.bf16.mxu0 0
    %336 = vmatmul.mubr.bf16.gmra.mxu0 %v295
    %v337 = vpop.f32.mrf.mxu0
    %v338 = vadd.f32 %v281, %v337
    %v339 = vpop.f32.mrf.mxu0
    %v340 = vpop.f32.mrf.mxu0
    %v341 = vadd.f32 %v281, %v340
    %v342 = vpop.f32.mrf.mxu0
    %343 = vmatprep.mubr.bf16.mxu0 0
    %344 = vmatmul.mubr.bf16.gmra.mxu0 %v298
    %v345 = vpop.f32.mrf.mxu0
    %v346 = vadd.f32 %v281, %v345
    %v347 = vpop.f32.mrf.mxu0
    %v348 = vpop.f32.mrf.mxu0
    %v349 = vadd.f32 %v281, %v348
    %v350 = vpop.f32.mrf.mxu0
    %351 = vmatprep.mubr.bf16.mxu0 0
    %352 = vmatmul.mubr.bf16.gmra.mxu0 %v301
    %v353 = vpop.f32.mrf.mxu0
    %v354 = vadd.f32 %v281, %v353
    %v355 = vpop.f32.mrf.mxu0
    %v356 = vpop.f32.mrf.mxu0
    %v357 = vadd.f32 %v281, %v356
    %v358 = vpop.f32.mrf.mxu0
    %359 = vdwg.mxu0
    %v360 = vpack.c.bf16 %v341, %v338
    %v361 = vpack.c.bf16 %v349, %v346
    %v362 = vpack.c.bf16 %v357, %v354
    %366 = vrot.lane.b32.xlu0 %v360, 96
    %v367 = vpop.permute.xlu0 %366
    %368 = vrot.lane.b32.xlu0 %v361, 96
    %v369 = vpop.permute.xlu0 %368
    %370 = vrot.lane.b32.xlu0 %v362, 96
    %v371 = vpop.permute.xlu0 %370
    %vm372 = vcmask 64512
    %v374 = vsel %vm372, %v360, 0
    %v377 = vsel %vm372, %v361, 0
    %v380 = vsel %vm372, %v362, 0
    %v383 = vsel %vm372, %v367, 0
    %v386 = vsel %vm372, %v369, 0
    %v389 = vsel %vm372, %v371, 0
    %391 = vmatprep.subr.bf16.mxu0 0
    %392 = vmatpush1.bf16.xpose.msra.mxu0 0
    %393 = vmatprep.subr.bf16.mxu0 0
    %394 = vmatpush1.bf16.xpose.msra.mxu0 0
    %395 = vmatprep.subr.bf16.mxu0 0
    %396 = vmatpush1.bf16.xpose.msra.mxu0 0
    %397 = vmatprep.subr.bf16.mxu0 0
    %398 = vmatpush1.bf16.xpose.msra.mxu0 0
    %399 = vmatprep.subr.bf16.mxu0 0
    %400 = vmatpush1.bf16.xpose.msra.mxu0 0
    %401 = vmatprep.subr.bf16.mxu0 0
    %402 = vmatpush1.bf16.xpose.msra.mxu0 %v389
    %403 = vmatprep.subr.bf16.mxu0 0
    %404 = vmatpush1.bf16.xpose.msra.mxu0 %v386
    %405 = vmatprep.subr.bf16.mxu0 0
    %406 = vmatpush1.bf16.xpose.msra.mxu0 %v383
    %407 = vmatprep.subr.bf16.mxu0 0
    %408 = vmatpush2.bf16.xpose.msra.mxu0 0
    %409 = vmatprep.subr.bf16.mxu0 0
    %410 = vmatpush2.bf16.xpose.msra.mxu0 0
    %411 = vmatprep.subr.bf16.mxu0 0
    %412 = vmatpush2.bf16.xpose.msra.mxu0 0
    %413 = vmatprep.subr.bf16.mxu0 0
    %414 = vmatpush2.bf16.xpose.msra.mxu0 0
    %415 = vmatprep.subr.bf16.mxu0 0
    %416 = vmatpush2.bf16.xpose.msra.mxu0 0
    %417 = vmatprep.subr.bf16.mxu0 0
    %418 = vmatpush2.bf16.xpose.msra.mxu0 0
    %419 = vmatprep.subr.bf16.mxu0 0
    %420 = vmatpush2.bf16.xpose.msra.mxu0 0
    %421 = vmatprep.subr.bf16.mxu0 0
    %422 = vmatpush2.bf16.xpose.msra.mxu0 0
    %423 = vmatprep.mubr.bf16.mxu0 0
    %424 = vmatmul.mubr.bf16.gmra.mxu0 %v374
    %v425 = vpop.f32.mrf.mxu0
    %v426 = vadd.f32 0.0, %v425
    %v427 = vpop.f32.mrf.mxu0
    %v428 = vpop.f32.mrf.mxu0
    %v429 = vadd.f32 0.0, %v428
    %v430 = vpop.f32.mrf.mxu0
    %431 = vmatprep.mubr.bf16.mxu0 0
    %432 = vmatmul.mubr.bf16.gmra.mxu0 %v377
    %v433 = vpop.f32.mrf.mxu0
    %v434 = vadd.f32 0.0, %v433
    %v435 = vpop.f32.mrf.mxu0
    %v436 = vpop.f32.mrf.mxu0
    %v437 = vadd.f32 0.0, %v436
    %v438 = vpop.f32.mrf.mxu0
    %439 = vmatprep.mubr.bf16.mxu0 0
    %440 = vmatmul.mubr.bf16.gmra.mxu0 %v380
    %v441 = vpop.f32.mrf.mxu0
    %v442 = vadd.f32 0.0, %v441
    %v443 = vpop.f32.mrf.mxu0
    %v444 = vpop.f32.mrf.mxu0
    %v445 = vadd.f32 0.0, %v444
    %v446 = vpop.f32.mrf.mxu0
    %447 = vdwg.mxu0
    %v448 = vmul.f32 %v426, 0.35355338
    %v449 = vmul.f32 %v429, 0.35355338
    %v450 = vmul.f32 %v434, 0.35355338
    %v451 = vmul.f32 %v437, 0.35355338
    %v452 = vmul.f32 %v442, 0.35355338
    %v453 = vmul.f32 %v445, 0.35355338
    %v454 = vadd.f32 %v448, %v162
    %v455 = vadd.f32 %v449, %v163
    %v456 = vadd.f32 %v450, %v164
    %v457 = vadd.f32 %v451, %v165
    %v458 = vadd.f32 %v452, %v166
    %v459 = vadd.f32 %v453, %v167
    %v460 = vsel %vm58, %v454, -inf
    %461 = vmax.xlane.f32.xlu0 %v460
    %v462 = vpop.xlane.xlu0 %461
    %v463 = vsel %vm58, %v455, -inf
    %464 = vmax.xlane.f32.xlu0 %v463
    %v465 = vpop.xlane.xlu0 %464
    %v466 = vsel %vm58, %v456, -inf
    %467 = vmax.xlane.f32.xlu0 %v466
    %v468 = vpop.xlane.xlu0 %467
    %v469 = vsel %vm58, %v457, -inf
    %470 = vmax.xlane.f32.xlu0 %v469
    %v471 = vpop.xlane.xlu0 %470
    %v472 = vsel %vm58, %v458, -inf
    %473 = vmax.xlane.f32.xlu0 %v472
    %v474 = vpop.xlane.xlu0 %473
    %v475 = vsel %vm58, %v459, -inf
    %476 = vmax.xlane.f32.xlu0 %v475
    %v477 = vpop.xlane.xlu0 %476
    %v478 = vsub.f32 %v454, %v462
    %v479 = vsub.f32 %v455, %v465
    %v480 = vsub.f32 %v456, %v468
    %v481 = vsub.f32 %v457, %v471
    %v482 = vsub.f32 %v458, %v474
    %v483 = vsub.f32 %v459, %v477
    %v484 = vmul.f32 %v478, 1.442695
    %v485 = vpow.pop %v484
    %v486 = vmul.f32 %v479, 1.442695
    %v487 = vpow.pop %v486
    %v488 = vmul.f32 %v480, 1.442695
    %v489 = vpow.pop %v488
    %v490 = vmul.f32 %v481, 1.442695
    %v491 = vpow.pop %v490
    %v492 = vmul.f32 %v482, 1.442695
    %v493 = vpow.pop %v492
    %v494 = vmul.f32 %v483, 1.442695
    %v495 = vpow.pop %v494
    %v496 = vsel %vm58, %v485, 0.0
    %497 = vadd.xlane.f32.xlu0 %v496
    %v498 = vpop.xlane.xlu0 %497
    %v499 = vsel %vm58, %v487, 0.0
    %500 = vadd.xlane.f32.xlu0 %v499
    %v501 = vpop.xlane.xlu0 %500
    %v502 = vsel %vm58, %v489, 0.0
    %503 = vadd.xlane.f32.xlu0 %v502
    %v504 = vpop.xlane.xlu0 %503
    %v505 = vsel %vm58, %v491, 0.0
    %506 = vadd.xlane.f32.xlu0 %v505
    %v507 = vpop.xlane.xlu0 %506
    %v508 = vsel %vm58, %v493, 0.0
    %509 = vadd.xlane.f32.xlu0 %v508
    %v510 = vpop.xlane.xlu0 %509
    %v511 = vsel %vm58, %v495, 0.0
    %512 = vadd.xlane.f32.xlu0 %v511
    %v513 = vpop.xlane.xlu0 %512
    %v514 = vpack.c.bf16 %v487, %v485
    %v515 = vpack.c.bf16 %v491, %v489
    %v516 = vpack.c.bf16 %v495, %v493
    %517 = vrot.lane.b32.xlu0 %v360, 64
    %v518 = vpop.permute.xlu0 %517
    %519 = vrot.lane.b32.xlu0 %v361, 64
    %v520 = vpop.permute.xlu0 %519
    %521 = vrot.lane.b32.xlu0 %v362, 64
    %v522 = vpop.permute.xlu0 %521
    %v527 = vsel %vm58, %v514, 0
    %v530 = vsel %vm58, %v515, 0
    %v533 = vsel %vm58, %v516, 0
    %535 = vmatprep.subr.bf16.mxu0 0
    %536 = vmatpush1.bf16.msra.mxu0 0
    %537 = vmatprep.subr.bf16.mxu0 0
    %538 = vmatpush1.bf16.msra.mxu0 0
    %539 = vmatprep.subr.bf16.mxu0 0
    %540 = vmatpush1.bf16.msra.mxu0 0
    %541 = vmatprep.subr.bf16.mxu0 0
    %542 = vmatpush1.bf16.msra.mxu0 0
    %543 = vmatprep.subr.bf16.mxu0 0
    %544 = vmatpush1.bf16.msra.mxu0 0
    %545 = vmatprep.subr.bf16.mxu0 0
    %546 = vmatpush1.bf16.msra.mxu0 %v522
    %547 = vmatprep.subr.bf16.mxu0 0
    %548 = vmatpush1.bf16.msra.mxu0 %v520
    %549 = vmatprep.subr.bf16.mxu0 0
    %550 = vmatpush1.bf16.msra.mxu0 %v518
    %551 = vmatprep.subr.bf16.mxu0 0
    %552 = vmatpush2.bf16.msra.mxu0 0
    %553 = vmatprep.subr.bf16.mxu0 0
    %554 = vmatpush2.bf16.msra.mxu0 0
    %555 = vmatprep.subr.bf16.mxu0 0
    %556 = vmatpush2.bf16.msra.mxu0 0
    %557 = vmatprep.subr.bf16.mxu0 0
    %558 = vmatpush2.bf16.msra.mxu0 0
    %559 = vmatprep.subr.bf16.mxu0 0
    %560 = vmatpush2.bf16.msra.mxu0 0
    %561 = vmatprep.subr.bf16.mxu0 0
    %562 = vmatpush2.bf16.msra.mxu0 0
    %563 = vmatprep.subr.bf16.mxu0 0
    %564 = vmatpush2.bf16.msra.mxu0 0
    %565 = vmatprep.subr.bf16.mxu0 0
    %566 = vmatpush2.bf16.msra.mxu0 0
    %567 = vmatprep.mubr.bf16.mxu0 0
    %568 = vmatmul.mubr.bf16.gmra.mxu0 %v527
    %v569 = vpop.f32.mrf.mxu0
    %v570 = vadd.f32 0.0, %v569
    %v571 = vpop.f32.mrf.mxu0
    %v572 = vpop.f32.mrf.mxu0
    %v573 = vadd.f32 0.0, %v572
    %v574 = vpop.f32.mrf.mxu0
    %575 = vmatprep.mubr.bf16.mxu0 0
    %576 = vmatmul.mubr.bf16.gmra.mxu0 %v530
    %v577 = vpop.f32.mrf.mxu0
    %v578 = vadd.f32 0.0, %v577
    %v579 = vpop.f32.mrf.mxu0
    %v580 = vpop.f32.mrf.mxu0
    %v581 = vadd.f32 0.0, %v580
    %v582 = vpop.f32.mrf.mxu0
    %583 = vmatprep.mubr.bf16.mxu0 0
    %584 = vmatmul.mubr.bf16.gmra.mxu0 %v533
    %v585 = vpop.f32.mrf.mxu0
    %v586 = vadd.f32 0.0, %v585
    %v587 = vpop.f32.mrf.mxu0
    %v588 = vpop.f32.mrf.mxu0
    %v589 = vadd.f32 0.0, %v588
    %v590 = vpop.f32.mrf.mxu0
    %591 = vdwg.mxu0
    %v592 = vrcp.pop %v498
    %v593 = vrcp.pop %v501
    %v594 = vrcp.pop %v504
    %v595 = vrcp.pop %v507
    %v596 = vrcp.pop %v510
    %v597 = vrcp.pop %v513
    %v598 = vmul.f32 %v570, %v592
    %v599 = vmul.f32 %v573, %v593
    %v600 = vmul.f32 %v578, %v594
    %v601 = vmul.f32 %v581, %v595
    %v602 = vmul.f32 %v586, %v596
    %v603 = vmul.f32 %v589, %v597
    %604 = vrot.lane.b32.xlu0 %v360, 120
    %v605 = vpop.permute.xlu0 %604
    %606 = vrot.lane.b32.xlu0 %v361, 120
    %v607 = vpop.permute.xlu0 %606
    %608 = vrot.lane.b32.xlu0 %v362, 120
    %v609 = vpop.permute.xlu0 %608
    %610 = vrot.lane.b32.xlu0 %v360, 88
    %v611 = vpop.permute.xlu0 %610
    %612 = vrot.lane.b32.xlu0 %v361, 88
    %v613 = vpop.permute.xlu0 %612
    %614 = vrot.lane.b32.xlu0 %v362, 88
    %v615 = vpop.permute.xlu0 %614
    %v617 = vsel %vm372, %v605, 0
    %v620 = vsel %vm372, %v607, 0
    %v623 = vsel %vm372, %v609, 0
    %v626 = vsel %vm372, %v611, 0
    %v629 = vsel %vm372, %v613, 0
    %v632 = vsel %vm372, %v615, 0
    %634 = vmatprep.subr.bf16.mxu0 0
    %635 = vmatpush1.bf16.xpose.msra.mxu0 0
    %636 = vmatprep.subr.bf16.mxu0 0
    %637 = vmatpush1.bf16.xpose.msra.mxu0 0
    %638 = vmatprep.subr.bf16.mxu0 0
    %639 = vmatpush1.bf16.xpose.msra.mxu0 0
    %640 = vmatprep.subr.bf16.mxu0 0
    %641 = vmatpush1.bf16.xpose.msra.mxu0 0
    %642 = vmatprep.subr.bf16.mxu0 0
    %643 = vmatpush1.bf16.xpose.msra.mxu0 0
    %644 = vmatprep.subr.bf16.mxu0 0
    %645 = vmatpush1.bf16.xpose.msra.mxu0 %v632
    %646 = vmatprep.subr.bf16.mxu0 0
    %647 = vmatpush1.bf16.xpose.msra.mxu0 %v629
    %648 = vmatprep.subr.bf16.mxu0 0
    %649 = vmatpush1.bf16.xpose.msra.mxu0 %v626
    %650 = vmatprep.subr.bf16.mxu0 0
    %651 = vmatpush2.bf16.xpose.msra.mxu0 0
    %652 = vmatprep.subr.bf16.mxu0 0
    %653 = vmatpush2.bf16.xpose.msra.mxu0 0
    %654 = vmatprep.subr.bf16.mxu0 0
    %655 = vmatpush2.bf16.xpose.msra.mxu0 0
    %656 = vmatprep.subr.bf16.mxu0 0
    %657 = vmatpush2.bf16.xpose.msra.mxu0 0
    %658 = vmatprep.subr.bf16.mxu0 0
    %659 = vmatpush2.bf16.xpose.msra.mxu0 0
    %660 = vmatprep.subr.bf16.mxu0 0
    %661 = vmatpush2.bf16.xpose.msra.mxu0 0
    %662 = vmatprep.subr.bf16.mxu0 0
    %663 = vmatpush2.bf16.xpose.msra.mxu0 0
    %664 = vmatprep.subr.bf16.mxu0 0
    %665 = vmatpush2.bf16.xpose.msra.mxu0 0
    %666 = vmatprep.mubr.bf16.mxu0 0
    %667 = vmatmul.mubr.bf16.gmra.mxu0 %v617
    %v668 = vpop.f32.mrf.mxu0
    %v669 = vadd.f32 0.0, %v668
    %v670 = vpop.f32.mrf.mxu0
    %v671 = vpop.f32.mrf.mxu0
    %v672 = vadd.f32 0.0, %v671
    %v673 = vpop.f32.mrf.mxu0
    %674 = vmatprep.mubr.bf16.mxu0 0
    %675 = vmatmul.mubr.bf16.gmra.mxu0 %v620
    %v676 = vpop.f32.mrf.mxu0
    %v677 = vadd.f32 0.0, %v676
    %v678 = vpop.f32.mrf.mxu0
    %v679 = vpop.f32.mrf.mxu0
    %v680 = vadd.f32 0.0, %v679
    %v681 = vpop.f32.mrf.mxu0
    %682 = vmatprep.mubr.bf16.mxu0 0
    %683 = vmatmul.mubr.bf16.gmra.mxu0 %v623
    %v684 = vpop.f32.mrf.mxu0
    %v685 = vadd.f32 0.0, %v684
    %v686 = vpop.f32.mrf.mxu0
    %v687 = vpop.f32.mrf.mxu0
    %v688 = vadd.f32 0.0, %v687
    %v689 = vpop.f32.mrf.mxu0
    %690 = vdwg.mxu0
    %v691 = vmul.f32 %v669, 0.35355338
    %v692 = vmul.f32 %v672, 0.35355338
    %v693 = vmul.f32 %v677, 0.35355338
    %v694 = vmul.f32 %v680, 0.35355338
    %v695 = vmul.f32 %v685, 0.35355338
    %v696 = vmul.f32 %v688, 0.35355338
    %v697 = vadd.f32 %v691, %v162
    %v698 = vadd.f32 %v692, %v163
    %v699 = vadd.f32 %v693, %v164
    %v700 = vadd.f32 %v694, %v165
    %v701 = vadd.f32 %v695, %v166
    %v702 = vadd.f32 %v696, %v167
    %v703 = vsel %vm58, %v697, -inf
    %704 = vmax.xlane.f32.xlu0 %v703
    %v705 = vpop.xlane.xlu0 %704
    %v706 = vsel %vm58, %v698, -inf
    %707 = vmax.xlane.f32.xlu0 %v706
    %v708 = vpop.xlane.xlu0 %707
    %v709 = vsel %vm58, %v699, -inf
    %710 = vmax.xlane.f32.xlu0 %v709
    %v711 = vpop.xlane.xlu0 %710
    %v712 = vsel %vm58, %v700, -inf
    %713 = vmax.xlane.f32.xlu0 %v712
    %v714 = vpop.xlane.xlu0 %713
    %v715 = vsel %vm58, %v701, -inf
    %716 = vmax.xlane.f32.xlu0 %v715
    %v717 = vpop.xlane.xlu0 %716
    %v718 = vsel %vm58, %v702, -inf
    %719 = vmax.xlane.f32.xlu0 %v718
    %v720 = vpop.xlane.xlu0 %719
    %v721 = vsub.f32 %v697, %v705
    %v722 = vsub.f32 %v698, %v708
    %v723 = vsub.f32 %v699, %v711
    %v724 = vsub.f32 %v700, %v714
    %v725 = vsub.f32 %v701, %v717
    %v726 = vsub.f32 %v702, %v720
    %v727 = vmul.f32 %v721, 1.442695
    %v728 = vpow.pop %v727
    %v729 = vmul.f32 %v722, 1.442695
    %v730 = vpow.pop %v729
    %v731 = vmul.f32 %v723, 1.442695
    %v732 = vpow.pop %v731
    %v733 = vmul.f32 %v724, 1.442695
    %v734 = vpow.pop %v733
    %v735 = vmul.f32 %v725, 1.442695
    %v736 = vpow.pop %v735
    %v737 = vmul.f32 %v726, 1.442695
    %v738 = vpow.pop %v737
    %v739 = vsel %vm58, %v728, 0.0
    %740 = vadd.xlane.f32.xlu0 %v739
    %v741 = vpop.xlane.xlu0 %740
    %v742 = vsel %vm58, %v730, 0.0
    %743 = vadd.xlane.f32.xlu0 %v742
    %v744 = vpop.xlane.xlu0 %743
    %v745 = vsel %vm58, %v732, 0.0
    %746 = vadd.xlane.f32.xlu0 %v745
    %v747 = vpop.xlane.xlu0 %746
    %v748 = vsel %vm58, %v734, 0.0
    %749 = vadd.xlane.f32.xlu0 %v748
    %v750 = vpop.xlane.xlu0 %749
    %v751 = vsel %vm58, %v736, 0.0
    %752 = vadd.xlane.f32.xlu0 %v751
    %v753 = vpop.xlane.xlu0 %752
    %v754 = vsel %vm58, %v738, 0.0
    %755 = vadd.xlane.f32.xlu0 %v754
    %v756 = vpop.xlane.xlu0 %755
    %v757 = vpack.c.bf16 %v730, %v728
    %v758 = vpack.c.bf16 %v734, %v732
    %v759 = vpack.c.bf16 %v738, %v736
    %760 = vrot.lane.b32.xlu0 %v360, 56
    %v761 = vpop.permute.xlu0 %760
    %762 = vrot.lane.b32.xlu0 %v361, 56
    %v763 = vpop.permute.xlu0 %762
    %764 = vrot.lane.b32.xlu0 %v362, 56
    %v765 = vpop.permute.xlu0 %764
    %v770 = vsel %vm58, %v757, 0
    %v773 = vsel %vm58, %v758, 0
    %v776 = vsel %vm58, %v759, 0
    %778 = vmatprep.subr.bf16.mxu0 0
    %779 = vmatpush1.bf16.msra.mxu0 0
    %780 = vmatprep.subr.bf16.mxu0 0
    %781 = vmatpush1.bf16.msra.mxu0 0
    %782 = vmatprep.subr.bf16.mxu0 0
    %783 = vmatpush1.bf16.msra.mxu0 0
    %784 = vmatprep.subr.bf16.mxu0 0
    %785 = vmatpush1.bf16.msra.mxu0 0
    %786 = vmatprep.subr.bf16.mxu0 0
    %787 = vmatpush1.bf16.msra.mxu0 0
    %788 = vmatprep.subr.bf16.mxu0 0
    %789 = vmatpush1.bf16.msra.mxu0 %v765
    %790 = vmatprep.subr.bf16.mxu0 0
    %791 = vmatpush1.bf16.msra.mxu0 %v763
    %792 = vmatprep.subr.bf16.mxu0 0
    %793 = vmatpush1.bf16.msra.mxu0 %v761
    %794 = vmatprep.subr.bf16.mxu0 0
    %795 = vmatpush2.bf16.msra.mxu0 0
    %796 = vmatprep.subr.bf16.mxu0 0
    %797 = vmatpush2.bf16.msra.mxu0 0
    %798 = vmatprep.subr.bf16.mxu0 0
    %799 = vmatpush2.bf16.msra.mxu0 0
    %800 = vmatprep.subr.bf16.mxu0 0
    %801 = vmatpush2.bf16.msra.mxu0 0
    %802 = vmatprep.subr.bf16.mxu0 0
    %803 = vmatpush2.bf16.msra.mxu0 0
    %804 = vmatprep.subr.bf16.mxu0 0
    %805 = vmatpush2.bf16.msra.mxu0 0
    %806 = vmatprep.subr.bf16.mxu0 0
    %807 = vmatpush2.bf16.msra.mxu0 0
    %808 = vmatprep.subr.bf16.mxu0 0
    %809 = vmatpush2.bf16.msra.mxu0 0
    %810 = vmatprep.mubr.bf16.mxu0 0
    %811 = vmatmul.mubr.bf16.gmra.mxu0 %v770
    %v812 = vpop.f32.mrf.mxu0
    %v813 = vadd.f32 0.0, %v812
    %v814 = vpop.f32.mrf.mxu0
    %v815 = vpop.f32.mrf.mxu0
    %v816 = vadd.f32 0.0, %v815
    %v817 = vpop.f32.mrf.mxu0
    %818 = vmatprep.mubr.bf16.mxu0 0
    %819 = vmatmul.mubr.bf16.gmra.mxu0 %v773
    %v820 = vpop.f32.mrf.mxu0
    %v821 = vadd.f32 0.0, %v820
    %v822 = vpop.f32.mrf.mxu0
    %v823 = vpop.f32.mrf.mxu0
    %v824 = vadd.f32 0.0, %v823
    %v825 = vpop.f32.mrf.mxu0
    %826 = vmatprep.mubr.bf16.mxu0 0
    %827 = vmatmul.mubr.bf16.gmra.mxu0 %v776
    %v828 = vpop.f32.mrf.mxu0
    %v829 = vadd.f32 0.0, %v828
    %v830 = vpop.f32.mrf.mxu0
    %v831 = vpop.f32.mrf.mxu0
    %v832 = vadd.f32 0.0, %v831
    %v833 = vpop.f32.mrf.mxu0
    %834 = vdwg.mxu0
    %v835 = vrcp.pop %v741
    %v836 = vrcp.pop %v744
    %v837 = vrcp.pop %v747
    %v838 = vrcp.pop %v750
    %v839 = vrcp.pop %v753
    %v840 = vrcp.pop %v756
    %v841 = vmul.f32 %v813, %v835
    %v842 = vmul.f32 %v816, %v836
    %v843 = vmul.f32 %v821, %v837
    %v844 = vmul.f32 %v824, %v838
    %v845 = vmul.f32 %v829, %v839
    %v846 = vmul.f32 %v832, %v840
    %847 = vrot.lane.b32.xlu0 %v360, 112
    %v848 = vpop.permute.xlu0 %847
    %849 = vrot.lane.b32.xlu0 %v361, 112
    %v850 = vpop.permute.xlu0 %849
    %851 = vrot.lane.b32.xlu0 %v362, 112
    %v852 = vpop.permute.xlu0 %851
    %853 = vrot.lane.b32.xlu0 %v360, 80
    %v854 = vpop.permute.xlu0 %853
    %855 = vrot.lane.b32.xlu0 %v361, 80
    %v856 = vpop.permute.xlu0 %855
    %857 = vrot.lane.b32.xlu0 %v362, 80
    %v858 = vpop.permute.xlu0 %857
    %v860 = vsel %vm372, %v848, 0
    %v863 = vsel %vm372, %v850, 0
    %v866 = vsel %vm372, %v852, 0
    %v869 = vsel %vm372, %v854, 0
    %v872 = vsel %vm372, %v856, 0
    %v875 = vsel %vm372, %v858, 0
    %877 = vmatprep.subr.bf16.mxu0 0
    %878 = vmatpush1.bf16.xpose.msra.mxu0 0
    %879 = vmatprep.subr.bf16.mxu0 0
    %880 = vmatpush1.bf16.xpose.msra.mxu0 0
    %881 = vmatprep.subr.bf16.mxu0 0
    %882 = vmatpush1.bf16.xpose.msra.mxu0 0
    %883 = vmatprep.subr.bf16.mxu0 0
    %884 = vmatpush1.bf16.xpose.msra.mxu0 0
    %885 = vmatprep.subr.bf16.mxu0 0
    %886 = vmatpush1.bf16.xpose.msra.mxu0 0
    %887 = vmatprep.subr.bf16.mxu0 0
    %888 = vmatpush1.bf16.xpose.msra.mxu0 %v875
    %889 = vmatprep.subr.bf16.mxu0 0
    %890 = vmatpush1.bf16.xpose.msra.mxu0 %v872
    %891 = vmatprep.subr.bf16.mxu0 0
    %892 = vmatpush1.bf16.xpose.msra.mxu0 %v869
    %893 = vmatprep.subr.bf16.mxu0 0
    %894 = vmatpush2.bf16.xpose.msra.mxu0 0
    %895 = vmatprep.subr.bf16.mxu0 0
    %896 = vmatpush2.bf16.xpose.msra.mxu0 0
    %897 = vmatprep.subr.bf16.mxu0 0
    %898 = vmatpush2.bf16.xpose.msra.mxu0 0
    %899 = vmatprep.subr.bf16.mxu0 0
    %900 = vmatpush2.bf16.xpose.msra.mxu0 0
    %901 = vmatprep.subr.bf16.mxu0 0
    %902 = vmatpush2.bf16.xpose.msra.mxu0 0
    %903 = vmatprep.subr.bf16.mxu0 0
    %904 = vmatpush2.bf16.xpose.msra.mxu0 0
    %905 = vmatprep.subr.bf16.mxu0 0
    %906 = vmatpush2.bf16.xpose.msra.mxu0 0
    %907 = vmatprep.subr.bf16.mxu0 0
    %908 = vmatpush2.bf16.xpose.msra.mxu0 0
    %909 = vmatprep.mubr.bf16.mxu0 0
    %910 = vmatmul.mubr.bf16.gmra.mxu0 %v860
    %v911 = vpop.f32.mrf.mxu0
    %v912 = vadd.f32 0.0, %v911
    %v913 = vpop.f32.mrf.mxu0
    %v914 = vpop.f32.mrf.mxu0
    %v915 = vadd.f32 0.0, %v914
    %v916 = vpop.f32.mrf.mxu0
    %917 = vmatprep.mubr.bf16.mxu0 0
    %918 = vmatmul.mubr.bf16.gmra.mxu0 %v863
    %v919 = vpop.f32.mrf.mxu0
    %v920 = vadd.f32 0.0, %v919
    %v921 = vpop.f32.mrf.mxu0
    %v922 = vpop.f32.mrf.mxu0
    %v923 = vadd.f32 0.0, %v922
    %v924 = vpop.f32.mrf.mxu0
    %925 = vmatprep.mubr.bf16.mxu0 0
    %926 = vmatmul.mubr.bf16.gmra.mxu0 %v866
    %v927 = vpop.f32.mrf.mxu0
    %v928 = vadd.f32 0.0, %v927
    %v929 = vpop.f32.mrf.mxu0
    %v930 = vpop.f32.mrf.mxu0
    %v931 = vadd.f32 0.0, %v930
    %v932 = vpop.f32.mrf.mxu0
    %933 = vdwg.mxu0
    %v934 = vmul.f32 %v912, 0.35355338
    %v935 = vmul.f32 %v915, 0.35355338
    %v936 = vmul.f32 %v920, 0.35355338
    %v937 = vmul.f32 %v923, 0.35355338
    %v938 = vmul.f32 %v928, 0.35355338
    %v939 = vmul.f32 %v931, 0.35355338
    %v940 = vadd.f32 %v934, %v162
    %v941 = vadd.f32 %v935, %v163
    %v942 = vadd.f32 %v936, %v164
    %v943 = vadd.f32 %v937, %v165
    %v944 = vadd.f32 %v938, %v166
    %v945 = vadd.f32 %v939, %v167
    %v946 = vsel %vm58, %v940, -inf
    %947 = vmax.xlane.f32.xlu0 %v946
    %v948 = vpop.xlane.xlu0 %947
    %v949 = vsel %vm58, %v941, -inf
    %950 = vmax.xlane.f32.xlu0 %v949
    %v951 = vpop.xlane.xlu0 %950
    %v952 = vsel %vm58, %v942, -inf
    %953 = vmax.xlane.f32.xlu0 %v952
    %v954 = vpop.xlane.xlu0 %953
    %v955 = vsel %vm58, %v943, -inf
    %956 = vmax.xlane.f32.xlu0 %v955
    %v957 = vpop.xlane.xlu0 %956
    %v958 = vsel %vm58, %v944, -inf
    %959 = vmax.xlane.f32.xlu0 %v958
    %v960 = vpop.xlane.xlu0 %959
    %v961 = vsel %vm58, %v945, -inf
    %962 = vmax.xlane.f32.xlu0 %v961
    %v963 = vpop.xlane.xlu0 %962
    %v964 = vsub.f32 %v940, %v948
    %v965 = vsub.f32 %v941, %v951
    %v966 = vsub.f32 %v942, %v954
    %v967 = vsub.f32 %v943, %v957
    %v968 = vsub.f32 %v944, %v960
    %v969 = vsub.f32 %v945, %v963
    %v970 = vmul.f32 %v964, 1.442695
    %v971 = vpow.pop %v970
    %v972 = vmul.f32 %v965, 1.442695
    %v973 = vpow.pop %v972
    %v974 = vmul.f32 %v966, 1.442695
    %v975 = vpow.pop %v974
    %v976 = vmul.f32 %v967, 1.442695
    %v977 = vpow.pop %v976
    %v978 = vmul.f32 %v968, 1.442695
    %v979 = vpow.pop %v978
    %v980 = vmul.f32 %v969, 1.442695
    %v981 = vpow.pop %v980
    %v982 = vsel %vm58, %v971, 0.0
    %983 = vadd.xlane.f32.xlu0 %v982
    %v984 = vpop.xlane.xlu0 %983
    %v985 = vsel %vm58, %v973, 0.0
    %986 = vadd.xlane.f32.xlu0 %v985
    %v987 = vpop.xlane.xlu0 %986
    %v988 = vsel %vm58, %v975, 0.0
    %989 = vadd.xlane.f32.xlu0 %v988
    %v990 = vpop.xlane.xlu0 %989
    %v991 = vsel %vm58, %v977, 0.0
    %992 = vadd.xlane.f32.xlu0 %v991
    %v993 = vpop.xlane.xlu0 %992
    %v994 = vsel %vm58, %v979, 0.0
    %995 = vadd.xlane.f32.xlu0 %v994
    %v996 = vpop.xlane.xlu0 %995
    %v997 = vsel %vm58, %v981, 0.0
    %998 = vadd.xlane.f32.xlu0 %v997
    %v999 = vpop.xlane.xlu0 %998
    %v1000 = vpack.c.bf16 %v973, %v971
    %v1001 = vpack.c.bf16 %v977, %v975
    %v1002 = vpack.c.bf16 %v981, %v979
    %1003 = vrot.lane.b32.xlu0 %v360, 48
    %v1004 = vpop.permute.xlu0 %1003
    %1005 = vrot.lane.b32.xlu0 %v361, 48
    %v1006 = vpop.permute.xlu0 %1005
    %1007 = vrot.lane.b32.xlu0 %v362, 48
    %v1008 = vpop.permute.xlu0 %1007
    %v1013 = vsel %vm58, %v1000, 0
    %v1016 = vsel %vm58, %v1001, 0
    %v1019 = vsel %vm58, %v1002, 0
    %1021 = vmatprep.subr.bf16.mxu0 0
    %1022 = vmatpush1.bf16.msra.mxu0 0
    %1023 = vmatprep.subr.bf16.mxu0 0
    %1024 = vmatpush1.bf16.msra.mxu0 0
    %1025 = vmatprep.subr.bf16.mxu0 0
    %1026 = vmatpush1.bf16.msra.mxu0 0
    %1027 = vmatprep.subr.bf16.mxu0 0
    %1028 = vmatpush1.bf16.msra.mxu0 0
    %1029 = vmatprep.subr.bf16.mxu0 0
    %1030 = vmatpush1.bf16.msra.mxu0 0
    %1031 = vmatprep.subr.bf16.mxu0 0
    %1032 = vmatpush1.bf16.msra.mxu0 %v1008
    %1033 = vmatprep.subr.bf16.mxu0 0
    %1034 = vmatpush1.bf16.msra.mxu0 %v1006
    %1035 = vmatprep.subr.bf16.mxu0 0
    %1036 = vmatpush1.bf16.msra.mxu0 %v1004
    %1037 = vmatprep.subr.bf16.mxu0 0
    %1038 = vmatpush2.bf16.msra.mxu0 0
    %1039 = vmatprep.subr.bf16.mxu0 0
    %1040 = vmatpush2.bf16.msra.mxu0 0
    %1041 = vmatprep.subr.bf16.mxu0 0
    %1042 = vmatpush2.bf16.msra.mxu0 0
    %1043 = vmatprep.subr.bf16.mxu0 0
    %1044 = vmatpush2.bf16.msra.mxu0 0
    %1045 = vmatprep.subr.bf16.mxu0 0
    %1046 = vmatpush2.bf16.msra.mxu0 0
    %1047 = vmatprep.subr.bf16.mxu0 0
    %1048 = vmatpush2.bf16.msra.mxu0 0
    %1049 = vmatprep.subr.bf16.mxu0 0
    %1050 = vmatpush2.bf16.msra.mxu0 0
    %1051 = vmatprep.subr.bf16.mxu0 0
    %1052 = vmatpush2.bf16.msra.mxu0 0
    %1053 = vmatprep.mubr.bf16.mxu0 0
    %1054 = vmatmul.mubr.bf16.gmra.mxu0 %v1013
    %v1055 = vpop.f32.mrf.mxu0
    %v1056 = vadd.f32 0.0, %v1055
    %v1057 = vpop.f32.mrf.mxu0
    %v1058 = vpop.f32.mrf.mxu0
    %v1059 = vadd.f32 0.0, %v1058
    %v1060 = vpop.f32.mrf.mxu0
    %1061 = vmatprep.mubr.bf16.mxu0 0
    %1062 = vmatmul.mubr.bf16.gmra.mxu0 %v1016
    %v1063 = vpop.f32.mrf.mxu0
    %v1064 = vadd.f32 0.0, %v1063
    %v1065 = vpop.f32.mrf.mxu0
    %v1066 = vpop.f32.mrf.mxu0
    %v1067 = vadd.f32 0.0, %v1066
    %v1068 = vpop.f32.mrf.mxu0
    %1069 = vmatprep.mubr.bf16.mxu0 0
    %1070 = vmatmul.mubr.bf16.gmra.mxu0 %v1019
    %v1071 = vpop.f32.mrf.mxu0
    %v1072 = vadd.f32 0.0, %v1071
    %v1073 = vpop.f32.mrf.mxu0
    %v1074 = vpop.f32.mrf.mxu0
    %v1075 = vadd.f32 0.0, %v1074
    %v1076 = vpop.f32.mrf.mxu0
    %1077 = vdwg.mxu0
    %v1078 = vrcp.pop %v984
    %v1079 = vrcp.pop %v987
    %v1080 = vrcp.pop %v990
    %v1081 = vrcp.pop %v993
    %v1082 = vrcp.pop %v996
    %v1083 = vrcp.pop %v999
    %v1084 = vmul.f32 %v1056, %v1078
    %v1085 = vmul.f32 %v1059, %v1079
    %v1086 = vmul.f32 %v1064, %v1080
    %v1087 = vmul.f32 %v1067, %v1081
    %v1088 = vmul.f32 %v1072, %v1082
    %v1089 = vmul.f32 %v1075, %v1083
    %1090 = vrot.lane.b32.xlu0 %v360, 104
    %v1091 = vpop.permute.xlu0 %1090
    %1092 = vrot.lane.b32.xlu0 %v361, 104
    %v1093 = vpop.permute.xlu0 %1092
    %1094 = vrot.lane.b32.xlu0 %v362, 104
    %v1095 = vpop.permute.xlu0 %1094
    %1096 = vrot.lane.b32.xlu0 %v360, 72
    %v1097 = vpop.permute.xlu0 %1096
    %1098 = vrot.lane.b32.xlu0 %v361, 72
    %v1099 = vpop.permute.xlu0 %1098
    %1100 = vrot.lane.b32.xlu0 %v362, 72
    %v1101 = vpop.permute.xlu0 %1100
    %v1103 = vsel %vm372, %v1091, 0
    %v1106 = vsel %vm372, %v1093, 0
    %v1109 = vsel %vm372, %v1095, 0
    %v1112 = vsel %vm372, %v1097, 0
    %v1115 = vsel %vm372, %v1099, 0
    %v1118 = vsel %vm372, %v1101, 0
    %1120 = vmatprep.subr.bf16.mxu0 0
    %1121 = vmatpush1.bf16.xpose.msra.mxu0 0
    %1122 = vmatprep.subr.bf16.mxu0 0
    %1123 = vmatpush1.bf16.xpose.msra.mxu0 0
    %1124 = vmatprep.subr.bf16.mxu0 0
    %1125 = vmatpush1.bf16.xpose.msra.mxu0 0
    %1126 = vmatprep.subr.bf16.mxu0 0
    %1127 = vmatpush1.bf16.xpose.msra.mxu0 0
    %1128 = vmatprep.subr.bf16.mxu0 0
    %1129 = vmatpush1.bf16.xpose.msra.mxu0 0
    %1130 = vmatprep.subr.bf16.mxu0 0
    %1131 = vmatpush1.bf16.xpose.msra.mxu0 %v1118
    %1132 = vmatprep.subr.bf16.mxu0 0
    %1133 = vmatpush1.bf16.xpose.msra.mxu0 %v1115
    %1134 = vmatprep.subr.bf16.mxu0 0
    %1135 = vmatpush1.bf16.xpose.msra.mxu0 %v1112
    %1136 = vmatprep.subr.bf16.mxu0 0
    %1137 = vmatpush2.bf16.xpose.msra.mxu0 0
    %1138 = vmatprep.subr.bf16.mxu0 0
    %1139 = vmatpush2.bf16.xpose.msra.mxu0 0
    %1140 = vmatprep.subr.bf16.mxu0 0
    %1141 = vmatpush2.bf16.xpose.msra.mxu0 0
    %1142 = vmatprep.subr.bf16.mxu0 0
    %1143 = vmatpush2.bf16.xpose.msra.mxu0 0
    %1144 = vmatprep.subr.bf16.mxu0 0
    %1145 = vmatpush2.bf16.xpose.msra.mxu0 0
    %1146 = vmatprep.subr.bf16.mxu0 0
    %1147 = vmatpush2.bf16.xpose.msra.mxu0 0
    %1148 = vmatprep.subr.bf16.mxu0 0
    %1149 = vmatpush2.bf16.xpose.msra.mxu0 0
    %1150 = vmatprep.subr.bf16.mxu0 0
    %1151 = vmatpush2.bf16.xpose.msra.mxu0 0
    %1152 = vmatprep.mubr.bf16.mxu0 0
    %1153 = vmatmul.mubr.bf16.gmra.mxu0 %v1103
    %v1154 = vpop.f32.mrf.mxu0
    %v1155 = vadd.f32 0.0, %v1154
    %v1156 = vpop.f32.mrf.mxu0
    %v1157 = vpop.f32.mrf.mxu0
    %v1158 = vadd.f32 0.0, %v1157
    %v1159 = vpop.f32.mrf.mxu0
    %1160 = vmatprep.mubr.bf16.mxu0 0
    %1161 = vmatmul.mubr.bf16.gmra.mxu0 %v1106
    %v1162 = vpop.f32.mrf.mxu0
    %v1163 = vadd.f32 0.0, %v1162
    %v1164 = vpop.f32.mrf.mxu0
    %v1165 = vpop.f32.mrf.mxu0
    %v1166 = vadd.f32 0.0, %v1165
    %v1167 = vpop.f32.mrf.mxu0
    %1168 = vmatprep.mubr.bf16.mxu0 0
    %1169 = vmatmul.mubr.bf16.gmra.mxu0 %v1109
    %v1170 = vpop.f32.mrf.mxu0
    %v1171 = vadd.f32 0.0, %v1170
    %v1172 = vpop.f32.mrf.mxu0
    %v1173 = vpop.f32.mrf.mxu0
    %v1174 = vadd.f32 0.0, %v1173
    %v1175 = vpop.f32.mrf.mxu0
    %1176 = vdwg.mxu0
    %v1177 = vmul.f32 %v1155, 0.35355338
    %v1178 = vmul.f32 %v1158, 0.35355338
    %v1179 = vmul.f32 %v1163, 0.35355338
    %v1180 = vmul.f32 %v1166, 0.35355338
    %v1181 = vmul.f32 %v1171, 0.35355338
    %v1182 = vmul.f32 %v1174, 0.35355338
    %v1183 = vadd.f32 %v1177, %v162
    %v1184 = vadd.f32 %v1178, %v163
    %v1185 = vadd.f32 %v1179, %v164
    %v1186 = vadd.f32 %v1180, %v165
    %v1187 = vadd.f32 %v1181, %v166
    %v1188 = vadd.f32 %v1182, %v167
    %v1189 = vsel %vm58, %v1183, -inf
    %1190 = vmax.xlane.f32.xlu0 %v1189
    %v1191 = vpop.xlane.xlu0 %1190
    %v1192 = vsel %vm58, %v1184, -inf
    %1193 = vmax.xlane.f32.xlu0 %v1192
    %v1194 = vpop.xlane.xlu0 %1193
    %v1195 = vsel %vm58, %v1185, -inf
    %1196 = vmax.xlane.f32.xlu0 %v1195
    %v1197 = vpop.xlane.xlu0 %1196
    %v1198 = vsel %vm58, %v1186, -inf
    %1199 = vmax.xlane.f32.xlu0 %v1198
    %v1200 = vpop.xlane.xlu0 %1199
    %v1201 = vsel %vm58, %v1187, -inf
    %1202 = vmax.xlane.f32.xlu0 %v1201
    %v1203 = vpop.xlane.xlu0 %1202
    %v1204 = vsel %vm58, %v1188, -inf
    %1205 = vmax.xlane.f32.xlu0 %v1204
    %v1206 = vpop.xlane.xlu0 %1205
    %v1207 = vsub.f32 %v1183, %v1191
    %v1208 = vsub.f32 %v1184, %v1194
    %v1209 = vsub.f32 %v1185, %v1197
    %v1210 = vsub.f32 %v1186, %v1200
    %v1211 = vsub.f32 %v1187, %v1203
    %v1212 = vsub.f32 %v1188, %v1206
    %v1213 = vmul.f32 %v1207, 1.442695
    %v1214 = vpow.pop %v1213
    %v1215 = vmul.f32 %v1208, 1.442695
    %v1216 = vpow.pop %v1215
    %v1217 = vmul.f32 %v1209, 1.442695
    %v1218 = vpow.pop %v1217
    %v1219 = vmul.f32 %v1210, 1.442695
    %v1220 = vpow.pop %v1219
    %v1221 = vmul.f32 %v1211, 1.442695
    %v1222 = vpow.pop %v1221
    %v1223 = vmul.f32 %v1212, 1.442695
    %v1224 = vpow.pop %v1223
    %v1225 = vsel %vm58, %v1214, 0.0
    %1226 = vadd.xlane.f32.xlu0 %v1225
    %v1227 = vpop.xlane.xlu0 %1226
    %v1228 = vsel %vm58, %v1216, 0.0
    %1229 = vadd.xlane.f32.xlu0 %v1228
    %v1230 = vpop.xlane.xlu0 %1229
    %v1231 = vsel %vm58, %v1218, 0.0
    %1232 = vadd.xlane.f32.xlu0 %v1231
    %v1233 = vpop.xlane.xlu0 %1232
    %v1234 = vsel %vm58, %v1220, 0.0
    %1235 = vadd.xlane.f32.xlu0 %v1234
    %v1236 = vpop.xlane.xlu0 %1235
    %v1237 = vsel %vm58, %v1222, 0.0
    %1238 = vadd.xlane.f32.xlu0 %v1237
    %v1239 = vpop.xlane.xlu0 %1238
    %v1240 = vsel %vm58, %v1224, 0.0
    %1241 = vadd.xlane.f32.xlu0 %v1240
    %v1242 = vpop.xlane.xlu0 %1241
    %v1243 = vpack.c.bf16 %v1216, %v1214
    %v1244 = vpack.c.bf16 %v1220, %v1218
    %v1245 = vpack.c.bf16 %v1224, %v1222
    %1246 = vrot.lane.b32.xlu0 %v360, 40
    %v1247 = vpop.permute.xlu0 %1246
    %1248 = vrot.lane.b32.xlu0 %v361, 40
    %v1249 = vpop.permute.xlu0 %1248
    %1250 = vrot.lane.b32.xlu0 %v362, 40
    %v1251 = vpop.permute.xlu0 %1250
    %v1256 = vsel %vm58, %v1243, 0
    %v1259 = vsel %vm58, %v1244, 0
    %v1262 = vsel %vm58, %v1245, 0
    %1264 = vmatprep.subr.bf16.mxu0 0
    %1265 = vmatpush1.bf16.msra.mxu0 0
    %1266 = vmatprep.subr.bf16.mxu0 0
    %1267 = vmatpush1.bf16.msra.mxu0 0
    %1268 = vmatprep.subr.bf16.mxu0 0
    %1269 = vmatpush1.bf16.msra.mxu0 0
    %1270 = vmatprep.subr.bf16.mxu0 0
    %1271 = vmatpush1.bf16.msra.mxu0 0
    %1272 = vmatprep.subr.bf16.mxu0 0
    %1273 = vmatpush1.bf16.msra.mxu0 0
    %1274 = vmatprep.subr.bf16.mxu0 0
    %1275 = vmatpush1.bf16.msra.mxu0 %v1251
    %1276 = vmatprep.subr.bf16.mxu0 0
    %1277 = vmatpush1.bf16.msra.mxu0 %v1249
    %1278 = vmatprep.subr.bf16.mxu0 0
    %1279 = vmatpush1.bf16.msra.mxu0 %v1247
    %1280 = vmatprep.subr.bf16.mxu0 0
    %1281 = vmatpush2.bf16.msra.mxu0 0
    %1282 = vmatprep.subr.bf16.mxu0 0
    %1283 = vmatpush2.bf16.msra.mxu0 0
    %1284 = vmatprep.subr.bf16.mxu0 0
    %1285 = vmatpush2.bf16.msra.mxu0 0
    %1286 = vmatprep.subr.bf16.mxu0 0
    %1287 = vmatpush2.bf16.msra.mxu0 0
    %1288 = vmatprep.subr.bf16.mxu0 0
    %1289 = vmatpush2.bf16.msra.mxu0 0
    %1290 = vmatprep.subr.bf16.mxu0 0
    %1291 = vmatpush2.bf16.msra.mxu0 0
    %1292 = vmatprep.subr.bf16.mxu0 0
    %1293 = vmatpush2.bf16.msra.mxu0 0
    %1294 = vmatprep.subr.bf16.mxu0 0
    %1295 = vmatpush2.bf16.msra.mxu0 0
    %1296 = vmatprep.mubr.bf16.mxu0 0
    %1297 = vmatmul.mubr.bf16.gmra.mxu0 %v1256
    %v1298 = vpop.f32.mrf.mxu0
    %v1299 = vadd.f32 0.0, %v1298
    %v1300 = vpop.f32.mrf.mxu0
    %v1301 = vpop.f32.mrf.mxu0
    %v1302 = vadd.f32 0.0, %v1301
    %v1303 = vpop.f32.mrf.mxu0
    %1304 = vmatprep.mubr.bf16.mxu0 0
    %1305 = vmatmul.mubr.bf16.gmra.mxu0 %v1259
    %v1306 = vpop.f32.mrf.mxu0
    %v1307 = vadd.f32 0.0, %v1306
    %v1308 = vpop.f32.mrf.mxu0
    %v1309 = vpop.f32.mrf.mxu0
    %v1310 = vadd.f32 0.0, %v1309
    %v1311 = vpop.f32.mrf.mxu0
    %1312 = vmatprep.mubr.bf16.mxu0 0
    %1313 = vmatmul.mubr.bf16.gmra.mxu0 %v1262
    %v1314 = vpop.f32.mrf.mxu0
    %v1315 = vadd.f32 0.0, %v1314
    %v1316 = vpop.f32.mrf.mxu0
    %v1317 = vpop.f32.mrf.mxu0
    %v1318 = vadd.f32 0.0, %v1317
    %v1319 = vpop.f32.mrf.mxu0
    %1320 = vdwg.mxu0
    %v1321 = vrcp.pop %v1227
    %v1322 = vrcp.pop %v1230
    %v1323 = vrcp.pop %v1233
    %v1324 = vrcp.pop %v1236
    %v1325 = vrcp.pop %v1239
    %v1326 = vrcp.pop %v1242
    %v1327 = vmul.f32 %v1299, %v1321
    %v1328 = vmul.f32 %v1302, %v1322
    %v1329 = vmul.f32 %v1307, %v1323
    %v1330 = vmul.f32 %v1310, %v1324
    %v1331 = vmul.f32 %v1315, %v1325
    %v1332 = vmul.f32 %v1318, %v1326
    %1339 = vrot.lane.b32.xlu0 %v841, 8
    %v1340 = vpop.permute.xlu0 %1339
    %1341 = vrot.lane.b32.xlu0 %v842, 8
    %v1342 = vpop.permute.xlu0 %1341
    %1343 = vrot.lane.b32.xlu0 %v843, 8
    %v1344 = vpop.permute.xlu0 %1343
    %1345 = vrot.lane.b32.xlu0 %v844, 8
    %v1346 = vpop.permute.xlu0 %1345
    %1347 = vrot.lane.b32.xlu0 %v845, 8
    %v1348 = vpop.permute.xlu0 %1347
    %1349 = vrot.lane.b32.xlu0 %v846, 8
    %v1350 = vpop.permute.xlu0 %1349
    %1363 = vrot.lane.b32.xlu0 %v1084, 16
    %v1364 = vpop.permute.xlu0 %1363
    %1365 = vrot.lane.b32.xlu0 %v1085, 16
    %v1366 = vpop.permute.xlu0 %1365
    %1367 = vrot.lane.b32.xlu0 %v1086, 16
    %v1368 = vpop.permute.xlu0 %1367
    %1369 = vrot.lane.b32.xlu0 %v1087, 16
    %v1370 = vpop.permute.xlu0 %1369
    %1371 = vrot.lane.b32.xlu0 %v1088, 16
    %v1372 = vpop.permute.xlu0 %1371
    %1373 = vrot.lane.b32.xlu0 %v1089, 16
    %v1374 = vpop.permute.xlu0 %1373
    %1387 = vrot.lane.b32.xlu0 %v1327, 24
    %v1388 = vpop.permute.xlu0 %1387
    %1389 = vrot.lane.b32.xlu0 %v1328, 24
    %v1390 = vpop.permute.xlu0 %1389
    %1391 = vrot.lane.b32.xlu0 %v1329, 24
    %v1392 = vpop.permute.xlu0 %1391
    %1393 = vrot.lane.b32.xlu0 %v1330, 24
    %v1394 = vpop.permute.xlu0 %1393
    %1395 = vrot.lane.b32.xlu0 %v1331, 24
    %v1396 = vpop.permute.xlu0 %1395
    %1397 = vrot.lane.b32.xlu0 %v1332, 24
    %v1398 = vpop.permute.xlu0 %1397
    %v1405 = vsel %vm372, %v598, %v1340
    %v1406 = vsel %vm372, %v599, %v1342
    %v1407 = vsel %vm372, %v600, %v1344
    %v1408 = vsel %vm372, %v601, %v1346
    %v1409 = vsel %vm372, %v602, %v1348
    %v1410 = vsel %vm372, %v603, %v1350
    %vm1411 = vcmask 130048
    %v1412 = vsel %vm1411, %v1405, %v1364
    %v1413 = vsel %vm1411, %v1406, %v1366
    %v1414 = vsel %vm1411, %v1407, %v1368
    %v1415 = vsel %vm1411, %v1408, %v1370
    %v1416 = vsel %vm1411, %v1409, %v1372
    %v1417 = vsel %vm1411, %v1410, %v1374
    %vm1418 = vcmask 195584
    %v1419 = vsel %vm1418, %v1412, %v1388
    %v1420 = vsel %vm1418, %v1413, %v1390
    %v1421 = vsel %vm1418, %v1414, %v1392
    %v1422 = vsel %vm1418, %v1415, %v1394
    %v1423 = vsel %vm1418, %v1416, %v1396
    %v1424 = vsel %vm1418, %v1417, %v1398
    %v1425 = vpack.c.bf16 %v1420, %v1419
    %v1426 = vpack.c.bf16 %v1422, %v1421
    %v1427 = vpack.c.bf16 %v1424, %v1423
    %v1428 = vld [vmem:[%s2 + $0x28] sm:$0xf]
    %v1429 = vld [vmem:[%s2 + $0x2c] sm:$0xf]
    %v1430 = vld [vmem:[%s2 + $0x30] sm:$0xf]
    %v1431 = vld [vmem:[%s2 + $0x34] sm:$0xf]
    %v1436 = vunpack.c.l.b16 %v1428
    %v1437 = vunpack.c.l.b16 %v1429
    %v1438 = vunpack.c.l.b16 %v1430
    %v1439 = vunpack.c.l.b16 %v1431
    %v1440 = vpack.c.b16 %v1437, %v1436
    %v1441 = vpack.c.b16 %v1439, %v1438
    %v1445 = vsel %vm170, %v1425, 0
    %v1448 = vsel %vm170, %v1426, 0
    %v1451 = vsel %vm170, %v1427, 0
    %1453 = vmatprep.subr.bf16.mxu0 0
    %1454 = vmatpush1.bf16.msra.mxu0 0
    %1455 = vmatprep.subr.bf16.mxu0 0
    %1456 = vmatpush1.bf16.msra.mxu0 0
    %1457 = vmatprep.subr.bf16.mxu0 0
    %1458 = vmatpush1.bf16.msra.mxu0 0
    %1459 = vmatprep.subr.bf16.mxu0 0
    %1460 = vmatpush1.bf16.msra.mxu0 0
    %1461 = vmatprep.subr.bf16.mxu0 0
    %1462 = vmatpush1.bf16.msra.mxu0 0
    %1463 = vmatprep.subr.bf16.mxu0 0
    %1464 = vmatpush1.bf16.msra.mxu0 0
    %1465 = vmatprep.subr.bf16.mxu0 0
    %1466 = vmatpush1.bf16.msra.mxu0 %v1441
    %1467 = vmatprep.subr.bf16.mxu0 0
    %1468 = vmatpush1.bf16.msra.mxu0 %v1440
    %1469 = vmatprep.subr.bf16.mxu0 0
    %1470 = vmatpush2.bf16.msra.mxu0 0
    %1471 = vmatprep.subr.bf16.mxu0 0
    %1472 = vmatpush2.bf16.msra.mxu0 0
    %1473 = vmatprep.subr.bf16.mxu0 0
    %1474 = vmatpush2.bf16.msra.mxu0 0
    %1475 = vmatprep.subr.bf16.mxu0 0
    %1476 = vmatpush2.bf16.msra.mxu0 0
    %1477 = vmatprep.subr.bf16.mxu0 0
    %1478 = vmatpush2.bf16.msra.mxu0 0
    %1479 = vmatprep.subr.bf16.mxu0 0
    %1480 = vmatpush2.bf16.msra.mxu0 0
    %1481 = vmatprep.subr.bf16.mxu0 0
    %1482 = vmatpush2.bf16.msra.mxu0 0
    %1483 = vmatprep.subr.bf16.mxu0 0
    %1484 = vmatpush2.bf16.msra.mxu0 0
    %1485 = vmatprep.mubr.bf16.mxu0 0
    %1486 = vmatmul.mubr.bf16.gmra.mxu0 %v1445
    %v1487 = vpop.f32.mrf.mxu0
    %v1488 = vadd.f32 0.0, %v1487
    %v1489 = vpop.f32.mrf.mxu0
    %v1490 = vpop.f32.mrf.mxu0
    %v1491 = vadd.f32 0.0, %v1490
    %v1492 = vpop.f32.mrf.mxu0
    %1493 = vmatprep.mubr.bf16.mxu0 0
    %1494 = vmatmul.mubr.bf16.gmra.mxu0 %v1448
    %v1495 = vpop.f32.mrf.mxu0
    %v1496 = vadd.f32 0.0, %v1495
    %v1497 = vpop.f32.mrf.mxu0
    %v1498 = vpop.f32.mrf.mxu0
    %v1499 = vadd.f32 0.0, %v1498
    %v1500 = vpop.f32.mrf.mxu0
    %1501 = vmatprep.mubr.bf16.mxu0 0
    %1502 = vmatmul.mubr.bf16.gmra.mxu0 %v1451
    %v1503 = vpop.f32.mrf.mxu0
    %v1504 = vadd.f32 0.0, %v1503
    %v1505 = vpop.f32.mrf.mxu0
    %v1506 = vpop.f32.mrf.mxu0
    %v1507 = vadd.f32 0.0, %v1506
    %v1508 = vpop.f32.mrf.mxu0
    %1509 = vdwg.mxu0
    %v1510 = vadd.f32 %v103, %v1488
    %v1511 = vadd.f32 %v106, %v1491
    %v1512 = vadd.f32 %v111, %v1496
    %v1513 = vadd.f32 %v114, %v1499
    %v1514 = vadd.f32 %v119, %v1504
    %v1515 = vadd.f32 %v122, %v1507
    %v1516 = vld [vmem:[%s3 + $0x75] sm:$0x1]
    %v1517 = vlaneseq
    %v1518 = vshrl.u32 %v1517, 7
    %v1519 = vsub.s32 0, %v1518
    %v1520 = vrot.slane %v1516, %v1519
    %v1521 = vadd.f32 %v1510, %v1520
    %v1522 = vadd.f32 %v1511, %v1520
    %v1523 = vadd.f32 %v1512, %v1520
    %v1524 = vadd.f32 %v1513, %v1520
    %v1525 = vadd.f32 %v1514, %v1520
    %v1526 = vadd.f32 %v1515, %v1520
    %v1527 = vld [vmem:[%s3 + $0x72] sm:$0x1]
    %v1528 = vld [vmem:[%s3 + $0x73] sm:$0x1]
    %v1529 = vsel %vm170, %v1521, 0.0
    %1530 = vadd.xlane.f32.xlu0 %v1529
    %v1531 = vpop.xlane.xlu0 %1530
    %v1532 = vsel %vm170, %v1522, 0.0
    %1533 = vadd.xlane.f32.xlu0 %v1532
    %v1534 = vpop.xlane.xlu0 %1533
    %v1535 = vsel %vm170, %v1523, 0.0
    %1536 = vadd.xlane.f32.xlu0 %v1535
    %v1537 = vpop.xlane.xlu0 %1536
    %v1538 = vsel %vm170, %v1524, 0.0
    %1539 = vadd.xlane.f32.xlu0 %v1538
    %v1540 = vpop.xlane.xlu0 %1539
    %v1541 = vsel %vm170, %v1525, 0.0
    %1542 = vadd.xlane.f32.xlu0 %v1541
    %v1543 = vpop.xlane.xlu0 %1542
    %v1544 = vsel %vm170, %v1526, 0.0
    %1545 = vadd.xlane.f32.xlu0 %v1544
    %v1546 = vpop.xlane.xlu0 %1545
    %v1547 = vmul.f32 %v1531, %v189
    %v1548 = vmul.f32 %v1534, %v189
    %v1549 = vmul.f32 %v1537, %v189
    %v1550 = vmul.f32 %v1540, %v189
    %v1551 = vmul.f32 %v1543, %v189
    %v1552 = vmul.f32 %v1546, %v189
    %v1553 = vsub.f32 %v1521, %v1547
    %v1554 = vsub.f32 %v1522, %v1548
    %v1555 = vsub.f32 %v1523, %v1549
    %v1556 = vsub.f32 %v1524, %v1550
    %v1557 = vsub.f32 %v1525, %v1551
    %v1558 = vsub.f32 %v1526, %v1552
    %v1559 = vmul.f32 %v1553, %v1553
    %v1560 = vmul.f32 %v1554, %v1554
    %v1561 = vmul.f32 %v1555, %v1555
    %v1562 = vmul.f32 %v1556, %v1556
    %v1563 = vmul.f32 %v1557, %v1557
    %v1564 = vmul.f32 %v1558, %v1558
    %v1565 = vsel %vm170, %v1559, 0.0
    %1566 = vadd.xlane.f32.xlu0 %v1565
    %v1567 = vpop.xlane.xlu0 %1566
    %v1568 = vsel %vm170, %v1560, 0.0
    %1569 = vadd.xlane.f32.xlu0 %v1568
    %v1570 = vpop.xlane.xlu0 %1569
    %v1571 = vsel %vm170, %v1561, 0.0
    %1572 = vadd.xlane.f32.xlu0 %v1571
    %v1573 = vpop.xlane.xlu0 %1572
    %v1574 = vsel %vm170, %v1562, 0.0
    %1575 = vadd.xlane.f32.xlu0 %v1574
    %v1576 = vpop.xlane.xlu0 %1575
    %v1577 = vsel %vm170, %v1563, 0.0
    %1578 = vadd.xlane.f32.xlu0 %v1577
    %v1579 = vpop.xlane.xlu0 %1578
    %v1580 = vsel %vm170, %v1564, 0.0
    %1581 = vadd.xlane.f32.xlu0 %v1580
    %v1582 = vpop.xlane.xlu0 %1581
    %v1583 = vmul.f32 %v1567, %v189
    %v1584 = vmul.f32 %v1570, %v189
    %v1585 = vmul.f32 %v1573, %v189
    %v1586 = vmul.f32 %v1576, %v189
    %v1587 = vmul.f32 %v1579, %v189
    %v1588 = vmul.f32 %v1582, %v189
    %v1589 = vadd.f32 %v1583, 1e-05
    %v1590 = vadd.f32 %v1584, 1e-05
    %v1591 = vadd.f32 %v1585, 1e-05
    %v1592 = vadd.f32 %v1586, 1e-05
    %v1593 = vadd.f32 %v1587, 1e-05
    %v1594 = vadd.f32 %v1588, 1e-05
    %v1595 = vrsqrt.pop %v1589
    %v1596 = vrsqrt.pop %v1590
    %v1597 = vrsqrt.pop %v1591
    %v1598 = vrsqrt.pop %v1592
    %v1599 = vrsqrt.pop %v1593
    %v1600 = vrsqrt.pop %v1594
    %v1601 = vmul.f32 %v1553, %v1595
    %v1602 = vmul.f32 %v1554, %v1596
    %v1603 = vmul.f32 %v1555, %v1597
    %v1604 = vmul.f32 %v1556, %v1598
    %v1605 = vmul.f32 %v1557, %v1599
    %v1606 = vmul.f32 %v1558, %v1600
    %v1607 = vlaneseq
    %v1608 = vshrl.u32 %v1607, 7
    %v1609 = vsub.s32 0, %v1608
    %v1610 = vrot.slane %v1527, %v1609
    %v1611 = vmul.f32 %v1601, %v1610
    %v1612 = vmul.f32 %v1602, %v1610
    %v1613 = vmul.f32 %v1603, %v1610
    %v1614 = vmul.f32 %v1604, %v1610
    %v1615 = vmul.f32 %v1605, %v1610
    %v1616 = vmul.f32 %v1606, %v1610
    %v1617 = vlaneseq
    %v1618 = vshrl.u32 %v1617, 7
    %v1619 = vsub.s32 0, %v1618
    %v1620 = vrot.slane %v1528, %v1619
    %v1621 = vadd.f32 %v1611, %v1620
    %v1622 = vadd.f32 %v1612, %v1620
    %v1623 = vadd.f32 %v1613, %v1620
    %v1624 = vadd.f32 %v1614, %v1620
    %v1625 = vadd.f32 %v1615, %v1620
    %v1626 = vadd.f32 %v1616, %v1620
    %v1627 = vpack.c.bf16 %v1622, %v1621
    %v1628 = vpack.c.bf16 %v1624, %v1623
    %v1629 = vpack.c.bf16 %v1626, %v1625
    %v1630 = vld [vmem:[%s2 + $0x38] sm:$0xf]
    %v1631 = vld [vmem:[%s2 + $0x3c] sm:$0xf]
    %v1632 = vld [vmem:[%s2 + $0x40] sm:$0xf]
    %v1633 = vld [vmem:[%s2 + $0x44] sm:$0xf]
    %v1634 = vld [vmem:[%s3 + $0x76] sm:$0x1]
    %v1635 = vlaneseq
    %v1636 = vshrl.u32 %v1635, 7
    %v1637 = vsub.s32 0, %v1636
    %v1638 = vrot.slane %v1634, %v1637
    %v1643 = vunpack.c.l.b16 %v1630
    %v1644 = vunpack.c.l.b16 %v1631
    %v1645 = vunpack.c.l.b16 %v1632
    %v1646 = vunpack.c.l.b16 %v1633
    %v1647 = vpack.c.b16 %v1644, %v1643
    %v1648 = vpack.c.b16 %v1646, %v1645
    %v1652 = vsel %vm170, %v1627, 0
    %v1655 = vsel %vm170, %v1628, 0
    %v1658 = vsel %vm170, %v1629, 0
    %1660 = vmatprep.subr.bf16.mxu0 0
    %1661 = vmatpush1.bf16.msra.mxu0 0
    %1662 = vmatprep.subr.bf16.mxu0 0
    %1663 = vmatpush1.bf16.msra.mxu0 0
    %1664 = vmatprep.subr.bf16.mxu0 0
    %1665 = vmatpush1.bf16.msra.mxu0 0
    %1666 = vmatprep.subr.bf16.mxu0 0
    %1667 = vmatpush1.bf16.msra.mxu0 0
    %1668 = vmatprep.subr.bf16.mxu0 0
    %1669 = vmatpush1.bf16.msra.mxu0 0
    %1670 = vmatprep.subr.bf16.mxu0 0
    %1671 = vmatpush1.bf16.msra.mxu0 0
    %1672 = vmatprep.subr.bf16.mxu0 0
    %1673 = vmatpush1.bf16.msra.mxu0 %v1648
    %1674 = vmatprep.subr.bf16.mxu0 0
    %1675 = vmatpush1.bf16.msra.mxu0 %v1647
    %1676 = vmatprep.subr.bf16.mxu0 0
    %1677 = vmatpush2.bf16.msra.mxu0 0
    %1678 = vmatprep.subr.bf16.mxu0 0
    %1679 = vmatpush2.bf16.msra.mxu0 0
    %1680 = vmatprep.subr.bf16.mxu0 0
    %1681 = vmatpush2.bf16.msra.mxu0 0
    %1682 = vmatprep.subr.bf16.mxu0 0
    %1683 = vmatpush2.bf16.msra.mxu0 0
    %1684 = vmatprep.subr.bf16.mxu0 0
    %1685 = vmatpush2.bf16.msra.mxu0 0
    %1686 = vmatprep.subr.bf16.mxu0 0
    %1687 = vmatpush2.bf16.msra.mxu0 0
    %1688 = vmatprep.subr.bf16.mxu0 0
    %1689 = vmatpush2.bf16.msra.mxu0 0
    %1690 = vmatprep.subr.bf16.mxu0 0
    %1691 = vmatpush2.bf16.msra.mxu0 0
    %1692 = vmatprep.mubr.bf16.mxu0 0
    %1693 = vmatmul.mubr.bf16.gmra.mxu0 %v1652
    %v1694 = vpop.f32.mrf.mxu0
    %v1695 = vadd.f32 %v1638, %v1694
    %v1696 = vpop.f32.mrf.mxu0
    %v1697 = vpop.f32.mrf.mxu0
    %v1698 = vadd.f32 %v1638, %v1697
    %v1699 = vpop.f32.mrf.mxu0
    %1700 = vmatprep.mubr.bf16.mxu0 0
    %1701 = vmatmul.mubr.bf16.gmra.mxu0 %v1655
    %v1702 = vpop.f32.mrf.mxu0
    %v1703 = vadd.f32 %v1638, %v1702
    %v1704 = vpop.f32.mrf.mxu0
    %v1705 = vpop.f32.mrf.mxu0
    %v1706 = vadd.f32 %v1638, %v1705
    %v1707 = vpop.f32.mrf.mxu0
    %1708 = vmatprep.mubr.bf16.mxu0 0
    %1709 = vmatmul.mubr.bf16.gmra.mxu0 %v1658
    %v1710 = vpop.f32.mrf.mxu0
    %v1711 = vadd.f32 %v1638, %v1710
    %v1712 = vpop.f32.mrf.mxu0
    %v1713 = vpop.f32.mrf.mxu0
    %v1714 = vadd.f32 %v1638, %v1713
    %v1715 = vpop.f32.mrf.mxu0
    %1716 = vdwg.mxu0
    %v1717 = vmul.f32 %v1695, %v1695
    %v1718 = vmul.f32 %v1698, %v1698
    %v1719 = vmul.f32 %v1703, %v1703
    %v1720 = vmul.f32 %v1706, %v1706
    %v1721 = vmul.f32 %v1711, %v1711
    %v1722 = vmul.f32 %v1714, %v1714
    %v1723 = vmul.f32 %v1695, %v1717
    %v1724 = vmul.f32 %v1698, %v1718
    %v1725 = vmul.f32 %v1703, %v1719
    %v1726 = vmul.f32 %v1706, %v1720
    %v1727 = vmul.f32 %v1711, %v1721
    %v1728 = vmul.f32 %v1714, %v1722
    %v1729 = vmul.f32 %v1723, 0.044715
    %v1730 = vmul.f32 %v1724, 0.044715
    %v1731 = vmul.f32 %v1725, 0.044715
    %v1732 = vmul.f32 %v1726, 0.044715
    %v1733 = vmul.f32 %v1727, 0.044715
    %v1734 = vmul.f32 %v1728, 0.044715
    %v1735 = vadd.f32 %v1695, %v1729
    %v1736 = vadd.f32 %v1698, %v1730
    %v1737 = vadd.f32 %v1703, %v1731
    %v1738 = vadd.f32 %v1706, %v1732
    %v1739 = vadd.f32 %v1711, %v1733
    %v1740 = vadd.f32 %v1714, %v1734
    %v1741 = vmul.f32 %v1735, 0.7978846
    %v1742 = vmul.f32 %v1736, 0.7978846
    %v1743 = vmul.f32 %v1737, 0.7978846
    %v1744 = vmul.f32 %v1738, 0.7978846
    %v1745 = vmul.f32 %v1739, 0.7978846
    %v1746 = vmul.f32 %v1740, 0.7978846
    %v1747 = vtanh.pop %v1741
    %v1748 = vtanh.pop %v1742
    %v1749 = vtanh.pop %v1743
    %v1750 = vtanh.pop %v1744
    %v1751 = vtanh.pop %v1745
    %v1752 = vtanh.pop %v1746
    %v1753 = vadd.f32 %v1747, 1.0
    %v1754 = vadd.f32 %v1748, 1.0
    %v1755 = vadd.f32 %v1749, 1.0
    %v1756 = vadd.f32 %v1750, 1.0
    %v1757 = vadd.f32 %v1751, 1.0
    %v1758 = vadd.f32 %v1752, 1.0
    %v1759 = vmul.f32 %v1753, 0.5
    %v1760 = vmul.f32 %v1754, 0.5
    %v1761 = vmul.f32 %v1755, 0.5
    %v1762 = vmul.f32 %v1756, 0.5
    %v1763 = vmul.f32 %v1757, 0.5
    %v1764 = vmul.f32 %v1758, 0.5
    %v1765 = vmul.f32 %v1695, %v1759
    %v1766 = vmul.f32 %v1698, %v1760
    %v1767 = vmul.f32 %v1703, %v1761
    %v1768 = vmul.f32 %v1706, %v1762
    %v1769 = vmul.f32 %v1711, %v1763
    %v1770 = vmul.f32 %v1714, %v1764
    %v1771 = vpack.c.bf16 %v1766, %v1765
    %v1772 = vpack.c.bf16 %v1768, %v1767
    %v1773 = vpack.c.bf16 %v1770, %v1769
    %v1774 = vld [vmem:[%s2 + $0x48] sm:$0xf]
    %v1775 = vld [vmem:[%s2 + $0x4c] sm:$0xf]
    %v1776 = vld [vmem:[%s2 + $0x50] sm:$0xf]
    %v1777 = vld [vmem:[%s2 + $0x54] sm:$0xf]
    %v1778 = vld [vmem:[%s2 + $0x58] sm:$0xf]
    %v1779 = vld [vmem:[%s2 + $0x5c] sm:$0xf]
    %v1780 = vld [vmem:[%s2 + $0x60] sm:$0xf]
    %v1781 = vld [vmem:[%s2 + $0x64] sm:$0xf]
    %v1782 = vld [vmem:[%s2 + $0x68] sm:$0xf]
    %v1783 = vld [vmem:[%s2 + $0x6c] sm:$0xf]
    %v1784 = vld [vmem:[%s2 + $0x70] sm:$0xf]
    %v1785 = vld [vmem:[%s2 + $0x74] sm:$0xf]
    %v1786 = vld [vmem:[%s2 + $0x78] sm:$0xf]
    %v1787 = vld [vmem:[%s2 + $0x7c] sm:$0xf]
    %v1788 = vld [vmem:[%s2 + $0x80] sm:$0xf]
    %v1789 = vld [vmem:[%s2 + $0x84] sm:$0xf]
    %v1806 = vunpack.c.l.b16 %v1774
    %v1807 = vunpack.c.l.b16 %v1775
    %v1808 = vunpack.c.l.b16 %v1776
    %v1809 = vunpack.c.l.b16 %v1777
    %v1810 = vunpack.c.l.b16 %v1778
    %v1811 = vunpack.c.l.b16 %v1779
    %v1812 = vunpack.c.l.b16 %v1780
    %v1813 = vunpack.c.l.b16 %v1781
    %v1814 = vunpack.c.l.b16 %v1782
    %v1815 = vunpack.c.l.b16 %v1783
    %v1816 = vunpack.c.l.b16 %v1784
    %v1817 = vunpack.c.l.b16 %v1785
    %v1818 = vunpack.c.l.b16 %v1786
    %v1819 = vunpack.c.l.b16 %v1787
    %v1820 = vunpack.c.l.b16 %v1788
    %v1821 = vunpack.c.l.b16 %v1789
    %v1822 = vpack.c.b16 %v1807, %v1806
    %v1823 = vpack.c.b16 %v1809, %v1808
    %v1824 = vpack.c.b16 %v1811, %v1810
    %v1825 = vpack.c.b16 %v1813, %v1812
    %v1826 = vpack.c.b16 %v1815, %v1814
    %v1827 = vpack.c.b16 %v1817, %v1816
    %v1828 = vpack.c.b16 %v1819, %v1818
    %v1829 = vpack.c.b16 %v1821, %v1820
    %1838 = vmatprep.subr.bf16.mxu0 0
    %1839 = vmatpush1.bf16.msra.mxu0 %v1829
    %1840 = vmatprep.subr.bf16.mxu0 0
    %1841 = vmatpush1.bf16.msra.mxu0 %v1828
    %1842 = vmatprep.subr.bf16.mxu0 0
    %1843 = vmatpush1.bf16.msra.mxu0 %v1827
    %1844 = vmatprep.subr.bf16.mxu0 0
    %1845 = vmatpush1.bf16.msra.mxu0 %v1826
    %1846 = vmatprep.subr.bf16.mxu0 0
    %1847 = vmatpush1.bf16.msra.mxu0 %v1825
    %1848 = vmatprep.subr.bf16.mxu0 0
    %1849 = vmatpush1.bf16.msra.mxu0 %v1824
    %1850 = vmatprep.subr.bf16.mxu0 0
    %1851 = vmatpush1.bf16.msra.mxu0 %v1823
    %1852 = vmatprep.subr.bf16.mxu0 0
    %1853 = vmatpush1.bf16.msra.mxu0 %v1822
    %1854 = vmatprep.subr.bf16.mxu0 0
    %1855 = vmatpush2.bf16.msra.mxu0 0
    %1856 = vmatprep.subr.bf16.mxu0 0
    %1857 = vmatpush2.bf16.msra.mxu0 0
    %1858 = vmatprep.subr.bf16.mxu0 0
    %1859 = vmatpush2.bf16.msra.mxu0 0
    %1860 = vmatprep.subr.bf16.mxu0 0
    %1861 = vmatpush2.bf16.msra.mxu0 0
    %1862 = vmatprep.subr.bf16.mxu0 0
    %1863 = vmatpush2.bf16.msra.mxu0 0
    %1864 = vmatprep.subr.bf16.mxu0 0
    %1865 = vmatpush2.bf16.msra.mxu0 0
    %1866 = vmatprep.subr.bf16.mxu0 0
    %1867 = vmatpush2.bf16.msra.mxu0 0
    %1868 = vmatprep.subr.bf16.mxu0 0
    %1869 = vmatpush2.bf16.msra.mxu0 0
    %1870 = vmatprep.mubr.bf16.mxu0 0
    %1871 = vmatmul.mubr.bf16.gmra.mxu0 %v1771
    %v1872 = vpop.f32.mrf.mxu0
    %v1873 = vadd.f32 0.0, %v1872
    %v1874 = vpop.f32.mrf.mxu0
    %v1875 = vpop.f32.mrf.mxu0
    %v1876 = vadd.f32 0.0, %v1875
    %v1877 = vpop.f32.mrf.mxu0
    %1878 = vmatprep.mubr.bf16.mxu0 0
    %1879 = vmatmul.mubr.bf16.gmra.mxu0 %v1772
    %v1880 = vpop.f32.mrf.mxu0
    %v1881 = vadd.f32 0.0, %v1880
    %v1882 = vpop.f32.mrf.mxu0
    %v1883 = vpop.f32.mrf.mxu0
    %v1884 = vadd.f32 0.0, %v1883
    %v1885 = vpop.f32.mrf.mxu0
    %1886 = vmatprep.mubr.bf16.mxu0 0
    %1887 = vmatmul.mubr.bf16.gmra.mxu0 %v1773
    %v1888 = vpop.f32.mrf.mxu0
    %v1889 = vadd.f32 0.0, %v1888
    %v1890 = vpop.f32.mrf.mxu0
    %v1891 = vpop.f32.mrf.mxu0
    %v1892 = vadd.f32 0.0, %v1891
    %v1893 = vpop.f32.mrf.mxu0
    %1894 = vdwg.mxu0
    %v1895 = vadd.f32 %v1521, %v1873
    %v1896 = vadd.f32 %v1522, %v1876
    %v1897 = vadd.f32 %v1523, %v1881
    %v1898 = vadd.f32 %v1524, %v1884
    %v1899 = vadd.f32 %v1525, %v1889
    %v1900 = vadd.f32 %v1526, %v1892
    %v1901 = vld [vmem:[%s3 + $0x77] sm:$0x1]
    %v1902 = vlaneseq
    %v1903 = vshrl.u32 %v1902, 7
    %v1904 = vsub.s32 0, %v1903
    %v1905 = vrot.slane %v1901, %v1904
    %v1906 = vadd.f32 %v1895, %v1905
    %v1907 = vadd.f32 %v1896, %v1905
    %v1908 = vadd.f32 %v1897, %v1905
    %v1909 = vadd.f32 %v1898, %v1905
    %v1910 = vadd.f32 %v1899, %v1905
    %v1911 = vadd.f32 %v1900, %v1905
    %v1912 = vld [vmem:[%s3 + $0x78] sm:$0x1]
    %v1913 = vld [vmem:[%s3 + $0x79] sm:$0x1]
    %v1914 = vsel %vm170, %v1906, 0.0
    %1915 = vadd.xlane.f32.xlu0 %v1914
    %v1916 = vpop.xlane.xlu0 %1915
    %v1917 = vsel %vm170, %v1907, 0.0
    %1918 = vadd.xlane.f32.xlu0 %v1917
    %v1919 = vpop.xlane.xlu0 %1918
    %v1920 = vsel %vm170, %v1908, 0.0
    %1921 = vadd.xlane.f32.xlu0 %v1920
    %v1922 = vpop.xlane.xlu0 %1921
    %v1923 = vsel %vm170, %v1909, 0.0
    %1924 = vadd.xlane.f32.xlu0 %v1923
    %v1925 = vpop.xlane.xlu0 %1924
    %v1926 = vsel %vm170, %v1910, 0.0
    %1927 = vadd.xlane.f32.xlu0 %v1926
    %v1928 = vpop.xlane.xlu0 %1927
    %v1929 = vsel %vm170, %v1911, 0.0
    %1930 = vadd.xlane.f32.xlu0 %v1929
    %v1931 = vpop.xlane.xlu0 %1930
    %v1932 = vmul.f32 %v1916, %v189
    %v1933 = vmul.f32 %v1919, %v189
    %v1934 = vmul.f32 %v1922, %v189
    %v1935 = vmul.f32 %v1925, %v189
    %v1936 = vmul.f32 %v1928, %v189
    %v1937 = vmul.f32 %v1931, %v189
    %v1938 = vsub.f32 %v1906, %v1932
    %v1939 = vsub.f32 %v1907, %v1933
    %v1940 = vsub.f32 %v1908, %v1934
    %v1941 = vsub.f32 %v1909, %v1935
    %v1942 = vsub.f32 %v1910, %v1936
    %v1943 = vsub.f32 %v1911, %v1937
    %v1944 = vmul.f32 %v1938, %v1938
    %v1945 = vmul.f32 %v1939, %v1939
    %v1946 = vmul.f32 %v1940, %v1940
    %v1947 = vmul.f32 %v1941, %v1941
    %v1948 = vmul.f32 %v1942, %v1942
    %v1949 = vmul.f32 %v1943, %v1943
    %v1950 = vsel %vm170, %v1944, 0.0
    %1951 = vadd.xlane.f32.xlu0 %v1950
    %v1952 = vpop.xlane.xlu0 %1951
    %v1953 = vsel %vm170, %v1945, 0.0
    %1954 = vadd.xlane.f32.xlu0 %v1953
    %v1955 = vpop.xlane.xlu0 %1954
    %v1956 = vsel %vm170, %v1946, 0.0
    %1957 = vadd.xlane.f32.xlu0 %v1956
    %v1958 = vpop.xlane.xlu0 %1957
    %v1959 = vsel %vm170, %v1947, 0.0
    %1960 = vadd.xlane.f32.xlu0 %v1959
    %v1961 = vpop.xlane.xlu0 %1960
    %v1962 = vsel %vm170, %v1948, 0.0
    %1963 = vadd.xlane.f32.xlu0 %v1962
    %v1964 = vpop.xlane.xlu0 %1963
    %v1965 = vsel %vm170, %v1949, 0.0
    %1966 = vadd.xlane.f32.xlu0 %v1965
    %v1967 = vpop.xlane.xlu0 %1966
    %v1968 = vmul.f32 %v1952, %v189
    %v1969 = vmul.f32 %v1955, %v189
    %v1970 = vmul.f32 %v1958, %v189
    %v1971 = vmul.f32 %v1961, %v189
    %v1972 = vmul.f32 %v1964, %v189
    %v1973 = vmul.f32 %v1967, %v189
    %v1974 = vadd.f32 %v1968, 1e-05
    %v1975 = vadd.f32 %v1969, 1e-05
    %v1976 = vadd.f32 %v1970, 1e-05
    %v1977 = vadd.f32 %v1971, 1e-05
    %v1978 = vadd.f32 %v1972, 1e-05
    %v1979 = vadd.f32 %v1973, 1e-05
    %v1980 = vrsqrt.pop %v1974
    %v1981 = vrsqrt.pop %v1975
    %v1982 = vrsqrt.pop %v1976
    %v1983 = vrsqrt.pop %v1977
    %v1984 = vrsqrt.pop %v1978
    %v1985 = vrsqrt.pop %v1979
    %v1986 = vmul.f32 %v1938, %v1980
    %v1987 = vmul.f32 %v1939, %v1981
    %v1988 = vmul.f32 %v1940, %v1982
    %v1989 = vmul.f32 %v1941, %v1983
    %v1990 = vmul.f32 %v1942, %v1984
    %v1991 = vmul.f32 %v1943, %v1985
    %v1992 = vlaneseq
    %v1993 = vshrl.u32 %v1992, 7
    %v1994 = vsub.s32 0, %v1993
    %v1995 = vrot.slane %v1912, %v1994
    %v1996 = vmul.f32 %v1986, %v1995
    %v1997 = vmul.f32 %v1987, %v1995
    %v1998 = vmul.f32 %v1988, %v1995
    %v1999 = vmul.f32 %v1989, %v1995
    %v2000 = vmul.f32 %v1990, %v1995
    %v2001 = vmul.f32 %v1991, %v1995
    %v2002 = vlaneseq
    %v2003 = vshrl.u32 %v2002, 7
    %v2004 = vsub.s32 0, %v2003
    %v2005 = vrot.slane %v1913, %v2004
    %v2006 = vadd.f32 %v1996, %v2005
    %v2007 = vadd.f32 %v1997, %v2005
    %v2008 = vadd.f32 %v1998, %v2005
    %v2009 = vadd.f32 %v1999, %v2005
    %v2010 = vadd.f32 %v2000, %v2005
    %v2011 = vadd.f32 %v2001, %v2005
    %v2012 = vld [vmem:[%s3 + $0x30] sm:$0xff]
    %v2013 = vld [vmem:[%s3 + $0x38] sm:$0xff]
    %v2014 = vld [vmem:[%s3 + $0x40] sm:$0xff]
    %v2015 = vld [vmem:[%s3 + $0x48] sm:$0xff]
    %v2016 = vld [vmem:[%s3 + $0x7a] sm:$0x1]
    %v2017 = vld [vmem:[%s3 + $0x7b] sm:$0x1]
    %v2018 = vsel %vm170, %v2012, 0.0
    %2019 = vadd.xlane.f32.xlu0 %v2018
    %v2020 = vpop.xlane.xlu0 %2019
    %v2021 = vsel %vm170, %v2013, 0.0
    %2022 = vadd.xlane.f32.xlu0 %v2021
    %v2023 = vpop.xlane.xlu0 %2022
    %v2024 = vsel %vm170, %v2014, 0.0
    %2025 = vadd.xlane.f32.xlu0 %v2024
    %v2026 = vpop.xlane.xlu0 %2025
    %v2027 = vsel %vm170, %v2015, 0.0
    %2028 = vadd.xlane.f32.xlu0 %v2027
    %v2029 = vpop.xlane.xlu0 %2028
    %v2030 = vmul.f32 %v2020, %v189
    %v2031 = vmul.f32 %v2023, %v189
    %v2032 = vmul.f32 %v2026, %v189
    %v2033 = vmul.f32 %v2029, %v189
    %v2034 = vsub.f32 %v2012, %v2030
    %v2035 = vsub.f32 %v2013, %v2031
    %v2036 = vsub.f32 %v2014, %v2032
    %v2037 = vsub.f32 %v2015, %v2033
    %v2038 = vmul.f32 %v2034, %v2034
    %v2039 = vmul.f32 %v2035, %v2035
    %v2040 = vmul.f32 %v2036, %v2036
    %v2041 = vmul.f32 %v2037, %v2037
    %v2042 = vsel %vm170, %v2038, 0.0
    %2043 = vadd.xlane.f32.xlu0 %v2042
    %v2044 = vpop.xlane.xlu0 %2043
    %v2045 = vsel %vm170, %v2039, 0.0
    %2046 = vadd.xlane.f32.xlu0 %v2045
    %v2047 = vpop.xlane.xlu0 %2046
    %v2048 = vsel %vm170, %v2040, 0.0
    %2049 = vadd.xlane.f32.xlu0 %v2048
    %v2050 = vpop.xlane.xlu0 %2049
    %v2051 = vsel %vm170, %v2041, 0.0
    %2052 = vadd.xlane.f32.xlu0 %v2051
    %v2053 = vpop.xlane.xlu0 %2052
    %v2054 = vmul.f32 %v2044, %v189
    %v2055 = vmul.f32 %v2047, %v189
    %v2056 = vmul.f32 %v2050, %v189
    %v2057 = vmul.f32 %v2053, %v189
    %v2058 = vadd.f32 %v2054, 1e-05
    %v2059 = vadd.f32 %v2055, 1e-05
    %v2060 = vadd.f32 %v2056, 1e-05
    %v2061 = vadd.f32 %v2057, 1e-05
    %v2062 = vrsqrt.pop %v2058
    %v2063 = vrsqrt.pop %v2059
    %v2064 = vrsqrt.pop %v2060
    %v2065 = vrsqrt.pop %v2061
    %v2066 = vmul.f32 %v2034, %v2062
    %v2067 = vmul.f32 %v2035, %v2063
    %v2068 = vmul.f32 %v2036, %v2064
    %v2069 = vmul.f32 %v2037, %v2065
    %v2070 = vlaneseq
    %v2071 = vshrl.u32 %v2070, 7
    %v2072 = vsub.s32 0, %v2071
    %v2073 = vrot.slane %v2016, %v2072
    %v2074 = vmul.f32 %v2066, %v2073
    %v2075 = vmul.f32 %v2067, %v2073
    %v2076 = vmul.f32 %v2068, %v2073
    %v2077 = vmul.f32 %v2069, %v2073
    %v2078 = vlaneseq
    %v2079 = vshrl.u32 %v2078, 7
    %v2080 = vsub.s32 0, %v2079
    %v2081 = vrot.slane %v2017, %v2080
    %v2082 = vadd.f32 %v2074, %v2081
    %v2083 = vadd.f32 %v2075, %v2081
    %v2084 = vadd.f32 %v2076, %v2081
    %v2085 = vadd.f32 %v2077, %v2081
    %v2086 = vpack.c.bf16 %v2083, %v2082
    %v2087 = vpack.c.bf16 %v2085, %v2084
    %v2088 = vld [vmem:[%s2 + $0x88] sm:$0xf]
    %v2089 = vld [vmem:[%s2 + $0x8c] sm:$0xf]
    %v2090 = vld [vmem:[%s2 + $0x90] sm:$0xf]
    %v2091 = vld [vmem:[%s2 + $0x94] sm:$0xf]
    %v2092 = vld [vmem:[%s3 + $0x80] sm:$0x1]
    %v2093 = vlaneseq
    %v2094 = vshrl.u32 %v2093, 7
    %v2095 = vsub.s32 0, %v2094
    %v2096 = vrot.slane %v2092, %v2095
    %v2101 = vunpack.c.l.b16 %v2088
    %v2102 = vunpack.c.l.b16 %v2089
    %v2103 = vunpack.c.l.b16 %v2090
    %v2104 = vunpack.c.l.b16 %v2091
    %v2105 = vpack.c.b16 %v2102, %v2101
    %v2106 = vpack.c.b16 %v2104, %v2103
    %v2110 = vsel %vm170, %v2086, 0
    %v2113 = vsel %vm170, %v2087, 0
    %2115 = vmatprep.subr.bf16.mxu0 0
    %2116 = vmatpush1.bf16.msra.mxu0 0
    %2117 = vmatprep.subr.bf16.mxu0 0
    %2118 = vmatpush1.bf16.msra.mxu0 0
    %2119 = vmatprep.subr.bf16.mxu0 0
    %2120 = vmatpush1.bf16.msra.mxu0 0
    %2121 = vmatprep.subr.bf16.mxu0 0
    %2122 = vmatpush1.bf16.msra.mxu0 0
    %2123 = vmatprep.subr.bf16.mxu0 0
    %2124 = vmatpush1.bf16.msra.mxu0 0
    %2125 = vmatprep.subr.bf16.mxu0 0
    %2126 = vmatpush1.bf16.msra.mxu0 0
    %2127 = vmatprep.subr.bf16.mxu0 0
    %2128 = vmatpush1.bf16.msra.mxu0 %v2106
    %2129 = vmatprep.subr.bf16.mxu0 0
    %2130 = vmatpush1.bf16.msra.mxu0 %v2105
    %2131 = vmatprep.subr.bf16.mxu0 0
    %2132 = vmatpush2.bf16.msra.mxu0 0
    %2133 = vmatprep.subr.bf16.mxu0 0
    %2134 = vmatpush2.bf16.msra.mxu0 0
    %2135 = vmatprep.subr.bf16.mxu0 0
    %2136 = vmatpush2.bf16.msra.mxu0 0
    %2137 = vmatprep.subr.bf16.mxu0 0
    %2138 = vmatpush2.bf16.msra.mxu0 0
    %2139 = vmatprep.subr.bf16.mxu0 0
    %2140 = vmatpush2.bf16.msra.mxu0 0
    %2141 = vmatprep.subr.bf16.mxu0 0
    %2142 = vmatpush2.bf16.msra.mxu0 0
    %2143 = vmatprep.subr.bf16.mxu0 0
    %2144 = vmatpush2.bf16.msra.mxu0 0
    %2145 = vmatprep.subr.bf16.mxu0 0
    %2146 = vmatpush2.bf16.msra.mxu0 0
    %2147 = vmatprep.mubr.bf16.mxu0 0
    %2148 = vmatmul.mubr.bf16.gmra.mxu0 %v2110
    %v2149 = vpop.f32.mrf.mxu0
    %v2150 = vadd.f32 %v2096, %v2149
    %v2151 = vpop.f32.mrf.mxu0
    %v2152 = vpop.f32.mrf.mxu0
    %v2153 = vadd.f32 %v2096, %v2152
    %v2154 = vpop.f32.mrf.mxu0
    %2155 = vmatprep.mubr.bf16.mxu0 0
    %2156 = vmatmul.mubr.bf16.gmra.mxu0 %v2113
    %v2157 = vpop.f32.mrf.mxu0
    %v2158 = vadd.f32 %v2096, %v2157
    %v2159 = vpop.f32.mrf.mxu0
    %v2160 = vpop.f32.mrf.mxu0
    %v2161 = vadd.f32 %v2096, %v2160
    %v2162 = vpop.f32.mrf.mxu0
    %2163 = vdwg.mxu0
    %v2164 = vpack.c.bf16 %v2153, %v2150
    %v2165 = vpack.c.bf16 %v2161, %v2158
    %v2166 = vld [vmem:[%s3 + $0x7c] sm:$0x1]
    %v2167 = vld [vmem:[%s3 + $0x7d] sm:$0x1]
    %v2168 = vsel %vm170, %v2006, 0.0
    %2169 = vadd.xlane.f32.xlu0 %v2168
    %v2170 = vpop.xlane.xlu0 %2169
    %v2171 = vsel %vm170, %v2007, 0.0
    %2172 = vadd.xlane.f32.xlu0 %v2171
    %v2173 = vpop.xlane.xlu0 %2172
    %v2174 = vsel %vm170, %v2008, 0.0
    %2175 = vadd.xlane.f32.xlu0 %v2174
    %v2176 = vpop.xlane.xlu0 %2175
    %v2177 = vsel %vm170, %v2009, 0.0
    %2178 = vadd.xlane.f32.xlu0 %v2177
    %v2179 = vpop.xlane.xlu0 %2178
    %v2180 = vsel %vm170, %v2010, 0.0
    %2181 = vadd.xlane.f32.xlu0 %v2180
    %v2182 = vpop.xlane.xlu0 %2181
    %v2183 = vsel %vm170, %v2011, 0.0
    %2184 = vadd.xlane.f32.xlu0 %v2183
    %v2185 = vpop.xlane.xlu0 %2184
    %v2186 = vmul.f32 %v2170, %v189
    %v2187 = vmul.f32 %v2173, %v189
    %v2188 = vmul.f32 %v2176, %v189
    %v2189 = vmul.f32 %v2179, %v189
    %v2190 = vmul.f32 %v2182, %v189
    %v2191 = vmul.f32 %v2185, %v189
    %v2192 = vsub.f32 %v2006, %v2186
    %v2193 = vsub.f32 %v2007, %v2187
    %v2194 = vsub.f32 %v2008, %v2188
    %v2195 = vsub.f32 %v2009, %v2189
    %v2196 = vsub.f32 %v2010, %v2190
    %v2197 = vsub.f32 %v2011, %v2191
    %v2198 = vmul.f32 %v2192, %v2192
    %v2199 = vmul.f32 %v2193, %v2193
    %v2200 = vmul.f32 %v2194, %v2194
    %v2201 = vmul.f32 %v2195, %v2195
    %v2202 = vmul.f32 %v2196, %v2196
    %v2203 = vmul.f32 %v2197, %v2197
    %v2204 = vsel %vm170, %v2198, 0.0
    %2205 = vadd.xlane.f32.xlu0 %v2204
    %v2206 = vpop.xlane.xlu0 %2205
    %v2207 = vsel %vm170, %v2199, 0.0
    %2208 = vadd.xlane.f32.xlu0 %v2207
    %v2209 = vpop.xlane.xlu0 %2208
    %v2210 = vsel %vm170, %v2200, 0.0
    %2211 = vadd.xlane.f32.xlu0 %v2210
    %v2212 = vpop.xlane.xlu0 %2211
    %v2213 = vsel %vm170, %v2201, 0.0
    %2214 = vadd.xlane.f32.xlu0 %v2213
    %v2215 = vpop.xlane.xlu0 %2214
    %v2216 = vsel %vm170, %v2202, 0.0
    %2217 = vadd.xlane.f32.xlu0 %v2216
    %v2218 = vpop.xlane.xlu0 %2217
    %v2219 = vsel %vm170, %v2203, 0.0
    %2220 = vadd.xlane.f32.xlu0 %v2219
    %v2221 = vpop.xlane.xlu0 %2220
    %v2222 = vmul.f32 %v2206, %v189
    %v2223 = vmul.f32 %v2209, %v189
    %v2224 = vmul.f32 %v2212, %v189
    %v2225 = vmul.f32 %v2215, %v189
    %v2226 = vmul.f32 %v2218, %v189
    %v2227 = vmul.f32 %v2221, %v189
    %v2228 = vadd.f32 %v2222, 1e-05
    %v2229 = vadd.f32 %v2223, 1e-05
    %v2230 = vadd.f32 %v2224, 1e-05
    %v2231 = vadd.f32 %v2225, 1e-05
    %v2232 = vadd.f32 %v2226, 1e-05
    %v2233 = vadd.f32 %v2227, 1e-05
    %v2234 = vrsqrt.pop %v2228
    %v2235 = vrsqrt.pop %v2229
    %v2236 = vrsqrt.pop %v2230
    %v2237 = vrsqrt.pop %v2231
    %v2238 = vrsqrt.pop %v2232
    %v2239 = vrsqrt.pop %v2233
    %v2240 = vmul.f32 %v2192, %v2234
    %v2241 = vmul.f32 %v2193, %v2235
    %v2242 = vmul.f32 %v2194, %v2236
    %v2243 = vmul.f32 %v2195, %v2237
    %v2244 = vmul.f32 %v2196, %v2238
    %v2245 = vmul.f32 %v2197, %v2239
    %v2246 = vlaneseq
    %v2247 = vshrl.u32 %v2246, 7
    %v2248 = vsub.s32 0, %v2247
    %v2249 = vrot.slane %v2166, %v2248
    %v2250 = vmul.f32 %v2240, %v2249
    %v2251 = vmul.f32 %v2241, %v2249
    %v2252 = vmul.f32 %v2242, %v2249
    %v2253 = vmul.f32 %v2243, %v2249
    %v2254 = vmul.f32 %v2244, %v2249
    %v2255 = vmul.f32 %v2245, %v2249
    %v2256 = vlaneseq
    %v2257 = vshrl.u32 %v2256, 7
    %v2258 = vsub.s32 0, %v2257
    %v2259 = vrot.slane %v2167, %v2258
    %v2260 = vadd.f32 %v2250, %v2259
    %v2261 = vadd.f32 %v2251, %v2259
    %v2262 = vadd.f32 %v2252, %v2259
    %v2263 = vadd.f32 %v2253, %v2259
    %v2264 = vadd.f32 %v2254, %v2259
    %v2265 = vadd.f32 %v2255, %v2259
    %v2266 = vpack.c.bf16 %v2261, %v2260
    %v2267 = vpack.c.bf16 %v2263, %v2262
    %v2268 = vpack.c.bf16 %v2265, %v2264
    %v2269 = vld [vmem:[%s2 + $0x98] sm:$0xf]
    %v2270 = vld [vmem:[%s2 + $0x9c] sm:$0xf]
    %v2271 = vld [vmem:[%s2 + $0xa0] sm:$0xf]
    %v2272 = vld [vmem:[%s2 + $0xa4] sm:$0xf]
    %v2273 = vld [vmem:[%s3 + $0x81] sm:$0x1]
    %v2274 = vlaneseq
    %v2275 = vshrl.u32 %v2274, 7
    %v2276 = vsub.s32 0, %v2275
    %v2277 = vrot.slane %v2273, %v2276
    %v2282 = vunpack.c.l.b16 %v2269
    %v2283 = vunpack.c.l.b16 %v2270
    %v2284 = vunpack.c.l.b16 %v2271
    %v2285 = vunpack.c.l.b16 %v2272
    %v2286 = vpack.c.b16 %v2283, %v2282
    %v2287 = vpack.c.b16 %v2285, %v2284
    %v2291 = vsel %vm170, %v2266, 0
    %v2294 = vsel %vm170, %v2267, 0
    %v2297 = vsel %vm170, %v2268, 0
    %2299 = vmatprep.subr.bf16.mxu0 0
    %2300 = vmatpush1.bf16.msra.mxu0 0
    %2301 = vmatprep.subr.bf16.mxu0 0
    %2302 = vmatpush1.bf16.msra.mxu0 0
    %2303 = vmatprep.subr.bf16.mxu0 0
    %2304 = vmatpush1.bf16.msra.mxu0 0
    %2305 = vmatprep.subr.bf16.mxu0 0
    %2306 = vmatpush1.bf16.msra.mxu0 0
    %2307 = vmatprep.subr.bf16.mxu0 0
    %2308 = vmatpush1.bf16.msra.mxu0 0
    %2309 = vmatprep.subr.bf16.mxu0 0
    %2310 = vmatpush1.bf16.msra.mxu0 0
    %2311 = vmatprep.subr.bf16.mxu0 0
    %2312 = vmatpush1.bf16.msra.mxu0 %v2287
    %2313 = vmatprep.subr.bf16.mxu0 0
    %2314 = vmatpush1.bf16.msra.mxu0 %v2286
    %2315 = vmatprep.subr.bf16.mxu0 0
    %2316 = vmatpush2.bf16.msra.mxu0 0
    %2317 = vmatprep.subr.bf16.mxu0 0
    %2318 = vmatpush2.bf16.msra.mxu0 0
    %2319 = vmatprep.subr.bf16.mxu0 0
    %2320 = vmatpush2.bf16.msra.mxu0 0
    %2321 = vmatprep.subr.bf16.mxu0 0
    %2322 = vmatpush2.bf16.msra.mxu0 0
    %2323 = vmatprep.subr.bf16.mxu0 0
    %2324 = vmatpush2.bf16.msra.mxu0 0
    %2325 = vmatprep.subr.bf16.mxu0 0
    %2326 = vmatpush2.bf16.msra.mxu0 0
    %2327 = vmatprep.subr.bf16.mxu0 0
    %2328 = vmatpush2.bf16.msra.mxu0 0
    %2329 = vmatprep.subr.bf16.mxu0 0
    %2330 = vmatpush2.bf16.msra.mxu0 0
    %2331 = vmatprep.mubr.bf16.mxu0 0
    %2332 = vmatmul.mubr.bf16.gmra.mxu0 %v2291
    %v2333 = vpop.f32.mrf.mxu0
    %v2334 = vadd.f32 %v2277, %v2333
    %v2335 = vpop.f32.mrf.mxu0
    %v2336 = vpop.f32.mrf.mxu0
    %v2337 = vadd.f32 %v2277, %v2336
    %v2338 = vpop.f32.mrf.mxu0
    %2339 = vmatprep.mubr.bf16.mxu0 0
    %2340 = vmatmul.mubr.bf16.gmra.mxu0 %v2294
    %v2341 = vpop.f32.mrf.mxu0
    %v2342 = vadd.f32 %v2277, %v2341
    %v2343 = vpop.f32.mrf.mxu0
    %v2344 = vpop.f32.mrf.mxu0
    %v2345 = vadd.f32 %v2277, %v2344
    %v2346 = vpop.f32.mrf.mxu0
    %2347 = vmatprep.mubr.bf16.mxu0 0
    %2348 = vmatmul.mubr.bf16.gmra.mxu0 %v2297
    %v2349 = vpop.f32.mrf.mxu0
    %v2350 = vadd.f32 %v2277, %v2349
    %v2351 = vpop.f32.mrf.mxu0
    %v2352 = vpop.f32.mrf.mxu0
    %v2353 = vadd.f32 %v2277, %v2352
    %v2354 = vpop.f32.mrf.mxu0
    %2355 = vdwg.mxu0
    %v2356 = vpack.c.bf16 %v2337, %v2334
    %v2357 = vpack.c.bf16 %v2345, %v2342
    %v2358 = vpack.c.bf16 %v2353, %v2350
    %vm2359 = vcmp.ge.s32.totalorder %v126, 16
    %vm2360 = vcmp.ge.s32.totalorder %v127, 16
    %vm2361 = vcmp.ge.s32.totalorder %v128, 16
    %vm2362 = vcmp.ge.s32.totalorder %v129, 16
    %vm2363 = vmxor %vm2359, %vm140
    %vm2364 = vmxor %vm2360, %vm140
    %vm2365 = vmxor %vm2361, %vm140
    %vm2366 = vmxor %vm2362, %vm140
    %vm2367 = vmxor %vm2363, 1
    %vm2368 = vmxor %vm2364, 1
    %vm2369 = vmxor %vm2365, 1
    %vm2370 = vmxor %vm2366, 1
    %vm2371 = vmand %vm2367, %vm155
    %vm2372 = vmand %vm2368, %vm155
    %vm2373 = vmand %vm2369, %vm155
    %vm2374 = vmand %vm2370, %vm155
    %v2375 = vsel %vm2371, 0.0, -1e+30
    %v2376 = vsel %vm2372, 0.0, -1e+30
    %v2377 = vsel %vm2373, 0.0, -1e+30
    %v2378 = vsel %vm2374, 0.0, -1e+30
    %v2380 = vsel %vm372, %v2164, 0
    %v2383 = vsel %vm372, %v2165, 0
    %v2386 = vsel %vm372, %v2356, 0
    %v2389 = vsel %vm372, %v2357, 0
    %v2392 = vsel %vm372, %v2358, 0
    %2394 = vmatprep.subr.bf16.mxu0 0
    %2395 = vmatpush1.bf16.xpose.msra.mxu0 0
    %2396 = vmatprep.subr.bf16.mxu0 0
    %2397 = vmatpush1.bf16.xpose.msra.mxu0 0
    %2398 = vmatprep.subr.bf16.mxu0 0
    %2399 = vmatpush1.bf16.xpose.msra.mxu0 0
    %2400 = vmatprep.subr.bf16.mxu0 0
    %2401 = vmatpush1.bf16.xpose.msra.mxu0 0
    %2402 = vmatprep.subr.bf16.mxu0 0
    %2403 = vmatpush1.bf16.xpose.msra.mxu0 0
    %2404 = vmatprep.subr.bf16.mxu0 0
    %2405 = vmatpush1.bf16.xpose.msra.mxu0 %v2392
    %2406 = vmatprep.subr.bf16.mxu0 0
    %2407 = vmatpush1.bf16.xpose.msra.mxu0 %v2389
    %2408 = vmatprep.subr.bf16.mxu0 0
    %2409 = vmatpush1.bf16.xpose.msra.mxu0 %v2386
    %2410 = vmatprep.subr.bf16.mxu0 0
    %2411 = vmatpush2.bf16.xpose.msra.mxu0 0
    %2412 = vmatprep.subr.bf16.mxu0 0
    %2413 = vmatpush2.bf16.xpose.msra.mxu0 0
    %2414 = vmatprep.subr.bf16.mxu0 0
    %2415 = vmatpush2.bf16.xpose.msra.mxu0 0
    %2416 = vmatprep.subr.bf16.mxu0 0
    %2417 = vmatpush2.bf16.xpose.msra.mxu0 0
    %2418 = vmatprep.subr.bf16.mxu0 0
    %2419 = vmatpush2.bf16.xpose.msra.mxu0 0
    %2420 = vmatprep.subr.bf16.mxu0 0
    %2421 = vmatpush2.bf16.xpose.msra.mxu0 0
    %2422 = vmatprep.subr.bf16.mxu0 0
    %2423 = vmatpush2.bf16.xpose.msra.mxu0 0
    %2424 = vmatprep.subr.bf16.mxu0 0
    %2425 = vmatpush2.bf16.xpose.msra.mxu0 0
    %2426 = vmatprep.mubr.bf16.mxu0 0
    %2427 = vmatmul.mubr.bf16.gmra.mxu0 %v2380
    %v2428 = vpop.f32.mrf.mxu0
    %v2429 = vadd.f32 0.0, %v2428
    %v2430 = vpop.f32.mrf.mxu0
    %v2431 = vpop.f32.mrf.mxu0
    %v2432 = vadd.f32 0.0, %v2431
    %v2433 = vpop.f32.mrf.mxu0
    %2434 = vmatprep.mubr.bf16.mxu0 0
    %2435 = vmatmul.mubr.bf16.gmra.mxu0 %v2383
    %v2436 = vpop.f32.mrf.mxu0
    %v2437 = vadd.f32 0.0, %v2436
    %v2438 = vpop.f32.mrf.mxu0
    %v2439 = vpop.f32.mrf.mxu0
    %v2440 = vadd.f32 0.0, %v2439
    %v2441 = vpop.f32.mrf.mxu0
    %2442 = vdwg.mxu0
    %v2443 = vmul.f32 %v2429, 0.35355338
    %v2444 = vmul.f32 %v2432, 0.35355338
    %v2445 = vmul.f32 %v2437, 0.35355338
    %v2446 = vmul.f32 %v2440, 0.35355338
    %v2447 = vadd.f32 %v2443, %v2375
    %v2448 = vadd.f32 %v2444, %v2376
    %v2449 = vadd.f32 %v2445, %v2377
    %v2450 = vadd.f32 %v2446, %v2378
    %v2451 = vsel %vm58, %v2447, -inf
    %2452 = vmax.xlane.f32.xlu0 %v2451
    %v2453 = vpop.xlane.xlu0 %2452
    %v2454 = vsel %vm58, %v2448, -inf
    %2455 = vmax.xlane.f32.xlu0 %v2454
    %v2456 = vpop.xlane.xlu0 %2455
    %v2457 = vsel %vm58, %v2449, -inf
    %2458 = vmax.xlane.f32.xlu0 %v2457
    %v2459 = vpop.xlane.xlu0 %2458
    %v2460 = vsel %vm58, %v2450, -inf
    %2461 = vmax.xlane.f32.xlu0 %v2460
    %v2462 = vpop.xlane.xlu0 %2461
    %v2463 = vsub.f32 %v2447, %v2453
    %v2464 = vsub.f32 %v2448, %v2456
    %v2465 = vsub.f32 %v2449, %v2459
    %v2466 = vsub.f32 %v2450, %v2462
    %v2467 = vmul.f32 %v2463, 1.442695
    %v2468 = vpow.pop %v2467
    %v2469 = vmul.f32 %v2464, 1.442695
    %v2470 = vpow.pop %v2469
    %v2471 = vmul.f32 %v2465, 1.442695
    %v2472 = vpow.pop %v2471
    %v2473 = vmul.f32 %v2466, 1.442695
    %v2474 = vpow.pop %v2473
    %v2475 = vsel %vm58, %v2468, 0.0
    %2476 = vadd.xlane.f32.xlu0 %v2475
    %v2477 = vpop.xlane.xlu0 %2476
    %v2478 = vsel %vm58, %v2470, 0.0
    %2479 = vadd.xlane.f32.xlu0 %v2478
    %v2480 = vpop.xlane.xlu0 %2479
    %v2481 = vsel %vm58, %v2472, 0.0
    %2482 = vadd.xlane.f32.xlu0 %v2481
    %v2483 = vpop.xlane.xlu0 %2482
    %v2484 = vsel %vm58, %v2474, 0.0
    %2485 = vadd.xlane.f32.xlu0 %v2484
    %v2486 = vpop.xlane.xlu0 %2485
    %v2487 = vpack.c.bf16 %v2470, %v2468
    %v2488 = vpack.c.bf16 %v2474, %v2472
    %2492 = vrot.lane.b32.xlu0 %v2356, 96
    %v2493 = vpop.permute.xlu0 %2492
    %2494 = vrot.lane.b32.xlu0 %v2357, 96
    %v2495 = vpop.permute.xlu0 %2494
    %2496 = vrot.lane.b32.xlu0 %v2358, 96
    %v2497 = vpop.permute.xlu0 %2496
    %v2502 = vsel %vm58, %v2487, 0
    %v2505 = vsel %vm58, %v2488, 0
    %2507 = vmatprep.subr.bf16.mxu0 0
    %2508 = vmatpush1.bf16.msra.mxu0 0
    %2509 = vmatprep.subr.bf16.mxu0 0
    %2510 = vmatpush1.bf16.msra.mxu0 0
    %2511 = vmatprep.subr.bf16.mxu0 0
    %2512 = vmatpush1.bf16.msra.mxu0 0
    %2513 = vmatprep.subr.bf16.mxu0 0
    %2514 = vmatpush1.bf16.msra.mxu0 0
    %2515 = vmatprep.subr.bf16.mxu0 0
    %2516 = vmatpush1.bf16.msra.mxu0 0
    %2517 = vmatprep.subr.bf16.mxu0 0
    %2518 = vmatpush1.bf16.msra.mxu0 %v2497
    %2519 = vmatprep.subr.bf16.mxu0 0
    %2520 = vmatpush1.bf16.msra.mxu0 %v2495
    %2521 = vmatprep.subr.bf16.mxu0 0
    %2522 = vmatpush1.bf16.msra.mxu0 %v2493
    %2523 = vmatprep.subr.bf16.mxu0 0
    %2524 = vmatpush2.bf16.msra.mxu0 0
    %2525 = vmatprep.subr.bf16.mxu0 0
    %2526 = vmatpush2.bf16.msra.mxu0 0
    %2527 = vmatprep.subr.bf16.mxu0 0
    %2528 = vmatpush2.bf16.msra.mxu0 0
    %2529 = vmatprep.subr.bf16.mxu0 0
    %2530 = vmatpush2.bf16.msra.mxu0 0
    %2531 = vmatprep.subr.bf16.mxu0 0
    %2532 = vmatpush2.bf16.msra.mxu0 0
    %2533 = vmatprep.subr.bf16.mxu0 0
    %2534 = vmatpush2.bf16.msra.mxu0 0
    %2535 = vmatprep.subr.bf16.mxu0 0
    %2536 = vmatpush2.bf16.msra.mxu0 0
    %2537 = vmatprep.subr.bf16.mxu0 0
    %2538 = vmatpush2.bf16.msra.mxu0 0
    %2539 = vmatprep.mubr.bf16.mxu0 0
    %2540 = vmatmul.mubr.bf16.gmra.mxu0 %v2502
    %v2541 = vpop.f32.mrf.mxu0
    %v2542 = vadd.f32 0.0, %v2541
    %v2543 = vpop.f32.mrf.mxu0
    %v2544 = vpop.f32.mrf.mxu0
    %v2545 = vadd.f32 0.0, %v2544
    %v2546 = vpop.f32.mrf.mxu0
    %2547 = vmatprep.mubr.bf16.mxu0 0
    %2548 = vmatmul.mubr.bf16.gmra.mxu0 %v2505
    %v2549 = vpop.f32.mrf.mxu0
    %v2550 = vadd.f32 0.0, %v2549
    %v2551 = vpop.f32.mrf.mxu0
    %v2552 = vpop.f32.mrf.mxu0
    %v2553 = vadd.f32 0.0, %v2552
    %v2554 = vpop.f32.mrf.mxu0
    %2555 = vdwg.mxu0
    %v2556 = vrcp.pop %v2477
    %v2557 = vrcp.pop %v2480
    %v2558 = vrcp.pop %v2483
    %v2559 = vrcp.pop %v2486
    %v2560 = vmul.f32 %v2542, %v2556
    %v2561 = vmul.f32 %v2545, %v2557
    %v2562 = vmul.f32 %v2550, %v2558
    %v2563 = vmul.f32 %v2553, %v2559
    %2566 = vrot.lane.b32.xlu0 %v2164, 120
    %v2567 = vpop.permute.xlu0 %2566
    %2568 = vrot.lane.b32.xlu0 %v2165, 120
    %v2569 = vpop.permute.xlu0 %2568
    %2570 = vrot.lane.b32.xlu0 %v2356, 120
    %v2571 = vpop.permute.xlu0 %2570
    %2572 = vrot.lane.b32.xlu0 %v2357, 120
    %v2573 = vpop.permute.xlu0 %2572
    %2574 = vrot.lane.b32.xlu0 %v2358, 120
    %v2575 = vpop.permute.xlu0 %2574
    %v2577 = vsel %vm372, %v2567, 0
    %v2580 = vsel %vm372, %v2569, 0
    %v2583 = vsel %vm372, %v2571, 0
    %v2586 = vsel %vm372, %v2573, 0
    %v2589 = vsel %vm372, %v2575, 0
    %2591 = vmatprep.subr.bf16.mxu0 0
    %2592 = vmatpush1.bf16.xpose.msra.mxu0 0
    %2593 = vmatprep.subr.bf16.mxu0 0
    %2594 = vmatpush1.bf16.xpose.msra.mxu0 0
    %2595 = vmatprep.subr.bf16.mxu0 0
    %2596 = vmatpush1.bf16.xpose.msra.mxu0 0
    %2597 = vmatprep.subr.bf16.mxu0 0
    %2598 = vmatpush1.bf16.xpose.msra.mxu0 0
    %2599 = vmatprep.subr.bf16.mxu0 0
    %2600 = vmatpush1.bf16.xpose.msra.mxu0 0
    %2601 = vmatprep.subr.bf16.mxu0 0
    %2602 = vmatpush1.bf16.xpose.msra.mxu0 %v2589
    %2603 = vmatprep.subr.bf16.mxu0 0
    %2604 = vmatpush1.bf16.xpose.msra.mxu0 %v2586
    %2605 = vmatprep.subr.bf16.mxu0 0
    %2606 = vmatpush1.bf16.xpose.msra.mxu0 %v2583
    %2607 = vmatprep.subr.bf16.mxu0 0
    %2608 = vmatpush2.bf16.xpose.msra.mxu0 0
    %2609 = vmatprep.subr.bf16.mxu0 0
    %2610 = vmatpush2.bf16.xpose.msra.mxu0 0
    %2611 = vmatprep.subr.bf16.mxu0 0
    %2612 = vmatpush2.bf16.xpose.msra.mxu0 0
    %2613 = vmatprep.subr.bf16.mxu0 0
    %2614 = vmatpush2.bf16.xpose.msra.mxu0 0
    %2615 = vmatprep.subr.bf16.mxu0 0
    %2616 = vmatpush2.bf16.xpose.msra.mxu0 0
    %2617 = vmatprep.subr.bf16.mxu0 0
    %2618 = vmatpush2.bf16.xpose.msra.mxu0 0
    %2619 = vmatprep.subr.bf16.mxu0 0
    %2620 = vmatpush2.bf16.xpose.msra.mxu0 0
    %2621 = vmatprep.subr.bf16.mxu0 0
    %2622 = vmatpush2.bf16.xpose.msra.mxu0 0
    %2623 = vmatprep.mubr.bf16.mxu0 0
    %2624 = vmatmul.mubr.bf16.gmra.mxu0 %v2577
    %v2625 = vpop.f32.mrf.mxu0
    %v2626 = vadd.f32 0.0, %v2625
    %v2627 = vpop.f32.mrf.mxu0
    %v2628 = vpop.f32.mrf.mxu0
    %v2629 = vadd.f32 0.0, %v2628
    %v2630 = vpop.f32.mrf.mxu0
    %2631 = vmatprep.mubr.bf16.mxu0 0
    %2632 = vmatmul.mubr.bf16.gmra.mxu0 %v2580
    %v2633 = vpop.f32.mrf.mxu0
    %v2634 = vadd.f32 0.0, %v2633
    %v2635 = vpop.f32.mrf.mxu0
    %v2636 = vpop.f32.mrf.mxu0
    %v2637 = vadd.f32 0.0, %v2636
    %v2638 = vpop.f32.mrf.mxu0
    %2639 = vdwg.mxu0
    %v2640 = vmul.f32 %v2626, 0.35355338
    %v2641 = vmul.f32 %v2629, 0.35355338
    %v2642 = vmul.f32 %v2634, 0.35355338
    %v2643 = vmul.f32 %v2637, 0.35355338
    %v2644 = vadd.f32 %v2640, %v2375
    %v2645 = vadd.f32 %v2641, %v2376
    %v2646 = vadd.f32 %v2642, %v2377
    %v2647 = vadd.f32 %v2643, %v2378
    %v2648 = vsel %vm58, %v2644, -inf
    %2649 = vmax.xlane.f32.xlu0 %v2648
    %v2650 = vpop.xlane.xlu0 %2649
    %v2651 = vsel %vm58, %v2645, -inf
    %2652 = vmax.xlane.f32.xlu0 %v2651
    %v2653 = vpop.xlane.xlu0 %2652
    %v2654 = vsel %vm58, %v2646, -inf
    %2655 = vmax.xlane.f32.xlu0 %v2654
    %v2656 = vpop.xlane.xlu0 %2655
    %v2657 = vsel %vm58, %v2647, -inf
    %2658 = vmax.xlane.f32.xlu0 %v2657
    %v2659 = vpop.xlane.xlu0 %2658
    %v2660 = vsub.f32 %v2644, %v2650
    %v2661 = vsub.f32 %v2645, %v2653
    %v2662 = vsub.f32 %v2646, %v2656
    %v2663 = vsub.f32 %v2647, %v2659
    %v2664 = vmul.f32 %v2660, 1.442695
    %v2665 = vpow.pop %v2664
    %v2666 = vmul.f32 %v2661, 1.442695
    %v2667 = vpow.pop %v2666
    %v2668 = vmul.f32 %v2662, 1.442695
    %v2669 = vpow.pop %v2668
    %v2670 = vmul.f32 %v2663, 1.442695
    %v2671 = vpow.pop %v2670
    %v2672 = vsel %vm58, %v2665, 0.0
    %2673 = vadd.xlane.f32.xlu0 %v2672
    %v2674 = vpop.xlane.xlu0 %2673
    %v2675 = vsel %vm58, %v2667, 0.0
    %2676 = vadd.xlane.f32.xlu0 %v2675
    %v2677 = vpop.xlane.xlu0 %2676
    %v2678 = vsel %vm58, %v2669, 0.0
    %2679 = vadd.xlane.f32.xlu0 %v2678
    %v2680 = vpop.xlane.xlu0 %2679
    %v2681 = vsel %vm58, %v2671, 0.0
    %2682 = vadd.xlane.f32.xlu0 %v2681
    %v2683 = vpop.xlane.xlu0 %2682
    %v2684 = vpack.c.bf16 %v2667, %v2665
    %v2685 = vpack.c.bf16 %v2671, %v2669
    %2686 = vrot.lane.b32.xlu0 %v2356, 88
    %v2687 = vpop.permute.xlu0 %2686
    %2688 = vrot.lane.b32.xlu0 %v2357, 88
    %v2689 = vpop.permute.xlu0 %2688
    %2690 = vrot.lane.b32.xlu0 %v2358, 88
    %v2691 = vpop.permute.xlu0 %2690
    %v2696 = vsel %vm58, %v2684, 0
    %v2699 = vsel %vm58, %v2685, 0
    %2701 = vmatprep.subr.bf16.mxu0 0
    %2702 = vmatpush1.bf16.msra.mxu0 0
    %2703 = vmatprep.subr.bf16.mxu0 0
    %2704 = vmatpush1.bf16.msra.mxu0 0
    %2705 = vmatprep.subr.bf16.mxu0 0
    %2706 = vmatpush1.bf16.msra.mxu0 0
    %2707 = vmatprep.subr.bf16.mxu0 0
    %2708 = vmatpush1.bf16.msra.mxu0 0
    %2709 = vmatprep.subr.bf16.mxu0 0
    %2710 = vmatpush1.bf16.msra.mxu0 0
    %2711 = vmatprep.subr.bf16.mxu0 0
    %2712 = vmatpush1.bf16.msra.mxu0 %v2691
    %2713 = vmatprep.subr.bf16.mxu0 0
    %2714 = vmatpush1.bf16.msra.mxu0 %v2689
    %2715 = vmatprep.subr.bf16.mxu0 0
    %2716 = vmatpush1.bf16.msra.mxu0 %v2687
    %2717 = vmatprep.subr.bf16.mxu0 0
    %2718 = vmatpush2.bf16.msra.mxu0 0
    %2719 = vmatprep.subr.bf16.mxu0 0
    %2720 = vmatpush2.bf16.msra.mxu0 0
    %2721 = vmatprep.subr.bf16.mxu0 0
    %2722 = vmatpush2.bf16.msra.mxu0 0
    %2723 = vmatprep.subr.bf16.mxu0 0
    %2724 = vmatpush2.bf16.msra.mxu0 0
    %2725 = vmatprep.subr.bf16.mxu0 0
    %2726 = vmatpush2.bf16.msra.mxu0 0
    %2727 = vmatprep.subr.bf16.mxu0 0
    %2728 = vmatpush2.bf16.msra.mxu0 0
    %2729 = vmatprep.subr.bf16.mxu0 0
    %2730 = vmatpush2.bf16.msra.mxu0 0
    %2731 = vmatprep.subr.bf16.mxu0 0
    %2732 = vmatpush2.bf16.msra.mxu0 0
    %2733 = vmatprep.mubr.bf16.mxu0 0
    %2734 = vmatmul.mubr.bf16.gmra.mxu0 %v2696
    %v2735 = vpop.f32.mrf.mxu0
    %v2736 = vadd.f32 0.0, %v2735
    %v2737 = vpop.f32.mrf.mxu0
    %v2738 = vpop.f32.mrf.mxu0
    %v2739 = vadd.f32 0.0, %v2738
    %v2740 = vpop.f32.mrf.mxu0
    %2741 = vmatprep.mubr.bf16.mxu0 0
    %2742 = vmatmul.mubr.bf16.gmra.mxu0 %v2699
    %v2743 = vpop.f32.mrf.mxu0
    %v2744 = vadd.f32 0.0, %v2743
    %v2745 = vpop.f32.mrf.mxu0
    %v2746 = vpop.f32.mrf.mxu0
    %v2747 = vadd.f32 0.0, %v2746
    %v2748 = vpop.f32.mrf.mxu0
    %2749 = vdwg.mxu0
    %v2750 = vrcp.pop %v2674
    %v2751 = vrcp.pop %v2677
    %v2752 = vrcp.pop %v2680
    %v2753 = vrcp.pop %v2683
    %v2754 = vmul.f32 %v2736, %v2750
    %v2755 = vmul.f32 %v2739, %v2751
    %v2756 = vmul.f32 %v2744, %v2752
    %v2757 = vmul.f32 %v2747, %v2753
    %2758 = vrot.lane.b32.xlu0 %v2164, 112
    %v2759 = vpop.permute.xlu0 %2758
    %2760 = vrot.lane.b32.xlu0 %v2165, 112
    %v2761 = vpop.permute.xlu0 %2760
    %2762 = vrot.lane.b32.xlu0 %v2356, 112
    %v2763 = vpop.permute.xlu0 %2762
    %2764 = vrot.lane.b32.xlu0 %v2357, 112
    %v2765 = vpop.permute.xlu0 %2764
    %2766 = vrot.lane.b32.xlu0 %v2358, 112
    %v2767 = vpop.permute.xlu0 %2766
    %v2769 = vsel %vm372, %v2759, 0
    %v2772 = vsel %vm372, %v2761, 0
    %v2775 = vsel %vm372, %v2763, 0
    %v2778 = vsel %vm372, %v2765, 0
    %v2781 = vsel %vm372, %v2767, 0
    %2783 = vmatprep.subr.bf16.mxu0 0
    %2784 = vmatpush1.bf16.xpose.msra.mxu0 0
    %2785 = vmatprep.subr.bf16.mxu0 0
    %2786 = vmatpush1.bf16.xpose.msra.mxu0 0
    %2787 = vmatprep.subr.bf16.mxu0 0
    %2788 = vmatpush1.bf16.xpose.msra.mxu0 0
    %2789 = vmatprep.subr.bf16.mxu0 0
    %2790 = vmatpush1.bf16.xpose.msra.mxu0 0
    %2791 = vmatprep.subr.bf16.mxu0 0
    %2792 = vmatpush1.bf16.xpose.msra.mxu0 0
    %2793 = vmatprep.subr.bf16.mxu0 0
    %2794 = vmatpush1.bf16.xpose.msra.mxu0 %v2781
    %2795 = vmatprep.subr.bf16.mxu0 0
    %2796 = vmatpush1.bf16.xpose.msra.mxu0 %v2778
    %2797 = vmatprep.subr.bf16.mxu0 0
    %2798 = vmatpush1.bf16.xpose.msra.mxu0 %v2775
    %2799 = vmatprep.subr.bf16.mxu0 0
    %2800 = vmatpush2.bf16.xpose.msra.mxu0 0
    %2801 = vmatprep.subr.bf16.mxu0 0
    %2802 = vmatpush2.bf16.xpose.msra.mxu0 0
    %2803 = vmatprep.subr.bf16.mxu0 0
    %2804 = vmatpush2.bf16.xpose.msra.mxu0 0
    %2805 = vmatprep.subr.bf16.mxu0 0
    %2806 = vmatpush2.bf16.xpose.msra.mxu0 0
    %2807 = vmatprep.subr.bf16.mxu0 0
    %2808 = vmatpush2.bf16.xpose.msra.mxu0 0
    %2809 = vmatprep.subr.bf16.mxu0 0
    %2810 = vmatpush2.bf16.xpose.msra.mxu0 0
    %2811 = vmatprep.subr.bf16.mxu0 0
    %2812 = vmatpush2.bf16.xpose.msra.mxu0 0
    %2813 = vmatprep.subr.bf16.mxu0 0
    %2814 = vmatpush2.bf16.xpose.msra.mxu0 0
    %2815 = vmatprep.mubr.bf16.mxu0 0
    %2816 = vmatmul.mubr.bf16.gmra.mxu0 %v2769
    %v2817 = vpop.f32.mrf.mxu0
    %v2818 = vadd.f32 0.0, %v2817
    %v2819 = vpop.f32.mrf.mxu0
    %v2820 = vpop.f32.mrf.mxu0
    %v2821 = vadd.f32 0.0, %v2820
    %v2822 = vpop.f32.mrf.mxu0
    %2823 = vmatprep.mubr.bf16.mxu0 0
    %2824 = vmatmul.mubr.bf16.gmra.mxu0 %v2772
    %v2825 = vpop.f32.mrf.mxu0
    %v2826 = vadd.f32 0.0, %v2825
    %v2827 = vpop.f32.mrf.mxu0
    %v2828 = vpop.f32.mrf.mxu0
    %v2829 = vadd.f32 0.0, %v2828
    %v2830 = vpop.f32.mrf.mxu0
    %2831 = vdwg.mxu0
    %v2832 = vmul.f32 %v2818, 0.35355338
    %v2833 = vmul.f32 %v2821, 0.35355338
    %v2834 = vmul.f32 %v2826, 0.35355338
    %v2835 = vmul.f32 %v2829, 0.35355338
    %v2836 = vadd.f32 %v2832, %v2375
    %v2837 = vadd.f32 %v2833, %v2376
    %v2838 = vadd.f32 %v2834, %v2377
    %v2839 = vadd.f32 %v2835, %v2378
    %v2840 = vsel %vm58, %v2836, -inf
    %2841 = vmax.xlane.f32.xlu0 %v2840
    %v2842 = vpop.xlane.xlu0 %2841
    %v2843 = vsel %vm58, %v2837, -inf
    %2844 = vmax.xlane.f32.xlu0 %v2843
    %v2845 = vpop.xlane.xlu0 %2844
    %v2846 = vsel %vm58, %v2838, -inf
    %2847 = vmax.xlane.f32.xlu0 %v2846
    %v2848 = vpop.xlane.xlu0 %2847
    %v2849 = vsel %vm58, %v2839, -inf
    %2850 = vmax.xlane.f32.xlu0 %v2849
    %v2851 = vpop.xlane.xlu0 %2850
    %v2852 = vsub.f32 %v2836, %v2842
    %v2853 = vsub.f32 %v2837, %v2845
    %v2854 = vsub.f32 %v2838, %v2848
    %v2855 = vsub.f32 %v2839, %v2851
    %v2856 = vmul.f32 %v2852, 1.442695
    %v2857 = vpow.pop %v2856
    %v2858 = vmul.f32 %v2853, 1.442695
    %v2859 = vpow.pop %v2858
    %v2860 = vmul.f32 %v2854, 1.442695
    %v2861 = vpow.pop %v2860
    %v2862 = vmul.f32 %v2855, 1.442695
    %v2863 = vpow.pop %v2862
    %v2864 = vsel %vm58, %v2857, 0.0
    %2865 = vadd.xlane.f32.xlu0 %v2864
    %v2866 = vpop.xlane.xlu0 %2865
    %v2867 = vsel %vm58, %v2859, 0.0
    %2868 = vadd.xlane.f32.xlu0 %v2867
    %v2869 = vpop.xlane.xlu0 %2868
    %v2870 = vsel %vm58, %v2861, 0.0
    %2871 = vadd.xlane.f32.xlu0 %v2870
    %v2872 = vpop.xlane.xlu0 %2871
    %v2873 = vsel %vm58, %v2863, 0.0
    %2874 = vadd.xlane.f32.xlu0 %v2873
    %v2875 = vpop.xlane.xlu0 %2874
    %v2876 = vpack.c.bf16 %v2859, %v2857
    %v2877 = vpack.c.bf16 %v2863, %v2861
    %2878 = vrot.lane.b32.xlu0 %v2356, 80
    %v2879 = vpop.permute.xlu0 %2878
    %2880 = vrot.lane.b32.xlu0 %v2357, 80
    %v2881 = vpop.permute.xlu0 %2880
    %2882 = vrot.lane.b32.xlu0 %v2358, 80
    %v2883 = vpop.permute.xlu0 %2882
    %v2888 = vsel %vm58, %v2876, 0
    %v2891 = vsel %vm58, %v2877, 0
    %2893 = vmatprep.subr.bf16.mxu0 0
    %2894 = vmatpush1.bf16.msra.mxu0 0
    %2895 = vmatprep.subr.bf16.mxu0 0
    %2896 = vmatpush1.bf16.msra.mxu0 0
    %2897 = vmatprep.subr.bf16.mxu0 0
    %2898 = vmatpush1.bf16.msra.mxu0 0
    %2899 = vmatprep.subr.bf16.mxu0 0
    %2900 = vmatpush1.bf16.msra.mxu0 0
    %2901 = vmatprep.subr.bf16.mxu0 0
    %2902 = vmatpush1.bf16.msra.mxu0 0
    %2903 = vmatprep.subr.bf16.mxu0 0
    %2904 = vmatpush1.bf16.msra.mxu0 %v2883
    %2905 = vmatprep.subr.bf16.mxu0 0
    %2906 = vmatpush1.bf16.msra.mxu0 %v2881
    %2907 = vmatprep.subr.bf16.mxu0 0
    %2908 = vmatpush1.bf16.msra.mxu0 %v2879
    %2909 = vmatprep.subr.bf16.mxu0 0
    %2910 = vmatpush2.bf16.msra.mxu0 0
    %2911 = vmatprep.subr.bf16.mxu0 0
    %2912 = vmatpush2.bf16.msra.mxu0 0
    %2913 = vmatprep.subr.bf16.mxu0 0
    %2914 = vmatpush2.bf16.msra.mxu0 0
    %2915 = vmatprep.subr.bf16.mxu0 0
    %2916 = vmatpush2.bf16.msra.mxu0 0
    %2917 = vmatprep.subr.bf16.mxu0 0
    %2918 = vmatpush2.bf16.msra.mxu0 0
    %2919 = vmatprep.subr.bf16.mxu0 0
    %2920 = vmatpush2.bf16.msra.mxu0 0
    %2921 = vmatprep.subr.bf16.mxu0 0
    %2922 = vmatpush2.bf16.msra.mxu0 0
    %2923 = vmatprep.subr.bf16.mxu0 0
    %2924 = vmatpush2.bf16.msra.mxu0 0
    %2925 = vmatprep.mubr.bf16.mxu0 0
    %2926 = vmatmul.mubr.bf16.gmra.mxu0 %v2888
    %v2927 = vpop.f32.mrf.mxu0
    %v2928 = vadd.f32 0.0, %v2927
    %v2929 = vpop.f32.mrf.mxu0
    %v2930 = vpop.f32.mrf.mxu0
    %v2931 = vadd.f32 0.0, %v2930
    %v2932 = vpop.f32.mrf.mxu0
    %2933 = vmatprep.mubr.bf16.mxu0 0
    %2934 = vmatmul.mubr.bf16.gmra.mxu0 %v2891
    %v2935 = vpop.f32.mrf.mxu0
    %v2936 = vadd.f32 0.0, %v2935
    %v2937 = vpop.f32.mrf.mxu0
    %v2938 = vpop.f32.mrf.mxu0
    %v2939 = vadd.f32 0.0, %v2938
    %v2940 = vpop.f32.mrf.mxu0
    %2941 = vdwg.mxu0
    %v2942 = vrcp.pop %v2866
    %v2943 = vrcp.pop %v2869
    %v2944 = vrcp.pop %v2872
    %v2945 = vrcp.pop %v2875
    %v2946 = vmul.f32 %v2928, %v2942
    %v2947 = vmul.f32 %v2931, %v2943
    %v2948 = vmul.f32 %v2936, %v2944
    %v2949 = vmul.f32 %v2939, %v2945
    %2950 = vrot.lane.b32.xlu0 %v2164, 104
    %v2951 = vpop.permute.xlu0 %2950
    %2952 = vrot.lane.b32.xlu0 %v2165, 104
    %v2953 = vpop.permute.xlu0 %2952
    %2954 = vrot.lane.b32.xlu0 %v2356, 104
    %v2955 = vpop.permute.xlu0 %2954
    %2956 = vrot.lane.b32.xlu0 %v2357, 104
    %v2957 = vpop.permute.xlu0 %2956
    %2958 = vrot.lane.b32.xlu0 %v2358, 104
    %v2959 = vpop.permute.xlu0 %2958
    %v2961 = vsel %vm372, %v2951, 0
    %v2964 = vsel %vm372, %v2953, 0
    %v2967 = vsel %vm372, %v2955, 0
    %v2970 = vsel %vm372, %v2957, 0
    %v2973 = vsel %vm372, %v2959, 0
    %2975 = vmatprep.subr.bf16.mxu0 0
    %2976 = vmatpush1.bf16.xpose.msra.mxu0 0
    %2977 = vmatprep.subr.bf16.mxu0 0
    %2978 = vmatpush1.bf16.xpose.msra.mxu0 0
    %2979 = vmatprep.subr.bf16.mxu0 0
    %2980 = vmatpush1.bf16.xpose.msra.mxu0 0
    %2981 = vmatprep.subr.bf16.mxu0 0
    %2982 = vmatpush1.bf16.xpose.msra.mxu0 0
    %2983 = vmatprep.subr.bf16.mxu0 0
    %2984 = vmatpush1.bf16.xpose.msra.mxu0 0
    %2985 = vmatprep.subr.bf16.mxu0 0
    %2986 = vmatpush1.bf16.xpose.msra.mxu0 %v2973
    %2987 = vmatprep.subr.bf16.mxu0 0
    %2988 = vmatpush1.bf16.xpose.msra.mxu0 %v2970
    %2989 = vmatprep.subr.bf16.mxu0 0
    %2990 = vmatpush1.bf16.xpose.msra.mxu0 %v2967
    %2991 = vmatprep.subr.bf16.mxu0 0
    %2992 = vmatpush2.bf16.xpose.msra.mxu0 0
    %2993 = vmatprep.subr.bf16.mxu0 0
    %2994 = vmatpush2.bf16.xpose.msra.mxu0 0
    %2995 = vmatprep.subr.bf16.mxu0 0
    %2996 = vmatpush2.bf16.xpose.msra.mxu0 0
    %2997 = vmatprep.subr.bf16.mxu0 0
    %2998 = vmatpush2.bf16.xpose.msra.mxu0 0
    %2999 = vmatprep.subr.bf16.mxu0 0
    %3000 = vmatpush2.bf16.xpose.msra.mxu0 0
    %3001 = vmatprep.subr.bf16.mxu0 0
    %3002 = vmatpush2.bf16.xpose.msra.mxu0 0
    %3003 = vmatprep.subr.bf16.mxu0 0
    %3004 = vmatpush2.bf16.xpose.msra.mxu0 0
    %3005 = vmatprep.subr.bf16.mxu0 0
    %3006 = vmatpush2.bf16.xpose.msra.mxu0 0
    %3007 = vmatprep.mubr.bf16.mxu0 0
    %3008 = vmatmul.mubr.bf16.gmra.mxu0 %v2961
    %v3009 = vpop.f32.mrf.mxu0
    %v3010 = vadd.f32 0.0, %v3009
    %v3011 = vpop.f32.mrf.mxu0
    %v3012 = vpop.f32.mrf.mxu0
    %v3013 = vadd.f32 0.0, %v3012
    %v3014 = vpop.f32.mrf.mxu0
    %3015 = vmatprep.mubr.bf16.mxu0 0
    %3016 = vmatmul.mubr.bf16.gmra.mxu0 %v2964
    %v3017 = vpop.f32.mrf.mxu0
    %v3018 = vadd.f32 0.0, %v3017
    %v3019 = vpop.f32.mrf.mxu0
    %v3020 = vpop.f32.mrf.mxu0
    %v3021 = vadd.f32 0.0, %v3020
    %v3022 = vpop.f32.mrf.mxu0
    %3023 = vdwg.mxu0
    %v3024 = vmul.f32 %v3010, 0.35355338
    %v3025 = vmul.f32 %v3013, 0.35355338
    %v3026 = vmul.f32 %v3018, 0.35355338
    %v3027 = vmul.f32 %v3021, 0.35355338
    %v3028 = vadd.f32 %v3024, %v2375
    %v3029 = vadd.f32 %v3025, %v2376
    %v3030 = vadd.f32 %v3026, %v2377
    %v3031 = vadd.f32 %v3027, %v2378
    %v3032 = vsel %vm58, %v3028, -inf
    %3033 = vmax.xlane.f32.xlu0 %v3032
    %v3034 = vpop.xlane.xlu0 %3033
    %v3035 = vsel %vm58, %v3029, -inf
    %3036 = vmax.xlane.f32.xlu0 %v3035
    %v3037 = vpop.xlane.xlu0 %3036
    %v3038 = vsel %vm58, %v3030, -inf
    %3039 = vmax.xlane.f32.xlu0 %v3038
    %v3040 = vpop.xlane.xlu0 %3039
    %v3041 = vsel %vm58, %v3031, -inf
    %3042 = vmax.xlane.f32.xlu0 %v3041
    %v3043 = vpop.xlane.xlu0 %3042
    %v3044 = vsub.f32 %v3028, %v3034
    %v3045 = vsub.f32 %v3029, %v3037
    %v3046 = vsub.f32 %v3030, %v3040
    %v3047 = vsub.f32 %v3031, %v3043
    %v3048 = vmul.f32 %v3044, 1.442695
    %v3049 = vpow.pop %v3048
    %v3050 = vmul.f32 %v3045, 1.442695
    %v3051 = vpow.pop %v3050
    %v3052 = vmul.f32 %v3046, 1.442695
    %v3053 = vpow.pop %v3052
    %v3054 = vmul.f32 %v3047, 1.442695
    %v3055 = vpow.pop %v3054
    %v3056 = vsel %vm58, %v3049, 0.0
    %3057 = vadd.xlane.f32.xlu0 %v3056
    %v3058 = vpop.xlane.xlu0 %3057
    %v3059 = vsel %vm58, %v3051, 0.0
    %3060 = vadd.xlane.f32.xlu0 %v3059
    %v3061 = vpop.xlane.xlu0 %3060
    %v3062 = vsel %vm58, %v3053, 0.0
    %3063 = vadd.xlane.f32.xlu0 %v3062
    %v3064 = vpop.xlane.xlu0 %3063
    %v3065 = vsel %vm58, %v3055, 0.0
    %3066 = vadd.xlane.f32.xlu0 %v3065
    %v3067 = vpop.xlane.xlu0 %3066
    %v3068 = vpack.c.bf16 %v3051, %v3049
    %v3069 = vpack.c.bf16 %v3055, %v3053
    %3070 = vrot.lane.b32.xlu0 %v2356, 72
    %v3071 = vpop.permute.xlu0 %3070
    %3072 = vrot.lane.b32.xlu0 %v2357, 72
    %v3073 = vpop.permute.xlu0 %3072
    %3074 = vrot.lane.b32.xlu0 %v2358, 72
    %v3075 = vpop.permute.xlu0 %3074
    %v3080 = vsel %vm58, %v3068, 0
    %v3083 = vsel %vm58, %v3069, 0
    %3085 = vmatprep.subr.bf16.mxu0 0
    %3086 = vmatpush1.bf16.msra.mxu0 0
    %3087 = vmatprep.subr.bf16.mxu0 0
    %3088 = vmatpush1.bf16.msra.mxu0 0
    %3089 = vmatprep.subr.bf16.mxu0 0
    %3090 = vmatpush1.bf16.msra.mxu0 0
    %3091 = vmatprep.subr.bf16.mxu0 0
    %3092 = vmatpush1.bf16.msra.mxu0 0
    %3093 = vmatprep.subr.bf16.mxu0 0
    %3094 = vmatpush1.bf16.msra.mxu0 0
    %3095 = vmatprep.subr.bf16.mxu0 0
    %3096 = vmatpush1.bf16.msra.mxu0 %v3075
    %3097 = vmatprep.subr.bf16.mxu0 0
    %3098 = vmatpush1.bf16.msra.mxu0 %v3073
    %3099 = vmatprep.subr.bf16.mxu0 0
    %3100 = vmatpush1.bf16.msra.mxu0 %v3071
    %3101 = vmatprep.subr.bf16.mxu0 0
    %3102 = vmatpush2.bf16.msra.mxu0 0
    %3103 = vmatprep.subr.bf16.mxu0 0
    %3104 = vmatpush2.bf16.msra.mxu0 0
    %3105 = vmatprep.subr.bf16.mxu0 0
    %3106 = vmatpush2.bf16.msra.mxu0 0
    %3107 = vmatprep.subr.bf16.mxu0 0
    %3108 = vmatpush2.bf16.msra.mxu0 0
    %3109 = vmatprep.subr.bf16.mxu0 0
    %3110 = vmatpush2.bf16.msra.mxu0 0
    %3111 = vmatprep.subr.bf16.mxu0 0
    %3112 = vmatpush2.bf16.msra.mxu0 0
    %3113 = vmatprep.subr.bf16.mxu0 0
    %3114 = vmatpush2.bf16.msra.mxu0 0
    %3115 = vmatprep.subr.bf16.mxu0 0
    %3116 = vmatpush2.bf16.msra.mxu0 0
    %3117 = vmatprep.mubr.bf16.mxu0 0
    %3118 = vmatmul.mubr.bf16.gmra.mxu0 %v3080
    %v3119 = vpop.f32.mrf.mxu0
    %v3120 = vadd.f32 0.0, %v3119
    %v3121 = vpop.f32.mrf.mxu0
    %v3122 = vpop.f32.mrf.mxu0
    %v3123 = vadd.f32 0.0, %v3122
    %v3124 = vpop.f32.mrf.mxu0
    %3125 = vmatprep.mubr.bf16.mxu0 0
    %3126 = vmatmul.mubr.bf16.gmra.mxu0 %v3083
    %v3127 = vpop.f32.mrf.mxu0
    %v3128 = vadd.f32 0.0, %v3127
    %v3129 = vpop.f32.mrf.mxu0
    %v3130 = vpop.f32.mrf.mxu0
    %v3131 = vadd.f32 0.0, %v3130
    %v3132 = vpop.f32.mrf.mxu0
    %3133 = vdwg.mxu0
    %v3134 = vrcp.pop %v3058
    %v3135 = vrcp.pop %v3061
    %v3136 = vrcp.pop %v3064
    %v3137 = vrcp.pop %v3067
    %v3138 = vmul.f32 %v3120, %v3134
    %v3139 = vmul.f32 %v3123, %v3135
    %v3140 = vmul.f32 %v3128, %v3136
    %v3141 = vmul.f32 %v3131, %v3137
    %3146 = vrot.lane.b32.xlu0 %v2754, 8
    %v3147 = vpop.permute.xlu0 %3146
    %3148 = vrot.lane.b32.xlu0 %v2755, 8
    %v3149 = vpop.permute.xlu0 %3148
    %3150 = vrot.lane.b32.xlu0 %v2756, 8
    %v3151 = vpop.permute.xlu0 %3150
    %3152 = vrot.lane.b32.xlu0 %v2757, 8
    %v3153 = vpop.permute.xlu0 %3152
    %3162 = vrot.lane.b32.xlu0 %v2946, 16
    %v3163 = vpop.permute.xlu0 %3162
    %3164 = vrot.lane.b32.xlu0 %v2947, 16
    %v3165 = vpop.permute.xlu0 %3164
    %3166 = vrot.lane.b32.xlu0 %v2948, 16
    %v3167 = vpop.permute.xlu0 %3166
    %3168 = vrot.lane.b32.xlu0 %v2949, 16
    %v3169 = vpop.permute.xlu0 %3168
    %3178 = vrot.lane.b32.xlu0 %v3138, 24
    %v3179 = vpop.permute.xlu0 %3178
    %3180 = vrot.lane.b32.xlu0 %v3139, 24
    %v3181 = vpop.permute.xlu0 %3180
    %3182 = vrot.lane.b32.xlu0 %v3140, 24
    %v3183 = vpop.permute.xlu0 %3182
    %3184 = vrot.lane.b32.xlu0 %v3141, 24
    %v3185 = vpop.permute.xlu0 %3184
    %v3190 = vsel %vm372, %v2560, %v3147
    %v3191 = vsel %vm372, %v2561, %v3149
    %v3192 = vsel %vm372, %v2562, %v3151
    %v3193 = vsel %vm372, %v2563, %v3153
    %v3194 = vsel %vm1411, %v3190, %v3163
    %v3195 = vsel %vm1411, %v3191, %v3165
    %v3196 = vsel %vm1411, %v3192, %v3167
    %v3197 = vsel %vm1411, %v3193, %v3169
    %v3198 = vsel %vm1418, %v3194, %v3179
    %v3199 = vsel %vm1418, %v3195, %v3181
    %v3200 = vsel %vm1418, %v3196, %v3183
    %v3201 = vsel %vm1418, %v3197, %v3185
    %v3202 = vpack.c.bf16 %v3199, %v3198
    %v3203 = vpack.c.bf16 %v3201, %v3200
    %v3204 = vld [vmem:[%s2 + $0xa8] sm:$0xf]
    %v3205 = vld [vmem:[%s2 + $0xac] sm:$0xf]
    %v3206 = vld [vmem:[%s2 + $0xb0] sm:$0xf]
    %v3207 = vld [vmem:[%s2 + $0xb4] sm:$0xf]
    %v3212 = vunpack.c.l.b16 %v3204
    %v3213 = vunpack.c.l.b16 %v3205
    %v3214 = vunpack.c.l.b16 %v3206
    %v3215 = vunpack.c.l.b16 %v3207
    %v3216 = vpack.c.b16 %v3213, %v3212
    %v3217 = vpack.c.b16 %v3215, %v3214
    %v3221 = vsel %vm170, %v3202, 0
    %v3224 = vsel %vm170, %v3203, 0
    %3226 = vmatprep.subr.bf16.mxu0 0
    %3227 = vmatpush1.bf16.msra.mxu0 0
    %3228 = vmatprep.subr.bf16.mxu0 0
    %3229 = vmatpush1.bf16.msra.mxu0 0
    %3230 = vmatprep.subr.bf16.mxu0 0
    %3231 = vmatpush1.bf16.msra.mxu0 0
    %3232 = vmatprep.subr.bf16.mxu0 0
    %3233 = vmatpush1.bf16.msra.mxu0 0
    %3234 = vmatprep.subr.bf16.mxu0 0
    %3235 = vmatpush1.bf16.msra.mxu0 0
    %3236 = vmatprep.subr.bf16.mxu0 0
    %3237 = vmatpush1.bf16.msra.mxu0 0
    %3238 = vmatprep.subr.bf16.mxu0 0
    %3239 = vmatpush1.bf16.msra.mxu0 %v3217
    %3240 = vmatprep.subr.bf16.mxu0 0
    %3241 = vmatpush1.bf16.msra.mxu0 %v3216
    %3242 = vmatprep.subr.bf16.mxu0 0
    %3243 = vmatpush2.bf16.msra.mxu0 0
    %3244 = vmatprep.subr.bf16.mxu0 0
    %3245 = vmatpush2.bf16.msra.mxu0 0
    %3246 = vmatprep.subr.bf16.mxu0 0
    %3247 = vmatpush2.bf16.msra.mxu0 0
    %3248 = vmatprep.subr.bf16.mxu0 0
    %3249 = vmatpush2.bf16.msra.mxu0 0
    %3250 = vmatprep.subr.bf16.mxu0 0
    %3251 = vmatpush2.bf16.msra.mxu0 0
    %3252 = vmatprep.subr.bf16.mxu0 0
    %3253 = vmatpush2.bf16.msra.mxu0 0
    %3254 = vmatprep.subr.bf16.mxu0 0
    %3255 = vmatpush2.bf16.msra.mxu0 0
    %3256 = vmatprep.subr.bf16.mxu0 0
    %3257 = vmatpush2.bf16.msra.mxu0 0
    %3258 = vmatprep.mubr.bf16.mxu0 0
    %3259 = vmatmul.mubr.bf16.gmra.mxu0 %v3221
    %v3260 = vpop.f32.mrf.mxu0
    %v3261 = vadd.f32 0.0, %v3260
    %v3262 = vpop.f32.mrf.mxu0
    %v3263 = vpop.f32.mrf.mxu0
    %v3264 = vadd.f32 0.0, %v3263
    %v3265 = vpop.f32.mrf.mxu0
    %3266 = vmatprep.mubr.bf16.mxu0 0
    %3267 = vmatmul.mubr.bf16.gmra.mxu0 %v3224
    %v3268 = vpop.f32.mrf.mxu0
    %v3269 = vadd.f32 0.0, %v3268
    %v3270 = vpop.f32.mrf.mxu0
    %v3271 = vpop.f32.mrf.mxu0
    %v3272 = vadd.f32 0.0, %v3271
    %v3273 = vpop.f32.mrf.mxu0
    %3274 = vdwg.mxu0
    %v3275 = vadd.f32 %v2012, %v3261
    %v3276 = vadd.f32 %v2013, %v3264
    %v3277 = vadd.f32 %v2014, %v3269
    %v3278 = vadd.f32 %v2015, %v3272
    %v3279 = vld [vmem:[%s3 + $0x82] sm:$0x1]
    %v3280 = vlaneseq
    %v3281 = vshrl.u32 %v3280, 7
    %v3282 = vsub.s32 0, %v3281
    %v3283 = vrot.slane %v3279, %v3282
    %v3284 = vadd.f32 %v3275, %v3283
    %v3285 = vadd.f32 %v3276, %v3283
    %v3286 = vadd.f32 %v3277, %v3283
    %v3287 = vadd.f32 %v3278, %v3283
    %v3288 = vld [vmem:[%s3 + $0x7e] sm:$0x1]
    %v3289 = vld [vmem:[%s3 + $0x7f] sm:$0x1]
    %v3290 = vsel %vm170, %v3284, 0.0
    %3291 = vadd.xlane.f32.xlu0 %v3290
    %v3292 = vpop.xlane.xlu0 %3291
    %v3293 = vsel %vm170, %v3285, 0.0
    %3294 = vadd.xlane.f32.xlu0 %v3293
    %v3295 = vpop.xlane.xlu0 %3294
    %v3296 = vsel %vm170, %v3286, 0.0
    %3297 = vadd.xlane.f32.xlu0 %v3296
    %v3298 = vpop.xlane.xlu0 %3297
    %v3299 = vsel %vm170, %v3287, 0.0
    %3300 = vadd.xlane.f32.xlu0 %v3299
    %v3301 = vpop.xlane.xlu0 %3300
    %v3302 = vmul.f32 %v3292, %v189
    %v3303 = vmul.f32 %v3295, %v189
    %v3304 = vmul.f32 %v3298, %v189
    %v3305 = vmul.f32 %v3301, %v189
    %v3306 = vsub.f32 %v3284, %v3302
    %v3307 = vsub.f32 %v3285, %v3303
    %v3308 = vsub.f32 %v3286, %v3304
    %v3309 = vsub.f32 %v3287, %v3305
    %v3310 = vmul.f32 %v3306, %v3306
    %v3311 = vmul.f32 %v3307, %v3307
    %v3312 = vmul.f32 %v3308, %v3308
    %v3313 = vmul.f32 %v3309, %v3309
    %v3314 = vsel %vm170, %v3310, 0.0
    %3315 = vadd.xlane.f32.xlu0 %v3314
    %v3316 = vpop.xlane.xlu0 %3315
    %v3317 = vsel %vm170, %v3311, 0.0
    %3318 = vadd.xlane.f32.xlu0 %v3317
    %v3319 = vpop.xlane.xlu0 %3318
    %v3320 = vsel %vm170, %v3312, 0.0
    %3321 = vadd.xlane.f32.xlu0 %v3320
    %v3322 = vpop.xlane.xlu0 %3321
    %v3323 = vsel %vm170, %v3313, 0.0
    %3324 = vadd.xlane.f32.xlu0 %v3323
    %v3325 = vpop.xlane.xlu0 %3324
    %v3326 = vmul.f32 %v3316, %v189
    %v3327 = vmul.f32 %v3319, %v189
    %v3328 = vmul.f32 %v3322, %v189
    %v3329 = vmul.f32 %v3325, %v189
    %v3330 = vadd.f32 %v3326, 1e-05
    %v3331 = vadd.f32 %v3327, 1e-05
    %v3332 = vadd.f32 %v3328, 1e-05
    %v3333 = vadd.f32 %v3329, 1e-05
    %v3334 = vrsqrt.pop %v3330
    %v3335 = vrsqrt.pop %v3331
    %v3336 = vrsqrt.pop %v3332
    %v3337 = vrsqrt.pop %v3333
    %v3338 = vmul.f32 %v3306, %v3334
    %v3339 = vmul.f32 %v3307, %v3335
    %v3340 = vmul.f32 %v3308, %v3336
    %v3341 = vmul.f32 %v3309, %v3337
    %v3342 = vlaneseq
    %v3343 = vshrl.u32 %v3342, 7
    %v3344 = vsub.s32 0, %v3343
    %v3345 = vrot.slane %v3288, %v3344
    %v3346 = vmul.f32 %v3338, %v3345
    %v3347 = vmul.f32 %v3339, %v3345
    %v3348 = vmul.f32 %v3340, %v3345
    %v3349 = vmul.f32 %v3341, %v3345
    %v3350 = vlaneseq
    %v3351 = vshrl.u32 %v3350, 7
    %v3352 = vsub.s32 0, %v3351
    %v3353 = vrot.slane %v3289, %v3352
    %v3354 = vadd.f32 %v3346, %v3353
    %v3355 = vadd.f32 %v3347, %v3353
    %v3356 = vadd.f32 %v3348, %v3353
    %v3357 = vadd.f32 %v3349, %v3353
    %v3358 = vpack.c.bf16 %v3355, %v3354
    %v3359 = vpack.c.bf16 %v3357, %v3356
    %v3360 = vld [vmem:[%s2 + $0xb8] sm:$0xf]
    %v3361 = vld [vmem:[%s2 + $0xbc] sm:$0xf]
    %v3362 = vld [vmem:[%s2 + $0xc0] sm:$0xf]
    %v3363 = vld [vmem:[%s2 + $0xc4] sm:$0xf]
    %v3364 = vld [vmem:[%s3 + $0x83] sm:$0x1]
    %v3365 = vlaneseq
    %v3366 = vshrl.u32 %v3365, 7
    %v3367 = vsub.s32 0, %v3366
    %v3368 = vrot.slane %v3364, %v3367
    %v3373 = vunpack.c.l.b16 %v3360
    %v3374 = vunpack.c.l.b16 %v3361
    %v3375 = vunpack.c.l.b16 %v3362
    %v3376 = vunpack.c.l.b16 %v3363
    %v3377 = vpack.c.b16 %v3374, %v3373
    %v3378 = vpack.c.b16 %v3376, %v3375
    %v3382 = vsel %vm170, %v3358, 0
    %v3385 = vsel %vm170, %v3359, 0
    %3387 = vmatprep.subr.bf16.mxu0 0
    %3388 = vmatpush1.bf16.msra.mxu0 0
    %3389 = vmatprep.subr.bf16.mxu0 0
    %3390 = vmatpush1.bf16.msra.mxu0 0
    %3391 = vmatprep.subr.bf16.mxu0 0
    %3392 = vmatpush1.bf16.msra.mxu0 0
    %3393 = vmatprep.subr.bf16.mxu0 0
    %3394 = vmatpush1.bf16.msra.mxu0 0
    %3395 = vmatprep.subr.bf16.mxu0 0
    %3396 = vmatpush1.bf16.msra.mxu0 0
    %3397 = vmatprep.subr.bf16.mxu0 0
    %3398 = vmatpush1.bf16.msra.mxu0 0
    %3399 = vmatprep.subr.bf16.mxu0 0
    %3400 = vmatpush1.bf16.msra.mxu0 %v3378
    %3401 = vmatprep.subr.bf16.mxu0 0
    %3402 = vmatpush1.bf16.msra.mxu0 %v3377
    %3403 = vmatprep.subr.bf16.mxu0 0
    %3404 = vmatpush2.bf16.msra.mxu0 0
    %3405 = vmatprep.subr.bf16.mxu0 0
    %3406 = vmatpush2.bf16.msra.mxu0 0
    %3407 = vmatprep.subr.bf16.mxu0 0
    %3408 = vmatpush2.bf16.msra.mxu0 0
    %3409 = vmatprep.subr.bf16.mxu0 0
    %3410 = vmatpush2.bf16.msra.mxu0 0
    %3411 = vmatprep.subr.bf16.mxu0 0
    %3412 = vmatpush2.bf16.msra.mxu0 0
    %3413 = vmatprep.subr.bf16.mxu0 0
    %3414 = vmatpush2.bf16.msra.mxu0 0
    %3415 = vmatprep.subr.bf16.mxu0 0
    %3416 = vmatpush2.bf16.msra.mxu0 0
    %3417 = vmatprep.subr.bf16.mxu0 0
    %3418 = vmatpush2.bf16.msra.mxu0 0
    %3419 = vmatprep.mubr.bf16.mxu0 0
    %3420 = vmatmul.mubr.bf16.gmra.mxu0 %v3382
    %v3421 = vpop.f32.mrf.mxu0
    %v3422 = vadd.f32 %v3368, %v3421
    %v3423 = vpop.f32.mrf.mxu0
    %v3424 = vpop.f32.mrf.mxu0
    %v3425 = vadd.f32 %v3368, %v3424
    %v3426 = vpop.f32.mrf.mxu0
    %3427 = vmatprep.mubr.bf16.mxu0 0
    %3428 = vmatmul.mubr.bf16.gmra.mxu0 %v3385
    %v3429 = vpop.f32.mrf.mxu0
    %v3430 = vadd.f32 %v3368, %v3429
    %v3431 = vpop.f32.mrf.mxu0
    %v3432 = vpop.f32.mrf.mxu0
    %v3433 = vadd.f32 %v3368, %v3432
    %v3434 = vpop.f32.mrf.mxu0
    %3435 = vdwg.mxu0
    %v3436 = vmul.f32 %v3422, %v3422
    %v3437 = vmul.f32 %v3425, %v3425
    %v3438 = vmul.f32 %v3430, %v3430
    %v3439 = vmul.f32 %v3433, %v3433
    %v3440 = vmul.f32 %v3422, %v3436
    %v3441 = vmul.f32 %v3425, %v3437
    %v3442 = vmul.f32 %v3430, %v3438
    %v3443 = vmul.f32 %v3433, %v3439
    %v3444 = vmul.f32 %v3440, 0.044715
    %v3445 = vmul.f32 %v3441, 0.044715
    %v3446 = vmul.f32 %v3442, 0.044715
    %v3447 = vmul.f32 %v3443, 0.044715
    %v3448 = vadd.f32 %v3422, %v3444
    %v3449 = vadd.f32 %v3425, %v3445
    %v3450 = vadd.f32 %v3430, %v3446
    %v3451 = vadd.f32 %v3433, %v3447
    %v3452 = vmul.f32 %v3448, 0.7978846
    %v3453 = vmul.f32 %v3449, 0.7978846
    %v3454 = vmul.f32 %v3450, 0.7978846
    %v3455 = vmul.f32 %v3451, 0.7978846
    %v3456 = vtanh.pop %v3452
    %v3457 = vtanh.pop %v3453
    %v3458 = vtanh.pop %v3454
    %v3459 = vtanh.pop %v3455
    %v3460 = vadd.f32 %v3456, 1.0
    %v3461 = vadd.f32 %v3457, 1.0
    %v3462 = vadd.f32 %v3458, 1.0
    %v3463 = vadd.f32 %v3459, 1.0
    %v3464 = vmul.f32 %v3460, 0.5
    %v3465 = vmul.f32 %v3461, 0.5
    %v3466 = vmul.f32 %v3462, 0.5
    %v3467 = vmul.f32 %v3463, 0.5
    %v3468 = vmul.f32 %v3422, %v3464
    %v3469 = vmul.f32 %v3425, %v3465
    %v3470 = vmul.f32 %v3430, %v3466
    %v3471 = vmul.f32 %v3433, %v3467
    %v3472 = vpack.c.bf16 %v3469, %v3468
    %v3473 = vpack.c.bf16 %v3471, %v3470
    %v3474 = vld [vmem:[%s2 + $0xc8] sm:$0xf]
    %v3475 = vld [vmem:[%s2 + $0xcc] sm:$0xf]
    %v3476 = vld [vmem:[%s2 + $0xd0] sm:$0xf]
    %v3477 = vld [vmem:[%s2 + $0xd4] sm:$0xf]
    %v3478 = vld [vmem:[%s2 + $0xd8] sm:$0xf]
    %v3479 = vld [vmem:[%s2 + $0xdc] sm:$0xf]
    %v3480 = vld [vmem:[%s2 + $0xe0] sm:$0xf]
    %v3481 = vld [vmem:[%s2 + $0xe4] sm:$0xf]
    %v3482 = vld [vmem:[%s2 + $0xe8] sm:$0xf]
    %v3483 = vld [vmem:[%s2 + $0xec] sm:$0xf]
    %v3484 = vld [vmem:[%s2 + $0xf0] sm:$0xf]
    %v3485 = vld [vmem:[%s2 + $0xf4] sm:$0xf]
    %v3486 = vld [vmem:[%s2 + $0xf8] sm:$0xf]
    %v3487 = vld [vmem:[%s2 + $0xfc] sm:$0xf]
    %v3488 = vld [vmem:[%s2 + $0x100] sm:$0xf]
    %v3489 = vld [vmem:[%s2 + $0x104] sm:$0xf]
    %v3506 = vunpack.c.l.b16 %v3474
    %v3507 = vunpack.c.l.b16 %v3475
    %v3508 = vunpack.c.l.b16 %v3476
    %v3509 = vunpack.c.l.b16 %v3477
    %v3510 = vunpack.c.l.b16 %v3478
    %v3511 = vunpack.c.l.b16 %v3479
    %v3512 = vunpack.c.l.b16 %v3480
    %v3513 = vunpack.c.l.b16 %v3481
    %v3514 = vunpack.c.l.b16 %v3482
    %v3515 = vunpack.c.l.b16 %v3483
    %v3516 = vunpack.c.l.b16 %v3484
    %v3517 = vunpack.c.l.b16 %v3485
    %v3518 = vunpack.c.l.b16 %v3486
    %v3519 = vunpack.c.l.b16 %v3487
    %v3520 = vunpack.c.l.b16 %v3488
    %v3521 = vunpack.c.l.b16 %v3489
    %v3522 = vpack.c.b16 %v3507, %v3506
    %v3523 = vpack.c.b16 %v3509, %v3508
    %v3524 = vpack.c.b16 %v3511, %v3510
    %v3525 = vpack.c.b16 %v3513, %v3512
    %v3526 = vpack.c.b16 %v3515, %v3514
    %v3527 = vpack.c.b16 %v3517, %v3516
    %v3528 = vpack.c.b16 %v3519, %v3518
    %v3529 = vpack.c.b16 %v3521, %v3520
    %3538 = vmatprep.subr.bf16.mxu0 0
    %3539 = vmatpush1.bf16.msra.mxu0 %v3529
    %3540 = vmatprep.subr.bf16.mxu0 0
    %3541 = vmatpush1.bf16.msra.mxu0 %v3528
    %3542 = vmatprep.subr.bf16.mxu0 0
    %3543 = vmatpush1.bf16.msra.mxu0 %v3527
    %3544 = vmatprep.subr.bf16.mxu0 0
    %3545 = vmatpush1.bf16.msra.mxu0 %v3526
    %3546 = vmatprep.subr.bf16.mxu0 0
    %3547 = vmatpush1.bf16.msra.mxu0 %v3525
    %3548 = vmatprep.subr.bf16.mxu0 0
    %3549 = vmatpush1.bf16.msra.mxu0 %v3524
    %3550 = vmatprep.subr.bf16.mxu0 0
    %3551 = vmatpush1.bf16.msra.mxu0 %v3523
    %3552 = vmatprep.subr.bf16.mxu0 0
    %3553 = vmatpush1.bf16.msra.mxu0 %v3522
    %3554 = vmatprep.subr.bf16.mxu0 0
    %3555 = vmatpush2.bf16.msra.mxu0 0
    %3556 = vmatprep.subr.bf16.mxu0 0
    %3557 = vmatpush2.bf16.msra.mxu0 0
    %3558 = vmatprep.subr.bf16.mxu0 0
    %3559 = vmatpush2.bf16.msra.mxu0 0
    %3560 = vmatprep.subr.bf16.mxu0 0
    %3561 = vmatpush2.bf16.msra.mxu0 0
    %3562 = vmatprep.subr.bf16.mxu0 0
    %3563 = vmatpush2.bf16.msra.mxu0 0
    %3564 = vmatprep.subr.bf16.mxu0 0
    %3565 = vmatpush2.bf16.msra.mxu0 0
    %3566 = vmatprep.subr.bf16.mxu0 0
    %3567 = vmatpush2.bf16.msra.mxu0 0
    %3568 = vmatprep.subr.bf16.mxu0 0
    %3569 = vmatpush2.bf16.msra.mxu0 0
    %3570 = vmatprep.mubr.bf16.mxu0 0
    %3571 = vmatmul.mubr.bf16.gmra.mxu0 %v3472
    %v3572 = vpop.f32.mrf.mxu0
    %v3573 = vadd.f32 0.0, %v3572
    %v3574 = vpop.f32.mrf.mxu0
    %v3575 = vpop.f32.mrf.mxu0
    %v3576 = vadd.f32 0.0, %v3575
    %v3577 = vpop.f32.mrf.mxu0
    %3578 = vmatprep.mubr.bf16.mxu0 0
    %3579 = vmatmul.mubr.bf16.gmra.mxu0 %v3473
    %v3580 = vpop.f32.mrf.mxu0
    %v3581 = vadd.f32 0.0, %v3580
    %v3582 = vpop.f32.mrf.mxu0
    %v3583 = vpop.f32.mrf.mxu0
    %v3584 = vadd.f32 0.0, %v3583
    %v3585 = vpop.f32.mrf.mxu0
    %3586 = vdwg.mxu0
    %v3587 = vadd.f32 %v3284, %v3573
    %v3588 = vadd.f32 %v3285, %v3576
    %v3589 = vadd.f32 %v3286, %v3581
    %v3590 = vadd.f32 %v3287, %v3584
    %v3591 = vld [vmem:[%s3 + $0x84] sm:$0x1]
    %v3592 = vlaneseq
    %v3593 = vshrl.u32 %v3592, 7
    %v3594 = vsub.s32 0, %v3593
    %v3595 = vrot.slane %v3591, %v3594
    %v3596 = vadd.f32 %v3587, %v3595
    %v3597 = vadd.f32 %v3588, %v3595
    %v3598 = vadd.f32 %v3589, %v3595
    %v3599 = vadd.f32 %v3590, %v3595
    %v3600 = vpack.c.bf16 %v3597, %v3596
    %v3601 = vpack.c.bf16 %v3599, %v3598
    %v3602 = vld [vmem:[%s2 + $0x108] sm:$0xf]
    %v3603 = vld [vmem:[%s2 + $0x10c] sm:$0xf]
    %v3604 = vld [vmem:[%s2 + $0x110] sm:$0xf]
    %v3605 = vld [vmem:[%s2 + $0x114] sm:$0xf]
    %v3606 = vld [vmem:[%s3 + $0x85] sm:$0x1]
    %v3607 = vlaneseq
    %v3608 = vshrl.u32 %v3607, 7
    %v3609 = vsub.s32 0, %v3608
    %v3610 = vrot.slane %v3606, %v3609
    %v3615 = vunpack.c.l.b16 %v3602
    %v3616 = vunpack.c.l.b16 %v3603
    %v3617 = vunpack.c.l.b16 %v3604
    %v3618 = vunpack.c.l.b16 %v3605
    %v3619 = vpack.c.b16 %v3616, %v3615
    %v3620 = vpack.c.b16 %v3618, %v3617
    %v3624 = vsel %vm170, %v3600, 0
    %v3627 = vsel %vm170, %v3601, 0
    %3629 = vmatprep.subr.bf16.mxu0 0
    %3630 = vmatpush1.bf16.msra.mxu0 0
    %3631 = vmatprep.subr.bf16.mxu0 0
    %3632 = vmatpush1.bf16.msra.mxu0 0
    %3633 = vmatprep.subr.bf16.mxu0 0
    %3634 = vmatpush1.bf16.msra.mxu0 0
    %3635 = vmatprep.subr.bf16.mxu0 0
    %3636 = vmatpush1.bf16.msra.mxu0 0
    %3637 = vmatprep.subr.bf16.mxu0 0
    %3638 = vmatpush1.bf16.msra.mxu0 0
    %3639 = vmatprep.subr.bf16.mxu0 0
    %3640 = vmatpush1.bf16.msra.mxu0 0
    %3641 = vmatprep.subr.bf16.mxu0 0
    %3642 = vmatpush1.bf16.msra.mxu0 %v3620
    %3643 = vmatprep.subr.bf16.mxu0 0
    %3644 = vmatpush1.bf16.msra.mxu0 %v3619
    %3645 = vmatprep.subr.bf16.mxu0 0
    %3646 = vmatpush2.bf16.msra.mxu0 0
    %3647 = vmatprep.subr.bf16.mxu0 0
    %3648 = vmatpush2.bf16.msra.mxu0 0
    %3649 = vmatprep.subr.bf16.mxu0 0
    %3650 = vmatpush2.bf16.msra.mxu0 0
    %3651 = vmatprep.subr.bf16.mxu0 0
    %3652 = vmatpush2.bf16.msra.mxu0 0
    %3653 = vmatprep.subr.bf16.mxu0 0
    %3654 = vmatpush2.bf16.msra.mxu0 0
    %3655 = vmatprep.subr.bf16.mxu0 0
    %3656 = vmatpush2.bf16.msra.mxu0 0
    %3657 = vmatprep.subr.bf16.mxu0 0
    %3658 = vmatpush2.bf16.msra.mxu0 0
    %3659 = vmatprep.subr.bf16.mxu0 0
    %3660 = vmatpush2.bf16.msra.mxu0 0
    %3661 = vmatprep.mubr.bf16.mxu0 0
    %3662 = vmatmul.mubr.bf16.gmra.mxu0 %v3624
    %v3663 = vpop.f32.mrf.mxu0
    %v3664 = vadd.f32 %v3610, %v3663
    %v3665 = vpop.f32.mrf.mxu0
    %v3666 = vpop.f32.mrf.mxu0
    %v3667 = vadd.f32 %v3610, %v3666
    %v3668 = vpop.f32.mrf.mxu0
    %3669 = vmatprep.mubr.bf16.mxu0 0
    %3670 = vmatmul.mubr.bf16.gmra.mxu0 %v3627
    %v3671 = vpop.f32.mrf.mxu0
    %v3672 = vadd.f32 %v3610, %v3671
    %v3673 = vpop.f32.mrf.mxu0
    %v3674 = vpop.f32.mrf.mxu0
    %v3675 = vadd.f32 %v3610, %v3674
    %v3676 = vpop.f32.mrf.mxu0
    %3677 = vdwg.mxu0
    %v3678 = vsel %vm2359, 16, 0
    %v3679 = vsel %vm2360, 16, 0
    %v3680 = vsel %vm2361, 16, 0
    %v3681 = vsel %vm2362, 16, 0
    %v3682 = vsub.s32 %v126, %v3678
    %v3683 = vsub.s32 %v127, %v3679
    %v3684 = vsub.s32 %v128, %v3680
    %v3685 = vsub.s32 %v129, %v3681
    %vm3686 = vcmp.ge.s32.totalorder %v3682, 8
    %vm3687 = vcmp.ge.s32.totalorder %v3683, 8
    %vm3688 = vcmp.ge.s32.totalorder %v3684, 8
    %vm3689 = vcmp.ge.s32.totalorder %v3685, 8
    %v3690 = vld [vmem:[%s1] sm:$0xff]
    %v3691 = vld [vmem:[%s1 + $0x8] sm:$0xff]
    %v3692 = vld [vmem:[%s1 + $0x10] sm:$0xff]
    %v3693 = vld [vmem:[%s1 + $0x18] sm:$0xff]
    %v3694 = vsel %vm3686, %v3690, %v3664
    %v3695 = vsel %vm3687, %v3691, %v3667
    %v3696 = vsel %vm3688, %v3692, %v3672
    %v3697 = vsel %vm3689, %v3693, %v3675
    %v3698 = vld [vmem:[%s3 + $0x50] sm:$0xff]
    %v3699 = vld [vmem:[%s3 + $0x58] sm:$0xff]
    %v3700 = vld [vmem:[%s3 + $0x60] sm:$0xff]
    %v3701 = vld [vmem:[%s3 + $0x68] sm:$0xff]
    %v3702 = vadd.f32 %v3694, %v3698
    %v3703 = vadd.f32 %v3695, %v3699
    %v3704 = vadd.f32 %v3696, %v3700
    %v3705 = vadd.f32 %v3697, %v3701
    %vm3706 = vcmp.ge.s32.totalorder %v133, 16
    %v3707 = vsel %vm3706, 16, 0
    %v3708 = vsub.s32 %v133, %v3707
    %vm3709 = vmxor %vm2359, %vm3706
    %vm3710 = vmxor %vm2360, %vm3706
    %vm3711 = vmxor %vm2361, %vm3706
    %vm3712 = vmxor %vm2362, %vm3706
    %vm3713 = vmxor %vm3709, 1
    %vm3714 = vmxor %vm3710, 1
    %vm3715 = vmxor %vm3711, 1
    %vm3716 = vmxor %vm3712, 1
    %vm3717 = vcmp.le.s32.totalorder %v3708, %v3682
    %vm3718 = vcmp.le.s32.totalorder %v3708, %v3683
    %vm3719 = vcmp.le.s32.totalorder %v3708, %v3684
    %vm3720 = vcmp.le.s32.totalorder %v3708, %v3685
    %vm3721 = vmand %vm3713, %vm3717
    %vm3722 = vmand %vm3714, %vm3718
    %vm3723 = vmand %vm3715, %vm3719
    %vm3724 = vmand %vm3716, %vm3720
    %v3725 = vsel %vm3721, 0.0, -1e+30
    %v3726 = vsel %vm3722, 0.0, -1e+30
    %v3727 = vsel %vm3723, 0.0, -1e+30
    %v3728 = vsel %vm3724, 0.0, -1e+30
    %v3729 = vld [vmem:[%s3 + $0x86] sm:$0x1]
    %v3730 = vld [vmem:[%s3 + $0x87] sm:$0x1]
    %v3731 = vsel %vm170, %v3702, 0.0
    %3732 = vadd.xlane.f32.xlu0 %v3731
    %v3733 = vpop.xlane.xlu0 %3732
    %v3734 = vsel %vm170, %v3703, 0.0
    %3735 = vadd.xlane.f32.xlu0 %v3734
    %v3736 = vpop.xlane.xlu0 %3735
    %v3737 = vsel %vm170, %v3704, 0.0
    %3738 = vadd.xlane.f32.xlu0 %v3737
    %v3739 = vpop.xlane.xlu0 %3738
    %v3740 = vsel %vm170, %v3705, 0.0
    %3741 = vadd.xlane.f32.xlu0 %v3740
    %v3742 = vpop.xlane.xlu0 %3741
    %v3743 = vmul.f32 %v3733, %v189
    %v3744 = vmul.f32 %v3736, %v189
    %v3745 = vmul.f32 %v3739, %v189
    %v3746 = vmul.f32 %v3742, %v189
    %v3747 = vsub.f32 %v3702, %v3743
    %v3748 = vsub.f32 %v3703, %v3744
    %v3749 = vsub.f32 %v3704, %v3745
    %v3750 = vsub.f32 %v3705, %v3746
    %v3751 = vmul.f32 %v3747, %v3747
    %v3752 = vmul.f32 %v3748, %v3748
    %v3753 = vmul.f32 %v3749, %v3749
    %v3754 = vmul.f32 %v3750, %v3750
    %v3755 = vsel %vm170, %v3751, 0.0
    %3756 = vadd.xlane.f32.xlu0 %v3755
    %v3757 = vpop.xlane.xlu0 %3756
    %v3758 = vsel %vm170, %v3752, 0.0
    %3759 = vadd.xlane.f32.xlu0 %v3758
    %v3760 = vpop.xlane.xlu0 %3759
    %v3761 = vsel %vm170, %v3753, 0.0
    %3762 = vadd.xlane.f32.xlu0 %v3761
    %v3763 = vpop.xlane.xlu0 %3762
    %v3764 = vsel %vm170, %v3754, 0.0
    %3765 = vadd.xlane.f32.xlu0 %v3764
    %v3766 = vpop.xlane.xlu0 %3765
    %v3767 = vmul.f32 %v3757, %v189
    %v3768 = vmul.f32 %v3760, %v189
    %v3769 = vmul.f32 %v3763, %v189
    %v3770 = vmul.f32 %v3766, %v189
    %v3771 = vadd.f32 %v3767, 1e-05
    %v3772 = vadd.f32 %v3768, 1e-05
    %v3773 = vadd.f32 %v3769, 1e-05
    %v3774 = vadd.f32 %v3770, 1e-05
    %v3775 = vrsqrt.pop %v3771
    %v3776 = vrsqrt.pop %v3772
    %v3777 = vrsqrt.pop %v3773
    %v3778 = vrsqrt.pop %v3774
    %v3779 = vmul.f32 %v3747, %v3775
    %v3780 = vmul.f32 %v3748, %v3776
    %v3781 = vmul.f32 %v3749, %v3777
    %v3782 = vmul.f32 %v3750, %v3778
    %v3783 = vlaneseq
    %v3784 = vshrl.u32 %v3783, 7
    %v3785 = vsub.s32 0, %v3784
    %v3786 = vrot.slane %v3729, %v3785
    %v3787 = vmul.f32 %v3779, %v3786
    %v3788 = vmul.f32 %v3780, %v3786
    %v3789 = vmul.f32 %v3781, %v3786
    %v3790 = vmul.f32 %v3782, %v3786
    %v3791 = vlaneseq
    %v3792 = vshrl.u32 %v3791, 7
    %v3793 = vsub.s32 0, %v3792
    %v3794 = vrot.slane %v3730, %v3793
    %v3795 = vadd.f32 %v3787, %v3794
    %v3796 = vadd.f32 %v3788, %v3794
    %v3797 = vadd.f32 %v3789, %v3794
    %v3798 = vadd.f32 %v3790, %v3794
    %v3799 = vpack.c.bf16 %v3796, %v3795
    %v3800 = vpack.c.bf16 %v3798, %v3797
    %v3801 = vld [vmem:[%s2 + $0x118] sm:$0xf]
    %v3802 = vld [vmem:[%s2 + $0x11c] sm:$0xf]
    %v3803 = vld [vmem:[%s2 + $0x120] sm:$0xf]
    %v3804 = vld [vmem:[%s2 + $0x124] sm:$0xf]
    %v3805 = vld [vmem:[%s3 + $0x8a] sm:$0x1]
    %v3806 = vlaneseq
    %v3807 = vshrl.u32 %v3806, 7
    %v3808 = vsub.s32 0, %v3807
    %v3809 = vrot.slane %v3805, %v3808
    %v3814 = vunpack.c.l.b16 %v3801
    %v3815 = vunpack.c.l.b16 %v3802
    %v3816 = vunpack.c.l.b16 %v3803
    %v3817 = vunpack.c.l.b16 %v3804
    %v3818 = vpack.c.b16 %v3815, %v3814
    %v3819 = vpack.c.b16 %v3817, %v3816
    %v3823 = vsel %vm170, %v3799, 0
    %v3826 = vsel %vm170, %v3800, 0
    %3828 = vmatprep.subr.bf16.mxu0 0
    %3829 = vmatpush1.bf16.msra.mxu0 0
    %3830 = vmatprep.subr.bf16.mxu0 0
    %3831 = vmatpush1.bf16.msra.mxu0 0
    %3832 = vmatprep.subr.bf16.mxu0 0
    %3833 = vmatpush1.bf16.msra.mxu0 0
    %3834 = vmatprep.subr.bf16.mxu0 0
    %3835 = vmatpush1.bf16.msra.mxu0 0
    %3836 = vmatprep.subr.bf16.mxu0 0
    %3837 = vmatpush1.bf16.msra.mxu0 0
    %3838 = vmatprep.subr.bf16.mxu0 0
    %3839 = vmatpush1.bf16.msra.mxu0 0
    %3840 = vmatprep.subr.bf16.mxu0 0
    %3841 = vmatpush1.bf16.msra.mxu0 %v3819
    %3842 = vmatprep.subr.bf16.mxu0 0
    %3843 = vmatpush1.bf16.msra.mxu0 %v3818
    %3844 = vmatprep.subr.bf16.mxu0 0
    %3845 = vmatpush2.bf16.msra.mxu0 0
    %3846 = vmatprep.subr.bf16.mxu0 0
    %3847 = vmatpush2.bf16.msra.mxu0 0
    %3848 = vmatprep.subr.bf16.mxu0 0
    %3849 = vmatpush2.bf16.msra.mxu0 0
    %3850 = vmatprep.subr.bf16.mxu0 0
    %3851 = vmatpush2.bf16.msra.mxu0 0
    %3852 = vmatprep.subr.bf16.mxu0 0
    %3853 = vmatpush2.bf16.msra.mxu0 0
    %3854 = vmatprep.subr.bf16.mxu0 0
    %3855 = vmatpush2.bf16.msra.mxu0 0
    %3856 = vmatprep.subr.bf16.mxu0 0
    %3857 = vmatpush2.bf16.msra.mxu0 0
    %3858 = vmatprep.subr.bf16.mxu0 0
    %3859 = vmatpush2.bf16.msra.mxu0 0
    %3860 = vmatprep.mubr.bf16.mxu0 0
    %3861 = vmatmul.mubr.bf16.gmra.mxu0 %v3823
    %v3862 = vpop.f32.mrf.mxu0
    %v3863 = vadd.f32 %v3809, %v3862
    %v3864 = vpop.f32.mrf.mxu0
    %v3865 = vpop.f32.mrf.mxu0
    %v3866 = vadd.f32 %v3809, %v3865
    %v3867 = vpop.f32.mrf.mxu0
    %3868 = vmatprep.mubr.bf16.mxu0 0
    %3869 = vmatmul.mubr.bf16.gmra.mxu0 %v3826
    %v3870 = vpop.f32.mrf.mxu0
    %v3871 = vadd.f32 %v3809, %v3870
    %v3872 = vpop.f32.mrf.mxu0
    %v3873 = vpop.f32.mrf.mxu0
    %v3874 = vadd.f32 %v3809, %v3873
    %v3875 = vpop.f32.mrf.mxu0
    %3876 = vdwg.mxu0
    %v3877 = vpack.c.bf16 %v3866, %v3863
    %v3878 = vpack.c.bf16 %v3874, %v3871
    %3881 = vrot.lane.b32.xlu0 %v3877, 96
    %v3882 = vpop.permute.xlu0 %3881
    %3883 = vrot.lane.b32.xlu0 %v3878, 96
    %v3884 = vpop.permute.xlu0 %3883
    %v3886 = vsel %vm372, %v3877, 0
    %v3889 = vsel %vm372, %v3878, 0
    %v3892 = vsel %vm372, %v3882, 0
    %v3895 = vsel %vm372, %v3884, 0
    %3897 = vmatprep.subr.bf16.mxu0 0
    %3898 = vmatpush1.bf16.xpose.msra.mxu0 0
    %3899 = vmatprep.subr.bf16.mxu0 0
    %3900 = vmatpush1.bf16.xpose.msra.mxu0 0
    %3901 = vmatprep.subr.bf16.mxu0 0
    %3902 = vmatpush1.bf16.xpose.msra.mxu0 0
    %3903 = vmatprep.subr.bf16.mxu0 0
    %3904 = vmatpush1.bf16.xpose.msra.mxu0 0
    %3905 = vmatprep.subr.bf16.mxu0 0
    %3906 = vmatpush1.bf16.xpose.msra.mxu0 0
    %3907 = vmatprep.subr.bf16.mxu0 0
    %3908 = vmatpush1.bf16.xpose.msra.mxu0 0
    %3909 = vmatprep.subr.bf16.mxu0 0
    %3910 = vmatpush1.bf16.xpose.msra.mxu0 %v3895
    %3911 = vmatprep.subr.bf16.mxu0 0
    %3912 = vmatpush1.bf16.xpose.msra.mxu0 %v3892
    %3913 = vmatprep.subr.bf16.mxu0 0
    %3914 = vmatpush2.bf16.xpose.msra.mxu0 0
    %3915 = vmatprep.subr.bf16.mxu0 0
    %3916 = vmatpush2.bf16.xpose.msra.mxu0 0
    %3917 = vmatprep.subr.bf16.mxu0 0
    %3918 = vmatpush2.bf16.xpose.msra.mxu0 0
    %3919 = vmatprep.subr.bf16.mxu0 0
    %3920 = vmatpush2.bf16.xpose.msra.mxu0 0
    %3921 = vmatprep.subr.bf16.mxu0 0
    %3922 = vmatpush2.bf16.xpose.msra.mxu0 0
    %3923 = vmatprep.subr.bf16.mxu0 0
    %3924 = vmatpush2.bf16.xpose.msra.mxu0 0
    %3925 = vmatprep.subr.bf16.mxu0 0
    %3926 = vmatpush2.bf16.xpose.msra.mxu0 0
    %3927 = vmatprep.subr.bf16.mxu0 0
    %3928 = vmatpush2.bf16.xpose.msra.mxu0 0
    %3929 = vmatprep.mubr.bf16.mxu0 0
    %3930 = vmatmul.mubr.bf16.gmra.mxu0 %v3886
    %v3931 = vpop.f32.mrf.mxu0
    %v3932 = vadd.f32 0.0, %v3931
    %v3933 = vpop.f32.mrf.mxu0
    %v3934 = vpop.f32.mrf.mxu0
    %v3935 = vadd.f32 0.0, %v3934
    %v3936 = vpop.f32.mrf.mxu0
    %3937 = vmatprep.mubr.bf16.mxu0 0
    %3938 = vmatmul.mubr.bf16.gmra.mxu0 %v3889
    %v3939 = vpop.f32.mrf.mxu0
    %v3940 = vadd.f32 0.0, %v3939
    %v3941 = vpop.f32.mrf.mxu0
    %v3942 = vpop.f32.mrf.mxu0
    %v3943 = vadd.f32 0.0, %v3942
    %v3944 = vpop.f32.mrf.mxu0
    %3945 = vdwg.mxu0
    %v3946 = vmul.f32 %v3932, 0.35355338
    %v3947 = vmul.f32 %v3935, 0.35355338
    %v3948 = vmul.f32 %v3940, 0.35355338
    %v3949 = vmul.f32 %v3943, 0.35355338
    %v3950 = vadd.f32 %v3946, %v3725
    %v3951 = vadd.f32 %v3947, %v3726
    %v3952 = vadd.f32 %v3948, %v3727
    %v3953 = vadd.f32 %v3949, %v3728
    %v3954 = vsel %vm170, %v3950, -inf
    %3955 = vmax.xlane.f32.xlu0 %v3954
    %v3956 = vpop.xlane.xlu0 %3955
    %v3957 = vsel %vm170, %v3951, -inf
    %3958 = vmax.xlane.f32.xlu0 %v3957
    %v3959 = vpop.xlane.xlu0 %3958
    %v3960 = vsel %vm170, %v3952, -inf
    %3961 = vmax.xlane.f32.xlu0 %v3960
    %v3962 = vpop.xlane.xlu0 %3961
    %v3963 = vsel %vm170, %v3953, -inf
    %3964 = vmax.xlane.f32.xlu0 %v3963
    %v3965 = vpop.xlane.xlu0 %3964
    %v3966 = vsub.f32 %v3950, %v3956
    %v3967 = vsub.f32 %v3951, %v3959
    %v3968 = vsub.f32 %v3952, %v3962
    %v3969 = vsub.f32 %v3953, %v3965
    %v3970 = vmul.f32 %v3966, 1.442695
    %v3971 = vpow.pop %v3970
    %v3972 = vmul.f32 %v3967, 1.442695
    %v3973 = vpow.pop %v3972
    %v3974 = vmul.f32 %v3968, 1.442695
    %v3975 = vpow.pop %v3974
    %v3976 = vmul.f32 %v3969, 1.442695
    %v3977 = vpow.pop %v3976
    %v3978 = vsel %vm170, %v3971, 0.0
    %3979 = vadd.xlane.f32.xlu0 %v3978
    %v3980 = vpop.xlane.xlu0 %3979
    %v3981 = vsel %vm170, %v3973, 0.0
    %3982 = vadd.xlane.f32.xlu0 %v3981
    %v3983 = vpop.xlane.xlu0 %3982
    %v3984 = vsel %vm170, %v3975, 0.0
    %3985 = vadd.xlane.f32.xlu0 %v3984
    %v3986 = vpop.xlane.xlu0 %3985
    %v3987 = vsel %vm170, %v3977, 0.0
    %3988 = vadd.xlane.f32.xlu0 %v3987
    %v3989 = vpop.xlane.xlu0 %3988
    %v3990 = vpack.c.bf16 %v3973, %v3971
    %v3991 = vpack.c.bf16 %v3977, %v3975
    %3992 = vrot.lane.b32.xlu0 %v3877, 64
    %v3993 = vpop.permute.xlu0 %3992
    %3994 = vrot.lane.b32.xlu0 %v3878, 64
    %v3995 = vpop.permute.xlu0 %3994
    %v3999 = vsel %vm170, %v3990, 0
    %v4002 = vsel %vm170, %v3991, 0
    %4004 = vmatprep.subr.bf16.mxu0 0
    %4005 = vmatpush1.bf16.msra.mxu0 0
    %4006 = vmatprep.subr.bf16.mxu0 0
    %4007 = vmatpush1.bf16.msra.mxu0 0
    %4008 = vmatprep.subr.bf16.mxu0 0
    %4009 = vmatpush1.bf16.msra.mxu0 0
    %4010 = vmatprep.subr.bf16.mxu0 0
    %4011 = vmatpush1.bf16.msra.mxu0 0
    %4012 = vmatprep.subr.bf16.mxu0 0
    %4013 = vmatpush1.bf16.msra.mxu0 0
    %4014 = vmatprep.subr.bf16.mxu0 0
    %4015 = vmatpush1.bf16.msra.mxu0 0
    %4016 = vmatprep.subr.bf16.mxu0 0
    %4017 = vmatpush1.bf16.msra.mxu0 %v3995
    %4018 = vmatprep.subr.bf16.mxu0 0
    %4019 = vmatpush1.bf16.msra.mxu0 %v3993
    %4020 = vmatprep.subr.bf16.mxu0 0
    %4021 = vmatpush2.bf16.msra.mxu0 0
    %4022 = vmatprep.subr.bf16.mxu0 0
    %4023 = vmatpush2.bf16.msra.mxu0 0
    %4024 = vmatprep.subr.bf16.mxu0 0
    %4025 = vmatpush2.bf16.msra.mxu0 0
    %4026 = vmatprep.subr.bf16.mxu0 0
    %4027 = vmatpush2.bf16.msra.mxu0 0
    %4028 = vmatprep.subr.bf16.mxu0 0
    %4029 = vmatpush2.bf16.msra.mxu0 0
    %4030 = vmatprep.subr.bf16.mxu0 0
    %4031 = vmatpush2.bf16.msra.mxu0 0
    %4032 = vmatprep.subr.bf16.mxu0 0
    %4033 = vmatpush2.bf16.msra.mxu0 0
    %4034 = vmatprep.subr.bf16.mxu0 0
    %4035 = vmatpush2.bf16.msra.mxu0 0
    %4036 = vmatprep.mubr.bf16.mxu0 0
    %4037 = vmatmul.mubr.bf16.gmra.mxu0 %v3999
    %v4038 = vpop.f32.mrf.mxu0
    %v4039 = vadd.f32 0.0, %v4038
    %v4040 = vpop.f32.mrf.mxu0
    %v4041 = vpop.f32.mrf.mxu0
    %v4042 = vadd.f32 0.0, %v4041
    %v4043 = vpop.f32.mrf.mxu0
    %4044 = vmatprep.mubr.bf16.mxu0 0
    %4045 = vmatmul.mubr.bf16.gmra.mxu0 %v4002
    %v4046 = vpop.f32.mrf.mxu0
    %v4047 = vadd.f32 0.0, %v4046
    %v4048 = vpop.f32.mrf.mxu0
    %v4049 = vpop.f32.mrf.mxu0
    %v4050 = vadd.f32 0.0, %v4049
    %v4051 = vpop.f32.mrf.mxu0
    %4052 = vdwg.mxu0
    %v4053 = vrcp.pop %v3980
    %v4054 = vrcp.pop %v3983
    %v4055 = vrcp.pop %v3986
    %v4056 = vrcp.pop %v3989
    %v4057 = vmul.f32 %v4039, %v4053
    %v4058 = vmul.f32 %v4042, %v4054
    %v4059 = vmul.f32 %v4047, %v4055
    %v4060 = vmul.f32 %v4050, %v4056
    %4061 = vrot.lane.b32.xlu0 %v3877, 120
    %v4062 = vpop.permute.xlu0 %4061
    %4063 = vrot.lane.b32.xlu0 %v3878, 120
    %v4064 = vpop.permute.xlu0 %4063
    %4065 = vrot.lane.b32.xlu0 %v3877, 88
    %v4066 = vpop.permute.xlu0 %4065
    %4067 = vrot.lane.b32.xlu0 %v3878, 88
    %v4068 = vpop.permute.xlu0 %4067
    %v4070 = vsel %vm372, %v4062, 0
    %v4073 = vsel %vm372, %v4064, 0
    %v4076 = vsel %vm372, %v4066, 0
    %v4079 = vsel %vm372, %v4068, 0
    %4081 = vmatprep.subr.bf16.mxu0 0
    %4082 = vmatpush1.bf16.xpose.msra.mxu0 0
    %4083 = vmatprep.subr.bf16.mxu0 0
    %4084 = vmatpush1.bf16.xpose.msra.mxu0 0
    %4085 = vmatprep.subr.bf16.mxu0 0
    %4086 = vmatpush1.bf16.xpose.msra.mxu0 0
    %4087 = vmatprep.subr.bf16.mxu0 0
    %4088 = vmatpush1.bf16.xpose.msra.mxu0 0
    %4089 = vmatprep.subr.bf16.mxu0 0
    %4090 = vmatpush1.bf16.xpose.msra.mxu0 0
    %4091 = vmatprep.subr.bf16.mxu0 0
    %4092 = vmatpush1.bf16.xpose.msra.mxu0 0
    %4093 = vmatprep.subr.bf16.mxu0 0
    %4094 = vmatpush1.bf16.xpose.msra.mxu0 %v4079
    %4095 = vmatprep.subr.bf16.mxu0 0
    %4096 = vmatpush1.bf16.xpose.msra.mxu0 %v4076
    %4097 = vmatprep.subr.bf16.mxu0 0
    %4098 = vmatpush2.bf16.xpose.msra.mxu0 0
    %4099 = vmatprep.subr.bf16.mxu0 0
    %4100 = vmatpush2.bf16.xpose.msra.mxu0 0
    %4101 = vmatprep.subr.bf16.mxu0 0
    %4102 = vmatpush2.bf16.xpose.msra.mxu0 0
    %4103 = vmatprep.subr.bf16.mxu0 0
    %4104 = vmatpush2.bf16.xpose.msra.mxu0 0
    %4105 = vmatprep.subr.bf16.mxu0 0
    %4106 = vmatpush2.bf16.xpose.msra.mxu0 0
    %4107 = vmatprep.subr.bf16.mxu0 0
    %4108 = vmatpush2.bf16.xpose.msra.mxu0 0
    %4109 = vmatprep.subr.bf16.mxu0 0
    %4110 = vmatpush2.bf16.xpose.msra.mxu0 0
    %4111 = vmatprep.subr.bf16.mxu0 0
    %4112 = vmatpush2.bf16.xpose.msra.mxu0 0
    %4113 = vmatprep.mubr.bf16.mxu0 0
    %4114 = vmatmul.mubr.bf16.gmra.mxu0 %v4070
    %v4115 = vpop.f32.mrf.mxu0
    %v4116 = vadd.f32 0.0, %v4115
    %v4117 = vpop.f32.mrf.mxu0
    %v4118 = vpop.f32.mrf.mxu0
    %v4119 = vadd.f32 0.0, %v4118
    %v4120 = vpop.f32.mrf.mxu0
    %4121 = vmatprep.mubr.bf16.mxu0 0
    %4122 = vmatmul.mubr.bf16.gmra.mxu0 %v4073
    %v4123 = vpop.f32.mrf.mxu0
    %v4124 = vadd.f32 0.0, %v4123
    %v4125 = vpop.f32.mrf.mxu0
    %v4126 = vpop.f32.mrf.mxu0
    %v4127 = vadd.f32 0.0, %v4126
    %v4128 = vpop.f32.mrf.mxu0
    %4129 = vdwg.mxu0
    %v4130 = vmul.f32 %v4116, 0.35355338
    %v4131 = vmul.f32 %v4119, 0.35355338
    %v4132 = vmul.f32 %v4124, 0.35355338
    %v4133 = vmul.f32 %v4127, 0.35355338
    %v4134 = vadd.f32 %v4130, %v3725
    %v4135 = vadd.f32 %v4131, %v3726
    %v4136 = vadd.f32 %v4132, %v3727
    %v4137 = vadd.f32 %v4133, %v3728
    %v4138 = vsel %vm170, %v4134, -inf
    %4139 = vmax.xlane.f32.xlu0 %v4138
    %v4140 = vpop.xlane.xlu0 %4139
    %v4141 = vsel %vm170, %v4135, -inf
    %4142 = vmax.xlane.f32.xlu0 %v4141
    %v4143 = vpop.xlane.xlu0 %4142
    %v4144 = vsel %vm170, %v4136, -inf
    %4145 = vmax.xlane.f32.xlu0 %v4144
    %v4146 = vpop.xlane.xlu0 %4145
    %v4147 = vsel %vm170, %v4137, -inf
    %4148 = vmax.xlane.f32.xlu0 %v4147
    %v4149 = vpop.xlane.xlu0 %4148
    %v4150 = vsub.f32 %v4134, %v4140
    %v4151 = vsub.f32 %v4135, %v4143
    %v4152 = vsub.f32 %v4136, %v4146
    %v4153 = vsub.f32 %v4137, %v4149
    %v4154 = vmul.f32 %v4150, 1.442695
    %v4155 = vpow.pop %v4154
    %v4156 = vmul.f32 %v4151, 1.442695
    %v4157 = vpow.pop %v4156
    %v4158 = vmul.f32 %v4152, 1.442695
    %v4159 = vpow.pop %v4158
    %v4160 = vmul.f32 %v4153, 1.442695
    %v4161 = vpow.pop %v4160
    %v4162 = vsel %vm170, %v4155, 0.0
    %4163 = vadd.xlane.f32.xlu0 %v4162
    %v4164 = vpop.xlane.xlu0 %4163
    %v4165 = vsel %vm170, %v4157, 0.0
    %4166 = vadd.xlane.f32.xlu0 %v4165
    %v4167 = vpop.xlane.xlu0 %4166
    %v4168 = vsel %vm170, %v4159, 0.0
    %4169 = vadd.xlane.f32.xlu0 %v4168
    %v4170 = vpop.xlane.xlu0 %4169
    %v4171 = vsel %vm170, %v4161, 0.0
    %4172 = vadd.xlane.f32.xlu0 %v4171
    %v4173 = vpop.xlane.xlu0 %4172
    %v4174 = vpack.c.bf16 %v4157, %v4155
    %v4175 = vpack.c.bf16 %v4161, %v4159
    %4176 = vrot.lane.b32.xlu0 %v3877, 56
    %v4177 = vpop.permute.xlu0 %4176
    %4178 = vrot.lane.b32.xlu0 %v3878, 56
    %v4179 = vpop.permute.xlu0 %4178
    %v4183 = vsel %vm170, %v4174, 0
    %v4186 = vsel %vm170, %v4175, 0
    %4188 = vmatprep.subr.bf16.mxu0 0
    %4189 = vmatpush1.bf16.msra.mxu0 0
    %4190 = vmatprep.subr.bf16.mxu0 0
    %4191 = vmatpush1.bf16.msra.mxu0 0
    %4192 = vmatprep.subr.bf16.mxu0 0
    %4193 = vmatpush1.bf16.msra.mxu0 0
    %4194 = vmatprep.subr.bf16.mxu0 0
    %4195 = vmatpush1.bf16.msra.mxu0 0
    %4196 = vmatprep.subr.bf16.mxu0 0
    %4197 = vmatpush1.bf16.msra.mxu0 0
    %4198 = vmatprep.subr.bf16.mxu0 0
    %4199 = vmatpush1.bf16.msra.mxu0 0
    %4200 = vmatprep.subr.bf16.mxu0 0
    %4201 = vmatpush1.bf16.msra.mxu0 %v4179
    %4202 = vmatprep.subr.bf16.mxu0 0
    %4203 = vmatpush1.bf16.msra.mxu0 %v4177
    %4204 = vmatprep.subr.bf16.mxu0 0
    %4205 = vmatpush2.bf16.msra.mxu0 0
    %4206 = vmatprep.subr.bf16.mxu0 0
    %4207 = vmatpush2.bf16.msra.mxu0 0
    %4208 = vmatprep.subr.bf16.mxu0 0
    %4209 = vmatpush2.bf16.msra.mxu0 0
    %4210 = vmatprep.subr.bf16.mxu0 0
    %4211 = vmatpush2.bf16.msra.mxu0 0
    %4212 = vmatprep.subr.bf16.mxu0 0
    %4213 = vmatpush2.bf16.msra.mxu0 0
    %4214 = vmatprep.subr.bf16.mxu0 0
    %4215 = vmatpush2.bf16.msra.mxu0 0
    %4216 = vmatprep.subr.bf16.mxu0 0
    %4217 = vmatpush2.bf16.msra.mxu0 0
    %4218 = vmatprep.subr.bf16.mxu0 0
    %4219 = vmatpush2.bf16.msra.mxu0 0
    %4220 = vmatprep.mubr.bf16.mxu0 0
    %4221 = vmatmul.mubr.bf16.gmra.mxu0 %v4183
    %v4222 = vpop.f32.mrf.mxu0
    %v4223 = vadd.f32 0.0, %v4222
    %v4224 = vpop.f32.mrf.mxu0
    %v4225 = vpop.f32.mrf.mxu0
    %v4226 = vadd.f32 0.0, %v4225
    %v4227 = vpop.f32.mrf.mxu0
    %4228 = vmatprep.mubr.bf16.mxu0 0
    %4229 = vmatmul.mubr.bf16.gmra.mxu0 %v4186
    %v4230 = vpop.f32.mrf.mxu0
    %v4231 = vadd.f32 0.0, %v4230
    %v4232 = vpop.f32.mrf.mxu0
    %v4233 = vpop.f32.mrf.mxu0
    %v4234 = vadd.f32 0.0, %v4233
    %v4235 = vpop.f32.mrf.mxu0
    %4236 = vdwg.mxu0
    %v4237 = vrcp.pop %v4164
    %v4238 = vrcp.pop %v4167
    %v4239 = vrcp.pop %v4170
    %v4240 = vrcp.pop %v4173
    %v4241 = vmul.f32 %v4223, %v4237
    %v4242 = vmul.f32 %v4226, %v4238
    %v4243 = vmul.f32 %v4231, %v4239
    %v4244 = vmul.f32 %v4234, %v4240
    %4245 = vrot.lane.b32.xlu0 %v3877, 112
    %v4246 = vpop.permute.xlu0 %4245
    %4247 = vrot.lane.b32.xlu0 %v3878, 112
    %v4248 = vpop.permute.xlu0 %4247
    %4249 = vrot.lane.b32.xlu0 %v3877, 80
    %v4250 = vpop.permute.xlu0 %4249
    %4251 = vrot.lane.b32.xlu0 %v3878, 80
    %v4252 = vpop.permute.xlu0 %4251
    %v4254 = vsel %vm372, %v4246, 0
    %v4257 = vsel %vm372, %v4248, 0
    %v4260 = vsel %vm372, %v4250, 0
    %v4263 = vsel %vm372, %v4252, 0
    %4265 = vmatprep.subr.bf16.mxu0 0
    %4266 = vmatpush1.bf16.xpose.msra.mxu0 0
    %4267 = vmatprep.subr.bf16.mxu0 0
    %4268 = vmatpush1.bf16.xpose.msra.mxu0 0
    %4269 = vmatprep.subr.bf16.mxu0 0
    %4270 = vmatpush1.bf16.xpose.msra.mxu0 0
    %4271 = vmatprep.subr.bf16.mxu0 0
    %4272 = vmatpush1.bf16.xpose.msra.mxu0 0
    %4273 = vmatprep.subr.bf16.mxu0 0
    %4274 = vmatpush1.bf16.xpose.msra.mxu0 0
    %4275 = vmatprep.subr.bf16.mxu0 0
    %4276 = vmatpush1.bf16.xpose.msra.mxu0 0
    %4277 = vmatprep.subr.bf16.mxu0 0
    %4278 = vmatpush1.bf16.xpose.msra.mxu0 %v4263
    %4279 = vmatprep.subr.bf16.mxu0 0
    %4280 = vmatpush1.bf16.xpose.msra.mxu0 %v4260
    %4281 = vmatprep.subr.bf16.mxu0 0
    %4282 = vmatpush2.bf16.xpose.msra.mxu0 0
    %4283 = vmatprep.subr.bf16.mxu0 0
    %4284 = vmatpush2.bf16.xpose.msra.mxu0 0
    %4285 = vmatprep.subr.bf16.mxu0 0
    %4286 = vmatpush2.bf16.xpose.msra.mxu0 0
    %4287 = vmatprep.subr.bf16.mxu0 0
    %4288 = vmatpush2.bf16.xpose.msra.mxu0 0
    %4289 = vmatprep.subr.bf16.mxu0 0
    %4290 = vmatpush2.bf16.xpose.msra.mxu0 0
    %4291 = vmatprep.subr.bf16.mxu0 0
    %4292 = vmatpush2.bf16.xpose.msra.mxu0 0
    %4293 = vmatprep.subr.bf16.mxu0 0
    %4294 = vmatpush2.bf16.xpose.msra.mxu0 0
    %4295 = vmatprep.subr.bf16.mxu0 0
    %4296 = vmatpush2.bf16.xpose.msra.mxu0 0
    %4297 = vmatprep.mubr.bf16.mxu0 0
    %4298 = vmatmul.mubr.bf16.gmra.mxu0 %v4254
    %v4299 = vpop.f32.mrf.mxu0
    %v4300 = vadd.f32 0.0, %v4299
    %v4301 = vpop.f32.mrf.mxu0
    %v4302 = vpop.f32.mrf.mxu0
    %v4303 = vadd.f32 0.0, %v4302
    %v4304 = vpop.f32.mrf.mxu0
    %4305 = vmatprep.mubr.bf16.mxu0 0
    %4306 = vmatmul.mubr.bf16.gmra.mxu0 %v4257
    %v4307 = vpop.f32.mrf.mxu0
    %v4308 = vadd.f32 0.0, %v4307
    %v4309 = vpop.f32.mrf.mxu0
    %v4310 = vpop.f32.mrf.mxu0
    %v4311 = vadd.f32 0.0, %v4310
    %v4312 = vpop.f32.mrf.mxu0
    %4313 = vdwg.mxu0
    %v4314 = vmul.f32 %v4300, 0.35355338
    %v4315 = vmul.f32 %v4303, 0.35355338
    %v4316 = vmul.f32 %v4308, 0.35355338
    %v4317 = vmul.f32 %v4311, 0.35355338
    %v4318 = vadd.f32 %v4314, %v3725
    %v4319 = vadd.f32 %v4315, %v3726
    %v4320 = vadd.f32 %v4316, %v3727
    %v4321 = vadd.f32 %v4317, %v3728
    %v4322 = vsel %vm170, %v4318, -inf
    %4323 = vmax.xlane.f32.xlu0 %v4322
    %v4324 = vpop.xlane.xlu0 %4323
    %v4325 = vsel %vm170, %v4319, -inf
    %4326 = vmax.xlane.f32.xlu0 %v4325
    %v4327 = vpop.xlane.xlu0 %4326
    %v4328 = vsel %vm170, %v4320, -inf
    %4329 = vmax.xlane.f32.xlu0 %v4328
    %v4330 = vpop.xlane.xlu0 %4329
    %v4331 = vsel %vm170, %v4321, -inf
    %4332 = vmax.xlane.f32.xlu0 %v4331
    %v4333 = vpop.xlane.xlu0 %4332
    %v4334 = vsub.f32 %v4318, %v4324
    %v4335 = vsub.f32 %v4319, %v4327
    %v4336 = vsub.f32 %v4320, %v4330
    %v4337 = vsub.f32 %v4321, %v4333
    %v4338 = vmul.f32 %v4334, 1.442695
    %v4339 = vpow.pop %v4338
    %v4340 = vmul.f32 %v4335, 1.442695
    %v4341 = vpow.pop %v4340
    %v4342 = vmul.f32 %v4336, 1.442695
    %v4343 = vpow.pop %v4342
    %v4344 = vmul.f32 %v4337, 1.442695
    %v4345 = vpow.pop %v4344
    %v4346 = vsel %vm170, %v4339, 0.0
    %4347 = vadd.xlane.f32.xlu0 %v4346
    %v4348 = vpop.xlane.xlu0 %4347
    %v4349 = vsel %vm170, %v4341, 0.0
    %4350 = vadd.xlane.f32.xlu0 %v4349
    %v4351 = vpop.xlane.xlu0 %4350
    %v4352 = vsel %vm170, %v4343, 0.0
    %4353 = vadd.xlane.f32.xlu0 %v4352
    %v4354 = vpop.xlane.xlu0 %4353
    %v4355 = vsel %vm170, %v4345, 0.0
    %4356 = vadd.xlane.f32.xlu0 %v4355
    %v4357 = vpop.xlane.xlu0 %4356
    %v4358 = vpack.c.bf16 %v4341, %v4339
    %v4359 = vpack.c.bf16 %v4345, %v4343
    %4360 = vrot.lane.b32.xlu0 %v3877, 48
    %v4361 = vpop.permute.xlu0 %4360
    %4362 = vrot.lane.b32.xlu0 %v3878, 48
    %v4363 = vpop.permute.xlu0 %4362
    %v4367 = vsel %vm170, %v4358, 0
    %v4370 = vsel %vm170, %v4359, 0
    %4372 = vmatprep.subr.bf16.mxu0 0
    %4373 = vmatpush1.bf16.msra.mxu0 0
    %4374 = vmatprep.subr.bf16.mxu0 0
    %4375 = vmatpush1.bf16.msra.mxu0 0
    %4376 = vmatprep.subr.bf16.mxu0 0
    %4377 = vmatpush1.bf16.msra.mxu0 0
    %4378 = vmatprep.subr.bf16.mxu0 0
    %4379 = vmatpush1.bf16.msra.mxu0 0
    %4380 = vmatprep.subr.bf16.mxu0 0
    %4381 = vmatpush1.bf16.msra.mxu0 0
    %4382 = vmatprep.subr.bf16.mxu0 0
    %4383 = vmatpush1.bf16.msra.mxu0 0
    %4384 = vmatprep.subr.bf16.mxu0 0
    %4385 = vmatpush1.bf16.msra.mxu0 %v4363
    %4386 = vmatprep.subr.bf16.mxu0 0
    %4387 = vmatpush1.bf16.msra.mxu0 %v4361
    %4388 = vmatprep.subr.bf16.mxu0 0
    %4389 = vmatpush2.bf16.msra.mxu0 0
    %4390 = vmatprep.subr.bf16.mxu0 0
    %4391 = vmatpush2.bf16.msra.mxu0 0
    %4392 = vmatprep.subr.bf16.mxu0 0
    %4393 = vmatpush2.bf16.msra.mxu0 0
    %4394 = vmatprep.subr.bf16.mxu0 0
    %4395 = vmatpush2.bf16.msra.mxu0 0
    %4396 = vmatprep.subr.bf16.mxu0 0
    %4397 = vmatpush2.bf16.msra.mxu0 0
    %4398 = vmatprep.subr.bf16.mxu0 0
    %4399 = vmatpush2.bf16.msra.mxu0 0
    %4400 = vmatprep.subr.bf16.mxu0 0
    %4401 = vmatpush2.bf16.msra.mxu0 0
    %4402 = vmatprep.subr.bf16.mxu0 0
    %4403 = vmatpush2.bf16.msra.mxu0 0
    %4404 = vmatprep.mubr.bf16.mxu0 0
    %4405 = vmatmul.mubr.bf16.gmra.mxu0 %v4367
    %v4406 = vpop.f32.mrf.mxu0
    %v4407 = vadd.f32 0.0, %v4406
    %v4408 = vpop.f32.mrf.mxu0
    %v4409 = vpop.f32.mrf.mxu0
    %v4410 = vadd.f32 0.0, %v4409
    %v4411 = vpop.f32.mrf.mxu0
    %4412 = vmatprep.mubr.bf16.mxu0 0
    %4413 = vmatmul.mubr.bf16.gmra.mxu0 %v4370
    %v4414 = vpop.f32.mrf.mxu0
    %v4415 = vadd.f32 0.0, %v4414
    %v4416 = vpop.f32.mrf.mxu0
    %v4417 = vpop.f32.mrf.mxu0
    %v4418 = vadd.f32 0.0, %v4417
    %v4419 = vpop.f32.mrf.mxu0
    %4420 = vdwg.mxu0
    %v4421 = vrcp.pop %v4348
    %v4422 = vrcp.pop %v4351
    %v4423 = vrcp.pop %v4354
    %v4424 = vrcp.pop %v4357
    %v4425 = vmul.f32 %v4407, %v4421
    %v4426 = vmul.f32 %v4410, %v4422
    %v4427 = vmul.f32 %v4415, %v4423
    %v4428 = vmul.f32 %v4418, %v4424
    %4429 = vrot.lane.b32.xlu0 %v3877, 104
    %v4430 = vpop.permute.xlu0 %4429
    %4431 = vrot.lane.b32.xlu0 %v3878, 104
    %v4432 = vpop.permute.xlu0 %4431
    %4433 = vrot.lane.b32.xlu0 %v3877, 72
    %v4434 = vpop.permute.xlu0 %4433
    %4435 = vrot.lane.b32.xlu0 %v3878, 72
    %v4436 = vpop.permute.xlu0 %4435
    %v4438 = vsel %vm372, %v4430, 0
    %v4441 = vsel %vm372, %v4432, 0
    %v4444 = vsel %vm372, %v4434, 0
    %v4447 = vsel %vm372, %v4436, 0
    %4449 = vmatprep.subr.bf16.mxu0 0
    %4450 = vmatpush1.bf16.xpose.msra.mxu0 0
    %4451 = vmatprep.subr.bf16.mxu0 0
    %4452 = vmatpush1.bf16.xpose.msra.mxu0 0
    %4453 = vmatprep.subr.bf16.mxu0 0
    %4454 = vmatpush1.bf16.xpose.msra.mxu0 0
    %4455 = vmatprep.subr.bf16.mxu0 0
    %4456 = vmatpush1.bf16.xpose.msra.mxu0 0
    %4457 = vmatprep.subr.bf16.mxu0 0
    %4458 = vmatpush1.bf16.xpose.msra.mxu0 0
    %4459 = vmatprep.subr.bf16.mxu0 0
    %4460 = vmatpush1.bf16.xpose.msra.mxu0 0
    %4461 = vmatprep.subr.bf16.mxu0 0
    %4462 = vmatpush1.bf16.xpose.msra.mxu0 %v4447
    %4463 = vmatprep.subr.bf16.mxu0 0
    %4464 = vmatpush1.bf16.xpose.msra.mxu0 %v4444
    %4465 = vmatprep.subr.bf16.mxu0 0
    %4466 = vmatpush2.bf16.xpose.msra.mxu0 0
    %4467 = vmatprep.subr.bf16.mxu0 0
    %4468 = vmatpush2.bf16.xpose.msra.mxu0 0
    %4469 = vmatprep.subr.bf16.mxu0 0
    %4470 = vmatpush2.bf16.xpose.msra.mxu0 0
    %4471 = vmatprep.subr.bf16.mxu0 0
    %4472 = vmatpush2.bf16.xpose.msra.mxu0 0
    %4473 = vmatprep.subr.bf16.mxu0 0
    %4474 = vmatpush2.bf16.xpose.msra.mxu0 0
    %4475 = vmatprep.subr.bf16.mxu0 0
    %4476 = vmatpush2.bf16.xpose.msra.mxu0 0
    %4477 = vmatprep.subr.bf16.mxu0 0
    %4478 = vmatpush2.bf16.xpose.msra.mxu0 0
    %4479 = vmatprep.subr.bf16.mxu0 0
    %4480 = vmatpush2.bf16.xpose.msra.mxu0 0
    %4481 = vmatprep.mubr.bf16.mxu0 0
    %4482 = vmatmul.mubr.bf16.gmra.mxu0 %v4438
    %v4483 = vpop.f32.mrf.mxu0
    %v4484 = vadd.f32 0.0, %v4483
    %v4485 = vpop.f32.mrf.mxu0
    %v4486 = vpop.f32.mrf.mxu0
    %v4487 = vadd.f32 0.0, %v4486
    %v4488 = vpop.f32.mrf.mxu0
    %4489 = vmatprep.mubr.bf16.mxu0 0
    %4490 = vmatmul.mubr.bf16.gmra.mxu0 %v4441
    %v4491 = vpop.f32.mrf.mxu0
    %v4492 = vadd.f32 0.0, %v4491
    %v4493 = vpop.f32.mrf.mxu0
    %v4494 = vpop.f32.mrf.mxu0
    %v4495 = vadd.f32 0.0, %v4494
    %v4496 = vpop.f32.mrf.mxu0
    %4497 = vdwg.mxu0
    %v4498 = vmul.f32 %v4484, 0.35355338
    %v4499 = vmul.f32 %v4487, 0.35355338
    %v4500 = vmul.f32 %v4492, 0.35355338
    %v4501 = vmul.f32 %v4495, 0.35355338
    %v4502 = vadd.f32 %v4498, %v3725
    %v4503 = vadd.f32 %v4499, %v3726
    %v4504 = vadd.f32 %v4500, %v3727
    %v4505 = vadd.f32 %v4501, %v3728
    %v4506 = vsel %vm170, %v4502, -inf
    %4507 = vmax.xlane.f32.xlu0 %v4506
    %v4508 = vpop.xlane.xlu0 %4507
    %v4509 = vsel %vm170, %v4503, -inf
    %4510 = vmax.xlane.f32.xlu0 %v4509
    %v4511 = vpop.xlane.xlu0 %4510
    %v4512 = vsel %vm170, %v4504, -inf
    %4513 = vmax.xlane.f32.xlu0 %v4512
    %v4514 = vpop.xlane.xlu0 %4513
    %v4515 = vsel %vm170, %v4505, -inf
    %4516 = vmax.xlane.f32.xlu0 %v4515
    %v4517 = vpop.xlane.xlu0 %4516
    %v4518 = vsub.f32 %v4502, %v4508
    %v4519 = vsub.f32 %v4503, %v4511
    %v4520 = vsub.f32 %v4504, %v4514
    %v4521 = vsub.f32 %v4505, %v4517
    %v4522 = vmul.f32 %v4518, 1.442695
    %v4523 = vpow.pop %v4522
    %v4524 = vmul.f32 %v4519, 1.442695
    %v4525 = vpow.pop %v4524
    %v4526 = vmul.f32 %v4520, 1.442695
    %v4527 = vpow.pop %v4526
    %v4528 = vmul.f32 %v4521, 1.442695
    %v4529 = vpow.pop %v4528
    %v4530 = vsel %vm170, %v4523, 0.0
    %4531 = vadd.xlane.f32.xlu0 %v4530
    %v4532 = vpop.xlane.xlu0 %4531
    %v4533 = vsel %vm170, %v4525, 0.0
    %4534 = vadd.xlane.f32.xlu0 %v4533
    %v4535 = vpop.xlane.xlu0 %4534
    %v4536 = vsel %vm170, %v4527, 0.0
    %4537 = vadd.xlane.f32.xlu0 %v4536
    %v4538 = vpop.xlane.xlu0 %4537
    %v4539 = vsel %vm170, %v4529, 0.0
    %4540 = vadd.xlane.f32.xlu0 %v4539
    %v4541 = vpop.xlane.xlu0 %4540
    %v4542 = vpack.c.bf16 %v4525, %v4523
    %v4543 = vpack.c.bf16 %v4529, %v4527
    %4544 = vrot.lane.b32.xlu0 %v3877, 40
    %v4545 = vpop.permute.xlu0 %4544
    %4546 = vrot.lane.b32.xlu0 %v3878, 40
    %v4547 = vpop.permute.xlu0 %4546
    %v4551 = vsel %vm170, %v4542, 0
    %v4554 = vsel %vm170, %v4543, 0
    %4556 = vmatprep.subr.bf16.mxu0 0
    %4557 = vmatpush1.bf16.msra.mxu0 0
    %4558 = vmatprep.subr.bf16.mxu0 0
    %4559 = vmatpush1.bf16.msra.mxu0 0
    %4560 = vmatprep.subr.bf16.mxu0 0
    %4561 = vmatpush1.bf16.msra.mxu0 0
    %4562 = vmatprep.subr.bf16.mxu0 0
    %4563 = vmatpush1.bf16.msra.mxu0 0
    %4564 = vmatprep.subr.bf16.mxu0 0
    %4565 = vmatpush1.bf16.msra.mxu0 0
    %4566 = vmatprep.subr.bf16.mxu0 0
    %4567 = vmatpush1.bf16.msra.mxu0 0
    %4568 = vmatprep.subr.bf16.mxu0 0
    %4569 = vmatpush1.bf16.msra.mxu0 %v4547
    %4570 = vmatprep.subr.bf16.mxu0 0
    %4571 = vmatpush1.bf16.msra.mxu0 %v4545
    %4572 = vmatprep.subr.bf16.mxu0 0
    %4573 = vmatpush2.bf16.msra.mxu0 0
    %4574 = vmatprep.subr.bf16.mxu0 0
    %4575 = vmatpush2.bf16.msra.mxu0 0
    %4576 = vmatprep.subr.bf16.mxu0 0
    %4577 = vmatpush2.bf16.msra.mxu0 0
    %4578 = vmatprep.subr.bf16.mxu0 0
    %4579 = vmatpush2.bf16.msra.mxu0 0
    %4580 = vmatprep.subr.bf16.mxu0 0
    %4581 = vmatpush2.bf16.msra.mxu0 0
    %4582 = vmatprep.subr.bf16.mxu0 0
    %4583 = vmatpush2.bf16.msra.mxu0 0
    %4584 = vmatprep.subr.bf16.mxu0 0
    %4585 = vmatpush2.bf16.msra.mxu0 0
    %4586 = vmatprep.subr.bf16.mxu0 0
    %4587 = vmatpush2.bf16.msra.mxu0 0
    %4588 = vmatprep.mubr.bf16.mxu0 0
    %4589 = vmatmul.mubr.bf16.gmra.mxu0 %v4551
    %v4590 = vpop.f32.mrf.mxu0
    %v4591 = vadd.f32 0.0, %v4590
    %v4592 = vpop.f32.mrf.mxu0
    %v4593 = vpop.f32.mrf.mxu0
    %v4594 = vadd.f32 0.0, %v4593
    %v4595 = vpop.f32.mrf.mxu0
    %4596 = vmatprep.mubr.bf16.mxu0 0
    %4597 = vmatmul.mubr.bf16.gmra.mxu0 %v4554
    %v4598 = vpop.f32.mrf.mxu0
    %v4599 = vadd.f32 0.0, %v4598
    %v4600 = vpop.f32.mrf.mxu0
    %v4601 = vpop.f32.mrf.mxu0
    %v4602 = vadd.f32 0.0, %v4601
    %v4603 = vpop.f32.mrf.mxu0
    %4604 = vdwg.mxu0
    %v4605 = vrcp.pop %v4532
    %v4606 = vrcp.pop %v4535
    %v4607 = vrcp.pop %v4538
    %v4608 = vrcp.pop %v4541
    %v4609 = vmul.f32 %v4591, %v4605
    %v4610 = vmul.f32 %v4594, %v4606
    %v4611 = vmul.f32 %v4599, %v4607
    %v4612 = vmul.f32 %v4602, %v4608
    %4617 = vrot.lane.b32.xlu0 %v4241, 8
    %v4618 = vpop.permute.xlu0 %4617
    %4619 = vrot.lane.b32.xlu0 %v4242, 8
    %v4620 = vpop.permute.xlu0 %4619
    %4621 = vrot.lane.b32.xlu0 %v4243, 8
    %v4622 = vpop.permute.xlu0 %4621
    %4623 = vrot.lane.b32.xlu0 %v4244, 8
    %v4624 = vpop.permute.xlu0 %4623
    %4633 = vrot.lane.b32.xlu0 %v4425, 16
    %v4634 = vpop.permute.xlu0 %4633
    %4635 = vrot.lane.b32.xlu0 %v4426, 16
    %v4636 = vpop.permute.xlu0 %4635
    %4637 = vrot.lane.b32.xlu0 %v4427, 16
    %v4638 = vpop.permute.xlu0 %4637
    %4639 = vrot.lane.b32.xlu0 %v4428, 16
    %v4640 = vpop.permute.xlu0 %4639
    %4649 = vrot.lane.b32.xlu0 %v4609, 24
    %v4650 = vpop.permute.xlu0 %4649
    %4651 = vrot.lane.b32.xlu0 %v4610, 24
    %v4652 = vpop.permute.xlu0 %4651
    %4653 = vrot.lane.b32.xlu0 %v4611, 24
    %v4654 = vpop.permute.xlu0 %4653
    %4655 = vrot.lane.b32.xlu0 %v4612, 24
    %v4656 = vpop.permute.xlu0 %4655
    %v4661 = vsel %vm372, %v4057, %v4618
    %v4662 = vsel %vm372, %v4058, %v4620
    %v4663 = vsel %vm372, %v4059, %v4622
    %v4664 = vsel %vm372, %v4060, %v4624
    %v4665 = vsel %vm1411, %v4661, %v4634
    %v4666 = vsel %vm1411, %v4662, %v4636
    %v4667 = vsel %vm1411, %v4663, %v4638
    %v4668 = vsel %vm1411, %v4664, %v4640
    %v4669 = vsel %vm1418, %v4665, %v4650
    %v4670 = vsel %vm1418, %v4666, %v4652
    %v4671 = vsel %vm1418, %v4667, %v4654
    %v4672 = vsel %vm1418, %v4668, %v4656
    %v4673 = vpack.c.bf16 %v4670, %v4669
    %v4674 = vpack.c.bf16 %v4672, %v4671
    %v4675 = vld [vmem:[%s2 + $0x128] sm:$0xf]
    %v4676 = vld [vmem:[%s2 + $0x12c] sm:$0xf]
    %v4677 = vld [vmem:[%s2 + $0x130] sm:$0xf]
    %v4678 = vld [vmem:[%s2 + $0x134] sm:$0xf]
    %v4683 = vunpack.c.l.b16 %v4675
    %v4684 = vunpack.c.l.b16 %v4676
    %v4685 = vunpack.c.l.b16 %v4677
    %v4686 = vunpack.c.l.b16 %v4678
    %v4687 = vpack.c.b16 %v4684, %v4683
    %v4688 = vpack.c.b16 %v4686, %v4685
    %v4692 = vsel %vm170, %v4673, 0
    %v4695 = vsel %vm170, %v4674, 0
    %4697 = vmatprep.subr.bf16.mxu0 0
    %4698 = vmatpush1.bf16.msra.mxu0 0
    %4699 = vmatprep.subr.bf16.mxu0 0
    %4700 = vmatpush1.bf16.msra.mxu0 0
    %4701 = vmatprep.subr.bf16.mxu0 0
    %4702 = vmatpush1.bf16.msra.mxu0 0
    %4703 = vmatprep.subr.bf16.mxu0 0
    %4704 = vmatpush1.bf16.msra.mxu0 0
    %4705 = vmatprep.subr.bf16.mxu0 0
    %4706 = vmatpush1.bf16.msra.mxu0 0
    %4707 = vmatprep.subr.bf16.mxu0 0
    %4708 = vmatpush1.bf16.msra.mxu0 0
    %4709 = vmatprep.subr.bf16.mxu0 0
    %4710 = vmatpush1.bf16.msra.mxu0 %v4688
    %4711 = vmatprep.subr.bf16.mxu0 0
    %4712 = vmatpush1.bf16.msra.mxu0 %v4687
    %4713 = vmatprep.subr.bf16.mxu0 0
    %4714 = vmatpush2.bf16.msra.mxu0 0
    %4715 = vmatprep.subr.bf16.mxu0 0
    %4716 = vmatpush2.bf16.msra.mxu0 0
    %4717 = vmatprep.subr.bf16.mxu0 0
    %4718 = vmatpush2.bf16.msra.mxu0 0
    %4719 = vmatprep.subr.bf16.mxu0 0
    %4720 = vmatpush2.bf16.msra.mxu0 0
    %4721 = vmatprep.subr.bf16.mxu0 0
    %4722 = vmatpush2.bf16.msra.mxu0 0
    %4723 = vmatprep.subr.bf16.mxu0 0
    %4724 = vmatpush2.bf16.msra.mxu0 0
    %4725 = vmatprep.subr.bf16.mxu0 0
    %4726 = vmatpush2.bf16.msra.mxu0 0
    %4727 = vmatprep.subr.bf16.mxu0 0
    %4728 = vmatpush2.bf16.msra.mxu0 0
    %4729 = vmatprep.mubr.bf16.mxu0 0
    %4730 = vmatmul.mubr.bf16.gmra.mxu0 %v4692
    %v4731 = vpop.f32.mrf.mxu0
    %v4732 = vadd.f32 0.0, %v4731
    %v4733 = vpop.f32.mrf.mxu0
    %v4734 = vpop.f32.mrf.mxu0
    %v4735 = vadd.f32 0.0, %v4734
    %v4736 = vpop.f32.mrf.mxu0
    %4737 = vmatprep.mubr.bf16.mxu0 0
    %4738 = vmatmul.mubr.bf16.gmra.mxu0 %v4695
    %v4739 = vpop.f32.mrf.mxu0
    %v4740 = vadd.f32 0.0, %v4739
    %v4741 = vpop.f32.mrf.mxu0
    %v4742 = vpop.f32.mrf.mxu0
    %v4743 = vadd.f32 0.0, %v4742
    %v4744 = vpop.f32.mrf.mxu0
    %4745 = vdwg.mxu0
    %v4746 = vadd.f32 %v3702, %v4732
    %v4747 = vadd.f32 %v3703, %v4735
    %v4748 = vadd.f32 %v3704, %v4740
    %v4749 = vadd.f32 %v3705, %v4743
    %v4750 = vld [vmem:[%s3 + $0x8b] sm:$0x1]
    %v4751 = vlaneseq
    %v4752 = vshrl.u32 %v4751, 7
    %v4753 = vsub.s32 0, %v4752
    %v4754 = vrot.slane %v4750, %v4753
    %v4755 = vadd.f32 %v4746, %v4754
    %v4756 = vadd.f32 %v4747, %v4754
    %v4757 = vadd.f32 %v4748, %v4754
    %v4758 = vadd.f32 %v4749, %v4754
    %v4759 = vld [vmem:[%s3 + $0x88] sm:$0x1]
    %v4760 = vld [vmem:[%s3 + $0x89] sm:$0x1]
    %v4761 = vsel %vm170, %v4755, 0.0
    %4762 = vadd.xlane.f32.xlu0 %v4761
    %v4763 = vpop.xlane.xlu0 %4762
    %v4764 = vsel %vm170, %v4756, 0.0
    %4765 = vadd.xlane.f32.xlu0 %v4764
    %v4766 = vpop.xlane.xlu0 %4765
    %v4767 = vsel %vm170, %v4757, 0.0
    %4768 = vadd.xlane.f32.xlu0 %v4767
    %v4769 = vpop.xlane.xlu0 %4768
    %v4770 = vsel %vm170, %v4758, 0.0
    %4771 = vadd.xlane.f32.xlu0 %v4770
    %v4772 = vpop.xlane.xlu0 %4771
    %v4773 = vmul.f32 %v4763, %v189
    %v4774 = vmul.f32 %v4766, %v189
    %v4775 = vmul.f32 %v4769, %v189
    %v4776 = vmul.f32 %v4772, %v189
    %v4777 = vsub.f32 %v4755, %v4773
    %v4778 = vsub.f32 %v4756, %v4774
    %v4779 = vsub.f32 %v4757, %v4775
    %v4780 = vsub.f32 %v4758, %v4776
    %v4781 = vmul.f32 %v4777, %v4777
    %v4782 = vmul.f32 %v4778, %v4778
    %v4783 = vmul.f32 %v4779, %v4779
    %v4784 = vmul.f32 %v4780, %v4780
    %v4785 = vsel %vm170, %v4781, 0.0
    %4786 = vadd.xlane.f32.xlu0 %v4785
    %v4787 = vpop.xlane.xlu0 %4786
    %v4788 = vsel %vm170, %v4782, 0.0
    %4789 = vadd.xlane.f32.xlu0 %v4788
    %v4790 = vpop.xlane.xlu0 %4789
    %v4791 = vsel %vm170, %v4783, 0.0
    %4792 = vadd.xlane.f32.xlu0 %v4791
    %v4793 = vpop.xlane.xlu0 %4792
    %v4794 = vsel %vm170, %v4784, 0.0
    %4795 = vadd.xlane.f32.xlu0 %v4794
    %v4796 = vpop.xlane.xlu0 %4795
    %v4797 = vmul.f32 %v4787, %v189
    %v4798 = vmul.f32 %v4790, %v189
    %v4799 = vmul.f32 %v4793, %v189
    %v4800 = vmul.f32 %v4796, %v189
    %v4801 = vadd.f32 %v4797, 1e-05
    %v4802 = vadd.f32 %v4798, 1e-05
    %v4803 = vadd.f32 %v4799, 1e-05
    %v4804 = vadd.f32 %v4800, 1e-05
    %v4805 = vrsqrt.pop %v4801
    %v4806 = vrsqrt.pop %v4802
    %v4807 = vrsqrt.pop %v4803
    %v4808 = vrsqrt.pop %v4804
    %v4809 = vmul.f32 %v4777, %v4805
    %v4810 = vmul.f32 %v4778, %v4806
    %v4811 = vmul.f32 %v4779, %v4807
    %v4812 = vmul.f32 %v4780, %v4808
    %v4813 = vlaneseq
    %v4814 = vshrl.u32 %v4813, 7
    %v4815 = vsub.s32 0, %v4814
    %v4816 = vrot.slane %v4759, %v4815
    %v4817 = vmul.f32 %v4809, %v4816
    %v4818 = vmul.f32 %v4810, %v4816
    %v4819 = vmul.f32 %v4811, %v4816
    %v4820 = vmul.f32 %v4812, %v4816
    %v4821 = vlaneseq
    %v4822 = vshrl.u32 %v4821, 7
    %v4823 = vsub.s32 0, %v4822
    %v4824 = vrot.slane %v4760, %v4823
    %v4825 = vadd.f32 %v4817, %v4824
    %v4826 = vadd.f32 %v4818, %v4824
    %v4827 = vadd.f32 %v4819, %v4824
    %v4828 = vadd.f32 %v4820, %v4824
    %v4829 = vpack.c.bf16 %v4826, %v4825
    %v4830 = vpack.c.bf16 %v4828, %v4827
    %v4831 = vld [vmem:[%s2 + $0x138] sm:$0xf]
    %v4832 = vld [vmem:[%s2 + $0x13c] sm:$0xf]
    %v4833 = vld [vmem:[%s2 + $0x140] sm:$0xf]
    %v4834 = vld [vmem:[%s2 + $0x144] sm:$0xf]
    %v4835 = vld [vmem:[%s3 + $0x8c] sm:$0x1]
    %v4836 = vlaneseq
    %v4837 = vshrl.u32 %v4836, 7
    %v4838 = vsub.s32 0, %v4837
    %v4839 = vrot.slane %v4835, %v4838
    %v4844 = vunpack.c.l.b16 %v4831
    %v4845 = vunpack.c.l.b16 %v4832
    %v4846 = vunpack.c.l.b16 %v4833
    %v4847 = vunpack.c.l.b16 %v4834
    %v4848 = vpack.c.b16 %v4845, %v4844
    %v4849 = vpack.c.b16 %v4847, %v4846
    %v4853 = vsel %vm170, %v4829, 0
    %v4856 = vsel %vm170, %v4830, 0
    %4858 = vmatprep.subr.bf16.mxu0 0
    %4859 = vmatpush1.bf16.msra.mxu0 0
    %4860 = vmatprep.subr.bf16.mxu0 0
    %4861 = vmatpush1.bf16.msra.mxu0 0
    %4862 = vmatprep.subr.bf16.mxu0 0
    %4863 = vmatpush1.bf16.msra.mxu0 0
    %4864 = vmatprep.subr.bf16.mxu0 0
    %4865 = vmatpush1.bf16.msra.mxu0 0
    %4866 = vmatprep.subr.bf16.mxu0 0
    %4867 = vmatpush1.bf16.msra.mxu0 0
    %4868 = vmatprep.subr.bf16.mxu0 0
    %4869 = vmatpush1.bf16.msra.mxu0 0
    %4870 = vmatprep.subr.bf16.mxu0 0
    %4871 = vmatpush1.bf16.msra.mxu0 %v4849
    %4872 = vmatprep.subr.bf16.mxu0 0
    %4873 = vmatpush1.bf16.msra.mxu0 %v4848
    %4874 = vmatprep.subr.bf16.mxu0 0
    %4875 = vmatpush2.bf16.msra.mxu0 0
    %4876 = vmatprep.subr.bf16.mxu0 0
    %4877 = vmatpush2.bf16.msra.mxu0 0
    %4878 = vmatprep.subr.bf16.mxu0 0
    %4879 = vmatpush2.bf16.msra.mxu0 0
    %4880 = vmatprep.subr.bf16.mxu0 0
    %4881 = vmatpush2.bf16.msra.mxu0 0
    %4882 = vmatprep.subr.bf16.mxu0 0
    %4883 = vmatpush2.bf16.msra.mxu0 0
    %4884 = vmatprep.subr.bf16.mxu0 0
    %4885 = vmatpush2.bf16.msra.mxu0 0
    %4886 = vmatprep.subr.bf16.mxu0 0
    %4887 = vmatpush2.bf16.msra.mxu0 0
    %4888 = vmatprep.subr.bf16.mxu0 0
    %4889 = vmatpush2.bf16.msra.mxu0 0
    %4890 = vmatprep.mubr.bf16.mxu0 0
    %4891 = vmatmul.mubr.bf16.gmra.mxu0 %v4853
    %v4892 = vpop.f32.mrf.mxu0
    %v4893 = vadd.f32 %v4839, %v4892
    %v4894 = vpop.f32.mrf.mxu0
    %v4895 = vpop.f32.mrf.mxu0
    %v4896 = vadd.f32 %v4839, %v4895
    %v4897 = vpop.f32.mrf.mxu0
    %4898 = vmatprep.mubr.bf16.mxu0 0
    %4899 = vmatmul.mubr.bf16.gmra.mxu0 %v4856
    %v4900 = vpop.f32.mrf.mxu0
    %v4901 = vadd.f32 %v4839, %v4900
    %v4902 = vpop.f32.mrf.mxu0
    %v4903 = vpop.f32.mrf.mxu0
    %v4904 = vadd.f32 %v4839, %v4903
    %v4905 = vpop.f32.mrf.mxu0
    %4906 = vdwg.mxu0
    %v4907 = vmul.f32 %v4893, %v4893
    %v4908 = vmul.f32 %v4896, %v4896
    %v4909 = vmul.f32 %v4901, %v4901
    %v4910 = vmul.f32 %v4904, %v4904
    %v4911 = vmul.f32 %v4893, %v4907
    %v4912 = vmul.f32 %v4896, %v4908
    %v4913 = vmul.f32 %v4901, %v4909
    %v4914 = vmul.f32 %v4904, %v4910
    %v4915 = vmul.f32 %v4911, 0.044715
    %v4916 = vmul.f32 %v4912, 0.044715
    %v4917 = vmul.f32 %v4913, 0.044715
    %v4918 = vmul.f32 %v4914, 0.044715
    %v4919 = vadd.f32 %v4893, %v4915
    %v4920 = vadd.f32 %v4896, %v4916
    %v4921 = vadd.f32 %v4901, %v4917
    %v4922 = vadd.f32 %v4904, %v4918
    %v4923 = vmul.f32 %v4919, 0.7978846
    %v4924 = vmul.f32 %v4920, 0.7978846
    %v4925 = vmul.f32 %v4921, 0.7978846
    %v4926 = vmul.f32 %v4922, 0.7978846
    %v4927 = vtanh.pop %v4923
    %v4928 = vtanh.pop %v4924
    %v4929 = vtanh.pop %v4925
    %v4930 = vtanh.pop %v4926
    %v4931 = vadd.f32 %v4927, 1.0
    %v4932 = vadd.f32 %v4928, 1.0
    %v4933 = vadd.f32 %v4929, 1.0
    %v4934 = vadd.f32 %v4930, 1.0
    %v4935 = vmul.f32 %v4931, 0.5
    %v4936 = vmul.f32 %v4932, 0.5
    %v4937 = vmul.f32 %v4933, 0.5
    %v4938 = vmul.f32 %v4934, 0.5
    %v4939 = vmul.f32 %v4893, %v4935
    %v4940 = vmul.f32 %v4896, %v4936
    %v4941 = vmul.f32 %v4901, %v4937
    %v4942 = vmul.f32 %v4904, %v4938
    %v4943 = vpack.c.bf16 %v4940, %v4939
    %v4944 = vpack.c.bf16 %v4942, %v4941
    %v4945 = vld [vmem:[%s2 + $0x148] sm:$0xf]
    %v4946 = vld [vmem:[%s2 + $0x14c] sm:$0xf]
    %v4947 = vld [vmem:[%s2 + $0x150] sm:$0xf]
    %v4948 = vld [vmem:[%s2 + $0x154] sm:$0xf]
    %v4949 = vld [vmem:[%s2 + $0x158] sm:$0xf]
    %v4950 = vld [vmem:[%s2 + $0x15c] sm:$0xf]
    %v4951 = vld [vmem:[%s2 + $0x160] sm:$0xf]
    %v4952 = vld [vmem:[%s2 + $0x164] sm:$0xf]
    %v4953 = vld [vmem:[%s2 + $0x168] sm:$0xf]
    %v4954 = vld [vmem:[%s2 + $0x16c] sm:$0xf]
    %v4955 = vld [vmem:[%s2 + $0x170] sm:$0xf]
    %v4956 = vld [vmem:[%s2 + $0x174] sm:$0xf]
    %v4957 = vld [vmem:[%s2 + $0x178] sm:$0xf]
    %v4958 = vld [vmem:[%s2 + $0x17c] sm:$0xf]
    %v4959 = vld [vmem:[%s2 + $0x180] sm:$0xf]
    %v4960 = vld [vmem:[%s2 + $0x184] sm:$0xf]
    %v4977 = vunpack.c.l.b16 %v4945
    %v4978 = vunpack.c.l.b16 %v4946
    %v4979 = vunpack.c.l.b16 %v4947
    %v4980 = vunpack.c.l.b16 %v4948
    %v4981 = vunpack.c.l.b16 %v4949
    %v4982 = vunpack.c.l.b16 %v4950
    %v4983 = vunpack.c.l.b16 %v4951
    %v4984 = vunpack.c.l.b16 %v4952
    %v4985 = vunpack.c.l.b16 %v4953
    %v4986 = vunpack.c.l.b16 %v4954
    %v4987 = vunpack.c.l.b16 %v4955
    %v4988 = vunpack.c.l.b16 %v4956
    %v4989 = vunpack.c.l.b16 %v4957
    %v4990 = vunpack.c.l.b16 %v4958
    %v4991 = vunpack.c.l.b16 %v4959
    %v4992 = vunpack.c.l.b16 %v4960
    %v4993 = vpack.c.b16 %v4978, %v4977
    %v4994 = vpack.c.b16 %v4980, %v4979
    %v4995 = vpack.c.b16 %v4982, %v4981
    %v4996 = vpack.c.b16 %v4984, %v4983
    %v4997 = vpack.c.b16 %v4986, %v4985
    %v4998 = vpack.c.b16 %v4988, %v4987
    %v4999 = vpack.c.b16 %v4990, %v4989
    %v5000 = vpack.c.b16 %v4992, %v4991
    %5009 = vmatprep.subr.bf16.mxu0 0
    %5010 = vmatpush1.bf16.msra.mxu0 %v5000
    %5011 = vmatprep.subr.bf16.mxu0 0
    %5012 = vmatpush1.bf16.msra.mxu0 %v4999
    %5013 = vmatprep.subr.bf16.mxu0 0
    %5014 = vmatpush1.bf16.msra.mxu0 %v4998
    %5015 = vmatprep.subr.bf16.mxu0 0
    %5016 = vmatpush1.bf16.msra.mxu0 %v4997
    %5017 = vmatprep.subr.bf16.mxu0 0
    %5018 = vmatpush1.bf16.msra.mxu0 %v4996
    %5019 = vmatprep.subr.bf16.mxu0 0
    %5020 = vmatpush1.bf16.msra.mxu0 %v4995
    %5021 = vmatprep.subr.bf16.mxu0 0
    %5022 = vmatpush1.bf16.msra.mxu0 %v4994
    %5023 = vmatprep.subr.bf16.mxu0 0
    %5024 = vmatpush1.bf16.msra.mxu0 %v4993
    %5025 = vmatprep.subr.bf16.mxu0 0
    %5026 = vmatpush2.bf16.msra.mxu0 0
    %5027 = vmatprep.subr.bf16.mxu0 0
    %5028 = vmatpush2.bf16.msra.mxu0 0
    %5029 = vmatprep.subr.bf16.mxu0 0
    %5030 = vmatpush2.bf16.msra.mxu0 0
    %5031 = vmatprep.subr.bf16.mxu0 0
    %5032 = vmatpush2.bf16.msra.mxu0 0
    %5033 = vmatprep.subr.bf16.mxu0 0
    %5034 = vmatpush2.bf16.msra.mxu0 0
    %5035 = vmatprep.subr.bf16.mxu0 0
    %5036 = vmatpush2.bf16.msra.mxu0 0
    %5037 = vmatprep.subr.bf16.mxu0 0
    %5038 = vmatpush2.bf16.msra.mxu0 0
    %5039 = vmatprep.subr.bf16.mxu0 0
    %5040 = vmatpush2.bf16.msra.mxu0 0
    %5041 = vmatprep.mubr.bf16.mxu0 0
    %5042 = vmatmul.mubr.bf16.gmra.mxu0 %v4943
    %v5043 = vpop.f32.mrf.mxu0
    %v5044 = vadd.f32 0.0, %v5043
    %v5045 = vpop.f32.mrf.mxu0
    %v5046 = vpop.f32.mrf.mxu0
    %v5047 = vadd.f32 0.0, %v5046
    %v5048 = vpop.f32.mrf.mxu0
    %5049 = vmatprep.mubr.bf16.mxu0 0
    %5050 = vmatmul.mubr.bf16.gmra.mxu0 %v4944
    %v5051 = vpop.f32.mrf.mxu0
    %v5052 = vadd.f32 0.0, %v5051
    %v5053 = vpop.f32.mrf.mxu0
    %v5054 = vpop.f32.mrf.mxu0
    %v5055 = vadd.f32 0.0, %v5054
    %v5056 = vpop.f32.mrf.mxu0
    %5057 = vdwg.mxu0
    %v5058 = vadd.f32 %v4755, %v5044
    %v5059 = vadd.f32 %v4756, %v5047
    %v5060 = vadd.f32 %v4757, %v5052
    %v5061 = vadd.f32 %v4758, %v5055
    %v5062 = vld [vmem:[%s3 + $0x8d] sm:$0x1]
    %v5063 = vlaneseq
    %v5064 = vshrl.u32 %v5063, 7
    %v5065 = vsub.s32 0, %v5064
    %v5066 = vrot.slane %v5062, %v5065
    %v5067 = vadd.f32 %v5058, %v5066
    %v5068 = vadd.f32 %v5059, %v5066
    %v5069 = vadd.f32 %v5060, %v5066
    %v5070 = vadd.f32 %v5061, %v5066
    %v5071 = vld [vmem:[%s3 + $0x8e] sm:$0x1]
    %v5072 = vld [vmem:[%s3 + $0x8f] sm:$0x1]
    %v5073 = vsel %vm170, %v5067, 0.0
    %5074 = vadd.xlane.f32.xlu0 %v5073
    %v5075 = vpop.xlane.xlu0 %5074
    %v5076 = vsel %vm170, %v5068, 0.0
    %5077 = vadd.xlane.f32.xlu0 %v5076
    %v5078 = vpop.xlane.xlu0 %5077
    %v5079 = vsel %vm170, %v5069, 0.0
    %5080 = vadd.xlane.f32.xlu0 %v5079
    %v5081 = vpop.xlane.xlu0 %5080
    %v5082 = vsel %vm170, %v5070, 0.0
    %5083 = vadd.xlane.f32.xlu0 %v5082
    %v5084 = vpop.xlane.xlu0 %5083
    %v5085 = vmul.f32 %v5075, %v189
    %v5086 = vmul.f32 %v5078, %v189
    %v5087 = vmul.f32 %v5081, %v189
    %v5088 = vmul.f32 %v5084, %v189
    %v5089 = vsub.f32 %v5067, %v5085
    %v5090 = vsub.f32 %v5068, %v5086
    %v5091 = vsub.f32 %v5069, %v5087
    %v5092 = vsub.f32 %v5070, %v5088
    %v5093 = vmul.f32 %v5089, %v5089
    %v5094 = vmul.f32 %v5090, %v5090
    %v5095 = vmul.f32 %v5091, %v5091
    %v5096 = vmul.f32 %v5092, %v5092
    %v5097 = vsel %vm170, %v5093, 0.0
    %5098 = vadd.xlane.f32.xlu0 %v5097
    %v5099 = vpop.xlane.xlu0 %5098
    %v5100 = vsel %vm170, %v5094, 0.0
    %5101 = vadd.xlane.f32.xlu0 %v5100
    %v5102 = vpop.xlane.xlu0 %5101
    %v5103 = vsel %vm170, %v5095, 0.0
    %5104 = vadd.xlane.f32.xlu0 %v5103
    %v5105 = vpop.xlane.xlu0 %5104
    %v5106 = vsel %vm170, %v5096, 0.0
    %5107 = vadd.xlane.f32.xlu0 %v5106
    %v5108 = vpop.xlane.xlu0 %5107
    %v5109 = vmul.f32 %v5099, %v189
    %v5110 = vmul.f32 %v5102, %v189
    %v5111 = vmul.f32 %v5105, %v189
    %v5112 = vmul.f32 %v5108, %v189
    %v5113 = vadd.f32 %v5109, 1e-05
    %v5114 = vadd.f32 %v5110, 1e-05
    %v5115 = vadd.f32 %v5111, 1e-05
    %v5116 = vadd.f32 %v5112, 1e-05
    %v5117 = vrsqrt.pop %v5113
    %v5118 = vrsqrt.pop %v5114
    %v5119 = vrsqrt.pop %v5115
    %v5120 = vrsqrt.pop %v5116
    %v5121 = vmul.f32 %v5089, %v5117
    %v5122 = vmul.f32 %v5090, %v5118
    %v5123 = vmul.f32 %v5091, %v5119
    %v5124 = vmul.f32 %v5092, %v5120
    %v5125 = vlaneseq
    %v5126 = vshrl.u32 %v5125, 7
    %v5127 = vsub.s32 0, %v5126
    %v5128 = vrot.slane %v5071, %v5127
    %v5129 = vmul.f32 %v5121, %v5128
    %v5130 = vmul.f32 %v5122, %v5128
    %v5131 = vmul.f32 %v5123, %v5128
    %v5132 = vmul.f32 %v5124, %v5128
    %v5133 = vlaneseq
    %v5134 = vshrl.u32 %v5133, 7
    %v5135 = vsub.s32 0, %v5134
    %v5136 = vrot.slane %v5072, %v5135
    %v5137 = vadd.f32 %v5129, %v5136
    %v5138 = vadd.f32 %v5130, %v5136
    %v5139 = vadd.f32 %v5131, %v5136
    %v5140 = vadd.f32 %v5132, %v5136
    %v5141 = vpack.c.bf16 %v5138, %v5137
    %v5142 = vpack.c.bf16 %v5140, %v5139
    %v5143 = vld [vmem:[%s2 + $0x188] sm:$0xf]
    %v5144 = vld [vmem:[%s2 + $0x18c] sm:$0xf]
    %v5145 = vld [vmem:[%s2 + $0x190] sm:$0xf]
    %v5146 = vld [vmem:[%s2 + $0x194] sm:$0xf]
    %v5147 = vld [vmem:[%s3 + $0x90] sm:$0x1]
    %v5148 = vlaneseq
    %v5149 = vshrl.u32 %v5148, 7
    %v5150 = vsub.s32 0, %v5149
    %v5151 = vrot.slane %v5147, %v5150
    %v5156 = vunpack.c.l.b16 %v5143
    %v5157 = vunpack.c.l.b16 %v5144
    %v5158 = vunpack.c.l.b16 %v5145
    %v5159 = vunpack.c.l.b16 %v5146
    %v5160 = vpack.c.b16 %v5157, %v5156
    %v5161 = vpack.c.b16 %v5159, %v5158
    %v5165 = vsel %vm170, %v5141, 0
    %v5168 = vsel %vm170, %v5142, 0
    %5170 = vmatprep.subr.bf16.mxu0 0
    %5171 = vmatpush1.bf16.msra.mxu0 0
    %5172 = vmatprep.subr.bf16.mxu0 0
    %5173 = vmatpush1.bf16.msra.mxu0 0
    %5174 = vmatprep.subr.bf16.mxu0 0
    %5175 = vmatpush1.bf16.msra.mxu0 0
    %5176 = vmatprep.subr.bf16.mxu0 0
    %5177 = vmatpush1.bf16.msra.mxu0 0
    %5178 = vmatprep.subr.bf16.mxu0 0
    %5179 = vmatpush1.bf16.msra.mxu0 0
    %5180 = vmatprep.subr.bf16.mxu0 0
    %5181 = vmatpush1.bf16.msra.mxu0 0
    %5182 = vmatprep.subr.bf16.mxu0 0
    %5183 = vmatpush1.bf16.msra.mxu0 %v5161
    %5184 = vmatprep.subr.bf16.mxu0 0
    %5185 = vmatpush1.bf16.msra.mxu0 %v5160
    %5186 = vmatprep.subr.bf16.mxu0 0
    %5187 = vmatpush2.bf16.msra.mxu0 0
    %5188 = vmatprep.subr.bf16.mxu0 0
    %5189 = vmatpush2.bf16.msra.mxu0 0
    %5190 = vmatprep.subr.bf16.mxu0 0
    %5191 = vmatpush2.bf16.msra.mxu0 0
    %5192 = vmatprep.subr.bf16.mxu0 0
    %5193 = vmatpush2.bf16.msra.mxu0 0
    %5194 = vmatprep.subr.bf16.mxu0 0
    %5195 = vmatpush2.bf16.msra.mxu0 0
    %5196 = vmatprep.subr.bf16.mxu0 0
    %5197 = vmatpush2.bf16.msra.mxu0 0
    %5198 = vmatprep.subr.bf16.mxu0 0
    %5199 = vmatpush2.bf16.msra.mxu0 0
    %5200 = vmatprep.subr.bf16.mxu0 0
    %5201 = vmatpush2.bf16.msra.mxu0 0
    %5202 = vmatprep.mubr.bf16.mxu0 0
    %5203 = vmatmul.mubr.bf16.gmra.mxu0 %v5165
    %v5204 = vpop.f32.mrf.mxu0
    %v5205 = vadd.f32 %v5151, %v5204
    %v5206 = vpop.f32.mrf.mxu0
    %v5207 = vpop.f32.mrf.mxu0
    %v5208 = vadd.f32 %v5151, %v5207
    %v5209 = vpop.f32.mrf.mxu0
    %5210 = vmatprep.mubr.bf16.mxu0 0
    %5211 = vmatmul.mubr.bf16.gmra.mxu0 %v5168
    %v5212 = vpop.f32.mrf.mxu0
    %v5213 = vadd.f32 %v5151, %v5212
    %v5214 = vpop.f32.mrf.mxu0
    %v5215 = vpop.f32.mrf.mxu0
    %v5216 = vadd.f32 %v5151, %v5215
    %v5217 = vpop.f32.mrf.mxu0
    %5218 = vdwg.mxu0
    %5219 = vst [vmem:[#allocation2] sm:$0xff] %v5205
    %5220 = vst [vmem:[#allocation2 + $0x8] sm:$0xff] %v5208
    %5221 = vst [vmem:[#allocation2 + $0x10] sm:$0xff] %v5213
    %5222 = vst [vmem:[#allocation2 + $0x18] sm:$0xff] %v5216
    // Predicated region
    $region18: #{blip2_forward.1} parent=1 // pred_check
      _
    $region19: #{blip2_forward.1} parent=1 // pred_check_branch
      %5224 = sbr.rel (0) target = $region21
    $region20: #{blip2_forward.1} parent=1 // pred_region
      %s5226 = ssub.s32 512, 512
      %5227 = vsyncadd [#allocation3], %s5226
      %s5228 = sshll.u32 [#allocation2], 4
      %s5229 = int_to_ptr.vmem [resolvable:$true] %s5228
      %5234 = dma.vmem_to_hbm [thread:$0]  %s5229, 512, %s4, [#allocation3], 128, 128, 8
    $region21: #{blip2_forward.1} parent=1 // pred_fallthru
      _
    // Predicated region
    $region22: #{blip2_forward.1} parent=1 // pred_check
      _
    $region23: #{blip2_forward.1} parent=1 // pred_check_branch
      %5236 = sbr.rel (0) target = $region25
    $region24: #{blip2_forward.1} parent=1 // pred_region
      %5237 = dma.done [#allocation3], 512
    $region25: #{blip2_forward.1} parent=1 // pred_fallthru
      _
    %5238 = vsyncpa [#allocation3], 1

</llo_original>
